<compile_context>
chip_gen: v7x
topology: tpu7x:2x2x1
jax: 0.10.0
libtpu: 0.0.40
codegen_flags: <defaults>
</compile_context>

<pallas_src>
import functools

import jax
import jax.numpy as jnp
from jax.experimental import pallas as pl
from jax.experimental.pallas import tpu as pltpu

EPS = 1e-5                      # nn.LayerNorm default eps
DW_K, DW_S, DW_P = 7, 4, 3      # DSconv depthwise kernel / stride / padding
MIX_E = 4                       # MixFFN expansion ratio


# ----------------------------------------------------------------------------
# fused kernel: Bb batch elements per grid step
# ----------------------------------------------------------------------------
def mhsatoffn_kernel(x_ref, vec_ref, conv_ref, mat_ref, o_ref, *,
                     num_heads, vec_off, conv_off, mat_off):
    f32, bf16 = jnp.float32, jnp.bfloat16
    Bb, L, C = x_ref.shape
    N = Bb * L
    Lt = L - 1
    Lr = (Lt + 2 * DW_P - DW_K) // DW_S + 1
    Lk = 1 + Lr
    Dh = C // num_heads
    E = conv_ref.shape[1] // C
    scale = 1.0 / (Dh ** 0.5)

    V = vec_ref[...]            # (Nvec, C) f32 -- one small slab, loaded once
    CW = conv_ref[...]          # (8, E*C) f32

    def vrow(name, k=1):        # (k, C) f32 rows from the vector slab
        r = vec_off[name]
        return V[r:r + k, :]

    def wmat(name, rows):       # bf16 weight window (static sublane slice)
        r = mat_off[name]
        return mat_ref[r:r + rows, :]

    def ln(y, g, b):
        # two *independent* lane reductions (E[x^2] - mu^2) so they overlap
        mu = jnp.mean(y, axis=-1, keepdims=True)
        ms = jnp.mean(y * y, axis=-1, keepdims=True)
        return (y - mu) * jax.lax.rsqrt(ms - mu * mu + EPS) * g + b

    def mxu(a, w):              # bf16 MXU operands, f32 accumulation
        return jnp.dot(a.astype(bf16), w, preferred_element_type=f32)

    # TODO(synk): nn.GELU() is exact (erf); tanh approximation keeps the op on
    # guaranteed-supported EUP primitives (error << verification tolerance).
    def gelu(y):
        return 0.5 * y * (1.0 + jnp.tanh(0.7978845608028654
                                         * (y + 0.044715 * y * y * y)))

    # ---- fold the Bb batch elements into one (Bb*L, C) row slab -------------
    xs = [x_ref[b] for b in range(Bb)]
    x2d = jnp.concatenate(xs, axis=0) if Bb > 1 else xs[0]           # (N, C)

    # row-position masks (position of each row inside its batch element)
    pos = jax.lax.broadcasted_iota(jnp.int32, (N, 1), 0) % L
    is_cls = pos == 0
    zm_mask = pos <= 1                       # cls row or first token
    zp_mask = (pos == 0) | (pos == L - 1)    # cls row or last token

    # -------------------- ln1 + MultiHeadSelfAttention -----------------------
    xl = ln(x2d, vrow("ln1_g"), vrow("ln1_b"))                        # (N, C)

    # DSconv reducer: depthwise k=7 s=4 p=3 (+bias) -> pointwise 1x1 (+bias).
    # Per-batch windows (Lr=4 rows each); the pointwise matmul + ln_kv run on
    # the folded (Bb*Lr, C) slab.
    # TODO(synk): could become 7 strided-tap loads (pl.ds stride=DW_S) from a
    # VMEM scratch; kept as static windows since Lr is tiny.
    dw_w = vrow("dw_w", DW_K)                                         # (7, C)
    zpad = jnp.zeros((DW_P, C), f32)
    cls_rows, dw_rows = [], []
    for b in range(Bb):
        cls_rows.append(xl[b * L:b * L + 1, :])
        tpad = jnp.concatenate([zpad, xl[b * L + 1:(b + 1) * L, :], zpad],
                               axis=0)                                # (Lt+6, C)
        dw_rows += [jnp.sum(tpad[DW_S * r:DW_S * r + DW_K, :] * dw_w,
                            axis=0, keepdims=True) for r in range(Lr)]
    dw_all = jnp.concatenate(dw_rows, axis=0) + vrow("dw_b")          # (Bb*Lr, C)
    red = ln(mxu(dw_all, wmat("pw_t", C)) + vrow("pw_b"),
             vrow("ln_kv_g"), vrow("ln_kv_b"))                        # (Bb*Lr, C)

    kv_parts = []
    for b in range(Bb):
        kv_parts += [cls_rows[b], red[b * Lr:(b + 1) * Lr, :]]
    kv = jnp.concatenate(kv_parts, axis=0)                            # (Bb*Lk, C)

    # q/k/v projections + per-branch LayerNorm, one MXU pass each over all rows
    q = ln(mxu(xl, wmat("wq_t", C)), vrow("ln_q_g"), vrow("ln_q_b"))  # (N, C)
    k = ln(mxu(kv, wmat("wk_t", C)), vrow("ln_k_g"), vrow("ln_k_b"))  # (Bb*Lk, C)
    v = ln(mxu(kv, wmat("wv_t", C)), vrow("ln_v_g"), vrow("ln_v_b"))  # (Bb*Lk, C)

    qb = (q * scale).astype(bf16)        # fold 1/sqrt(Dh) once, cast once
    kb = k.astype(bf16)
    vb = v.astype(bf16)
    lane = jax.lax.broadcasted_iota(jnp.int32, (1, C), 1)
    head_masks = [((lane >= h * Dh) & (lane < (h + 1) * Dh)).astype(bf16)
                  for h in range(num_heads)]

    merged_parts = []
    for b in range(Bb):
        qbb = qb[b * L:(b + 1) * L, :]
        kbb = kb[b * Lk:(b + 1) * Lk, :]
        vbb = vb[b * Lk:(b + 1) * Lk, :]
        acc = jnp.zeros((L, C), f32)
        for m in head_masks:
            qh = qbb * m
            vh = vbb * m
            # q @ k^T contracting last dims -> no explicit transpose.
            s = jax.lax.dot_general(qh, kbb, (((1,), (1,)), ((), ())),
                                    preferred_element_type=f32)       # (L, Lk)
            e = jnp.exp(s - jnp.max(s, axis=-1, keepdims=True))
            pr = e * pl.reciprocal(jnp.sum(e, axis=-1, keepdims=True),
                                   approx=True)
            acc = acc + jnp.dot(pr.astype(bf16), vh,
                                preferred_element_type=f32)           # (L, C)
        merged_parts.append(acc)
    merged = (jnp.concatenate(merged_parts, axis=0)
              if Bb > 1 else merged_parts[0])                         # (N, C)

    h2 = mxu(merged, wmat("wo_t", C)) + x2d   # mhsa_output2 = W_o(out) + resid

    # -------------------- MixFFN (lane-dense grouped conv) -------------------
    def mixffn(xin, pre):
        z = mxu(xin, wmat(pre + "_l1_t", C)) + vrow(pre + "_l1_b")    # (N, C)
        zrow = jnp.zeros((1, C), f32)
        # neighbour rows; batch / cls boundaries forced to zero by row masks
        zm = jnp.where(zm_mask, 0.0,
                       jnp.concatenate([zrow, z[:-1, :]], axis=0))    # z[l-1]
        zp = jnp.where(zp_mask, 0.0,
                       jnp.concatenate([z[1:, :], zrow], axis=0))     # z[l+1]
        co = conv_off[pre + "_conv_w"]
        cb = conv_off[pre + "_conv_b"]
        wc = CW[co:co + 3, :]                                         # (3, E*C)
        bc = CW[cb:cb + 1, :]                                         # (1, E*C)
        # grouped conv (groups=C, out=E*C) as one lane-dense FMA chain
        yr = (jnp.tile(zm, (1, E)) * wc[0:1, :]
              + jnp.tile(z, (1, E)) * wc[1:2, :]
              + jnp.tile(zp, (1, E)) * wc[2:3, :] + bc)               # (N, E*C)
        y2 = jnp.dot(gelu(yr).astype(bf16), wmat(pre + "_l2_t", E * C),
                     preferred_element_type=f32) + vrow(pre + "_l2_b")
        return jnp.where(is_cls, xin, y2)        # cls token passes through

    m1 = mixffn(ln(h2, vrow("ln2_g"), vrow("ln2_b")), "mix1") + h2
    m2 = mixffn(ln(m1, vrow("ln3_g"), vrow("ln3_b")), "mix2") + m1

    # -------------------- FFN -------------------------------------------------
    # NOTE: torch module applies ln4 to mixffn_output (m1) while the residual
    # is mixffn_output2 (m2) -- preserved verbatim.
    f = ln(m1, vrow("ln4_g"), vrow("ln4_b"))
    f = gelu(mxu(f, wmat("ffn_l1_t", C)) + vrow("ffn_l1_b"))
    f = mxu(f, wmat("ffn_l2_t", C)) + vrow("ffn_l2_b")
    out = (f + m2).astype(o_ref.dtype)
    for b in range(Bb):
        o_ref[b] = out[b * L:(b + 1) * L, :]


# ----------------------------------------------------------------------------
# wrapper: weight packing (3 slabs) + block-batch selection + pallas_call
# ----------------------------------------------------------------------------
def _choose_block_batch(B, L, rows_target=256):
    """Fold batch so each grid step has >= rows_target MXU rows; prefer >= 2
    grid steps (v7x has 2 TensorCores) when that still meets the target."""
    for bb in range(1, B + 1):
        if B % bb == 0 and bb * L >= rows_target and B // bb >= 2:
            return bb
    return B        # small batch: fold everything into a single step


def mhsatoffn(x, p, num_heads, block_batch=None):
    B, L, C = x.shape
    assert C % num_heads == 0
    E = MIX_E
    f32, bf16 = jnp.float32, jnp.bfloat16

    Bb = block_batch if block_batch is not None else _choose_block_batch(B, L)
    assert B % Bb == 0

    # ---- f32 vector slab: LN params, biases, depthwise weights --------------
    vec_parts, vec_off = [], {}
    nrow = 0

    def addv(name, arr):
        nonlocal nrow
        vec_off[name] = nrow
        vec_parts.append(arr.astype(f32))
        nrow += arr.shape[0]

    for nm in ("ln1", "ln2", "ln3", "ln4", "ln_q", "ln_k", "ln_v", "ln_kv"):
        addv(f"{nm}_g", p[f"{nm}_g"].reshape(1, C))
        addv(f"{nm}_b", p[f"{nm}_b"].reshape(1, C))
    addv("dw_w", jnp.transpose(p["dw_w"][:, 0, :], (1, 0)))           # (7, C)
    addv("dw_b", p["dw_b"].reshape(1, C))
    addv("pw_b", p["pw_b"].reshape(1, C))
    for m in ("mix1", "mix2"):
        addv(f"{m}_l1_b", p[f"{m}_l1_b"].reshape(1, C))
        addv(f"{m}_l2_b", p[f"{m}_l2_b"].reshape(1, C))
    addv("ffn_l1_b", p["ffn_l1_b"].reshape(1, C))
    addv("ffn_l2_b", p["ffn_l2_b"].reshape(1, C))
    vecs = jnp.concatenate(vec_parts, axis=0)                         # (31, C)

    # ---- f32 conv slab: MixFFN grouped-conv weights, lane-dense layout ------
    conv_parts, conv_off = [], {}
    crow = 0

    def addc(name, arr):
        nonlocal crow
        conv_off[name] = crow
        conv_parts.append(arr.astype(f32))
        crow += arr.shape[0]

    for m in ("mix1", "mix2"):
        # out-channel o = c*E + rep  ->  lane j = rep*C + c, tap-major rows
        wc = p[f"{m}_conv_w"][:, 0, :].reshape(C, E, 3)               # [c,rep,t]
        addc(f"{m}_conv_w",
             jnp.transpose(wc, (2, 1, 0)).reshape(3, E * C))          # [t, j]
        addc(f"{m}_conv_b",
             p[f"{m}_conv_b"].reshape(C, E).T.reshape(1, E * C))      # [j]
    convs = jnp.concatenate(conv_parts, axis=0)                       # (8, E*C)

    # ---- bf16 matrix slab: every projection, stacked on the sublane axis ----
    mat_parts, mat_off = [], {}
    mrow = 0

    def addm(name, arr):
        nonlocal mrow
        mat_off[name] = mrow
        mat_parts.append(arr.astype(bf16))
        mrow += arr.shape[0]

    addm("wq_t", p["wq"].T)
    addm("wk_t", p["wk"].T)
    addm("wv_t", p["wv"].T)
    addm("wo_t", p["wo"].T)
    addm("pw_t", p["pw_w"][:, :, 0].T)                                # (C, C)
    for m in ("mix1", "mix2"):
        addm(f"{m}_l1_t", p[f"{m}_l1_w"][:, :, 0].T)                  # (C, C)
        w2 = p[f"{m}_l2_w"][:, :, 0].reshape(C, C, E)                 # [out,c,rep]
        addm(f"{m}_l2_t",
             jnp.transpose(w2, (2, 1, 0)).reshape(E * C, C))          # row rep*C+c
    addm("ffn_l1_t", p["ffn_l1_w"].T)
    addm("ffn_l2_t", p["ffn_l2_w"].T)
    mats = jnp.concatenate(mat_parts, axis=0)                         # (544, C)

    kernel = functools.partial(
        mhsatoffn_kernel, num_heads=num_heads,
        vec_off=vec_off, conv_off=conv_off, mat_off=mat_off)

    return pl.pallas_call(
        kernel,
        out_shape=jax.ShapeDtypeStruct((B, L, C), f32),
        grid=(B // Bb,),
        in_specs=[
            pl.BlockSpec((Bb, L, C), lambda i: (i, 0, 0)),
            pl.BlockSpec(vecs.shape, lambda i: (0, 0)),
            pl.BlockSpec(convs.shape, lambda i: (0, 0)),
            pl.BlockSpec(mats.shape, lambda i: (0, 0)),
        ],
        out_specs=pl.BlockSpec((Bb, L, C), lambda i: (i, 0, 0)),
        compiler_params=pltpu.CompilerParams(
            dimension_semantics=("parallel",),
            vmem_limit_bytes=32 * 1024 * 1024),
    )(x.astype(f32), vecs, convs, mats)


# ----------------------------------------------------------------------------
# deterministic parameter init (PyTorch-shaped tensors)
# ----------------------------------------------------------------------------
def init_params(key, C):
    f32 = jnp.float32
    std = 0.02
    keys = iter(jax.random.split(key, 24))

    def nrm(shape, s=std):
        return jax.random.normal(next(keys), shape, f32) * s

    p = {
        "wq": nrm((C, C)), "wk": nrm((C, C)), "wv": nrm((C, C)), "wo": nrm((C, C)),
        "dw_w": nrm((C, 1, DW_K), 0.1), "dw_b": nrm((C,), 0.1),
        "pw_w": nrm((C, C, 1)), "pw_b": nrm((C,), 0.1),
        "ffn_l1_w": nrm((C, C)), "ffn_l1_b": nrm((C,), 0.1),
        "ffn_l2_w": nrm((C, C)), "ffn_l2_b": nrm((C,), 0.1),
    }
    for m in ("mix1", "mix2"):
        p[f"{m}_l1_w"] = nrm((C, C, 1))
        p[f"{m}_l1_b"] = nrm((C,), 0.1)
        p[f"{m}_conv_w"] = nrm((MIX_E * C, 1, 3), 0.1)
        p[f"{m}_conv_b"] = nrm((MIX_E * C,), 0.1)
        p[f"{m}_l2_w"] = nrm((C, MIX_E * C, 1))
        p[f"{m}_l2_b"] = nrm((C,), 0.1)
    for nm in ("ln1", "ln2", "ln3", "ln4", "ln_q", "ln_k", "ln_v", "ln_kv"):
        p[f"{nm}_g"] = jnp.ones((C,), f32)
        p[f"{nm}_b"] = jnp.zeros((C,), f32)
    return p


# ----------------------------------------------------------------------------
# pure-JAX reference (exact erf GELU, fp32 HIGHEST precision) for verification
# ----------------------------------------------------------------------------
def reference(x, p, num_heads):
    B, L, C = x.shape
    Dh = C // num_heads
    hi = jax.lax.Precision.HIGHEST

    def ln(y, g, b):
        mu = y.mean(-1, keepdims=True)
        var = ((y - mu) ** 2).mean(-1, keepdims=True)
        return (y - mu) / jnp.sqrt(var + EPS) * g + b

    def mhsa(xin):
        cls_token, tokens = xin[:, :1], xin[:, 1:]
        xt = jnp.transpose(tokens, (0, 2, 1))
        dwc = jax.lax.conv_general_dilated(
            xt, p["dw_w"], window_strides=(DW_S,), padding=[(DW_P, DW_P)],
            feature_group_count=C, dimension_numbers=("NCH", "OIH", "NCH"),
            precision=hi) + p["dw_b"][None, :, None]
        pwc = jax.lax.conv_general_dilated(
            dwc, p["pw_w"], window_strides=(1,), padding=[(0, 0)],
            dimension_numbers=("NCH", "OIH", "NCH"),
            precision=hi) + p["pw_b"][None, :, None]
        red = ln(jnp.transpose(pwc, (0, 2, 1)), p["ln_kv_g"], p["ln_kv_b"])
        kv = jnp.concatenate([cls_token, red], axis=1)
        q = ln(jnp.einsum("blc,dc->bld", xin, p["wq"], precision=hi), p["ln_q_g"], p["ln_q_b"])
        k = ln(jnp.einsum("blc,dc->bld", kv, p["wk"], precision=hi), p["ln_k_g"], p["ln_k_b"])
        v = ln(jnp.einsum("blc,dc->bld", kv, p["wv"], precision=hi), p["ln_v_g"], p["ln_v_b"])

        def sh(t):
            return t.reshape(t.shape[0], t.shape[1], num_heads, Dh).transpose(0, 2, 1, 3)

        qh, kh, vh = sh(q), sh(k), sh(v)
        s = jnp.einsum("bhld,bhmd->bhlm", qh, kh, precision=hi) / (Dh ** 0.5)
        attn = jax.nn.softmax(s, axis=-1)
        oh = jnp.einsum("bhlm,bhmd->bhld", attn, vh, precision=hi)
        o = oh.transpose(0, 2, 1, 3).reshape(B, L, C)
        return jnp.einsum("blc,dc->bld", o, p["wo"], precision=hi)

    def mixffn(xin, pre):
        x1, z = xin[:, :1], xin[:, 1:]
        zc = jnp.transpose(z, (0, 2, 1))
        zc = jax.lax.conv_general_dilated(
            zc, p[f"{pre}_l1_w"], window_strides=(1,), padding=[(0, 0)],
            dimension_numbers=("NCH", "OIH", "NCH"),
            precision=hi) + p[f"{pre}_l1_b"][None, :, None]
        zc = jax.lax.conv_general_dilated(
            zc, p[f"{pre}_conv_w"], window_strides=(1,), padding=[(1, 1)],
            feature_group_count=C, dimension_numbers=("NCH", "OIH", "NCH"),
            precision=hi) + p[f"{pre}_conv_b"][None, :, None]
        zc = jax.nn.gelu(zc, approximate=False)
        zc = jax.lax.conv_general_dilated(
            zc, p[f"{pre}_l2_w"], window_strides=(1,), padding=[(0, 0)],
            dimension_numbers=("NCH", "OIH", "NCH"),
            precision=hi) + p[f"{pre}_l2_b"][None, :, None]
        return jnp.concatenate([x1, jnp.transpose(zc, (0, 2, 1))], axis=1)

    h2 = mhsa(ln(x, p["ln1_g"], p["ln1_b"])) + x
    m1 = mixffn(ln(h2, p["ln2_g"], p["ln2_b"]), "mix1") + h2
    m2 = mixffn(ln(m1, p["ln3_g"], p["ln3_b"]), "mix2") + m1
    f = ln(m1, p["ln4_g"], p["ln4_b"])     # ln4 of mixffn_output (torch quirk)
    f = jnp.einsum("blc,dc->bld", f, p["ffn_l1_w"], precision=hi) + p["ffn_l1_b"]
    f = jax.nn.gelu(f, approximate=False)
    f = jnp.einsum("blc,dc->bld", f, p["ffn_l2_w"], precision=hi) + p["ffn_l2_b"]
    return f + m2


if __name__ == "__main__":
    B, L, C, H = 2, 17, 32, 4          # 1 cls token + 16 tokens, 4 heads of 8
    key = jax.random.PRNGKey(0)
    kx, kp = jax.random.split(key)
    x = jax.random.normal(kx, (B, L, C), jnp.float32)
    params = init_params(kp, C)

    out = mhsatoffn(x, params, H)
    jax.block_until_ready(out)

    ref = reference(x, params, H)
    assert out.shape == (B, L, C)
    assert jnp.allclose(out, ref, atol=2e-2, rtol=2e-2), (
        f"max abs err {jnp.max(jnp.abs(out - ref))}")
    print("KERNEL_OK")
</pallas_src>

<mosaic_0001>
module attributes {stable_mosaic.version = 11 : i64} {
  func.func @mhsatoffn_kernel(%arg0: i32, %arg1: memref<2x17x32xf32, #tpu.memory_space<vmem>>, %arg2: memref<31x32xf32, #tpu.memory_space<vmem>>, %arg3: memref<8x128xf32, #tpu.memory_space<vmem>>, %arg4: memref<544x32xbf16, #tpu.memory_space<vmem>>, %arg5: memref<2x17x32xf32, #tpu.memory_space<vmem>>) attributes {dimension_semantics = [#tpu.dimension_semantics<parallel>], iteration_bounds = array<i64: 1>, scalar_prefetch = 0 : i64, scratch_operands = 0 : i64, tpu.core_type = #tpu.core_type<tc>, window_params = [{transform_indices = @transform_0, window_bounds = array<i64: 2, 17, 32>}, {pipeline_mode = #tpu.pipeline_mode<synchronous>, transform_indices = @transform_1, window_bounds = array<i64: 31, 32>}, {pipeline_mode = #tpu.pipeline_mode<synchronous>, transform_indices = @transform_2, window_bounds = array<i64: 8, 128>}, {pipeline_mode = #tpu.pipeline_mode<synchronous>, transform_indices = @transform_3, window_bounds = array<i64: 544, 32>}, {transform_indices = @transform_4, window_bounds = array<i64: 2, 17, 32>}]} {
    %c0 = arith.constant 0 : index
    %c0_0 = arith.constant 0 : index
    %0 = vector.load %arg2[%c0, %c0_0] : memref<31x32xf32, #tpu.memory_space<vmem>>, vector<31x32xf32>
    %c0_1 = arith.constant 0 : index
    %c0_2 = arith.constant 0 : index
    %1 = vector.load %arg3[%c0_1, %c0_2] : memref<8x128xf32, #tpu.memory_space<vmem>>, vector<8x128xf32>
    %c0_3 = arith.constant 0 : index
    %c0_4 = arith.constant 0 : index
    %c0_5 = arith.constant 0 : index
    %2 = vector.load %arg1[%c0_3, %c0_4, %c0_5] : memref<2x17x32xf32, #tpu.memory_space<vmem>>, vector<1x17x32xf32>
    %3 = vector.shape_cast %2 : vector<1x17x32xf32> to vector<17x32xf32>
    %c1 = arith.constant 1 : index
    %c0_6 = arith.constant 0 : index
    %c0_7 = arith.constant 0 : index
    %4 = vector.load %arg1[%c1, %c0_6, %c0_7] : memref<2x17x32xf32, #tpu.memory_space<vmem>>, vector<1x17x32xf32>
    %5 = vector.shape_cast %4 : vector<1x17x32xf32> to vector<17x32xf32>
    %6 = tpu.concatenate %3, %5 in 0 : vector<17x32xf32>, vector<17x32xf32> -> vector<34x32xf32>
    %7 = tpu.iota {dimensions = array<i32: 0>} : vector<34x1xi32>
    %c17_i32 = arith.constant 17 : i32
    %c0_i32 = arith.constant 0 : i32
    %8 = arith.cmpi eq, %c17_i32, %c0_i32 : i32
    %c1_i32 = arith.constant 1 : i32
    %9 = arith.select %8, %c1_i32, %c17_i32 : i32
    %10 = vector.broadcast %9 : i32 to vector<34x1xi32>
    %11 = arith.remsi %7, %10 : vector<34x1xi32>
    %c0_i32_8 = arith.constant 0 : i32
    %12 = vector.broadcast %c0_i32_8 : i32 to vector<34x1xi32>
    %13 = arith.cmpi ne, %11, %12 : vector<34x1xi32>
    %c0_i32_9 = arith.constant 0 : i32
    %14 = vector.broadcast %c0_i32_9 : i32 to vector<34x1xi32>
    %15 = arith.cmpi slt, %11, %14 : vector<34x1xi32>
    %c0_i32_10 = arith.constant 0 : i32
    %16 = arith.cmpi slt, %9, %c0_i32_10 : i32
    %17 = vector.broadcast %16 : i1 to vector<34x1xi1>
    %18 = vector.broadcast %17 : vector<34x1xi1> to vector<34x1xi1>
    %19 = arith.xori %15, %18 : vector<34x1xi1>
    %20 = arith.andi %19, %13 : vector<34x1xi1>
    %21 = vector.broadcast %9 : i32 to vector<34x1xi32>
    %22 = arith.addi %11, %21 : vector<34x1xi32>
    %23 = arith.select %20, %22, %11 : vector<34x1xi1>, vector<34x1xi32>
    %c0_i32_11 = arith.constant 0 : i32
    %24 = vector.broadcast %c0_i32_11 : i32 to vector<34x1xi32>
    %25 = arith.cmpi eq, %23, %24 : vector<34x1xi32>
    %c1_i32_12 = arith.constant 1 : i32
    %26 = vector.broadcast %c1_i32_12 : i32 to vector<34x1xi32>
    %27 = arith.cmpi sle, %23, %26 : vector<34x1xi32>
    %c0_i32_13 = arith.constant 0 : i32
    %28 = vector.broadcast %c0_i32_13 : i32 to vector<34x1xi32>
    %29 = arith.cmpi eq, %23, %28 : vector<34x1xi32>
    %c16_i32 = arith.constant 16 : i32
    %30 = vector.broadcast %c16_i32 : i32 to vector<34x1xi32>
    %31 = arith.cmpi eq, %23, %30 : vector<34x1xi32>
    %32 = arith.ori %29, %31 : vector<34x1xi1>
    %33 = vector.extract_strided_slice %0 {offsets = [0, 0], sizes = [1, 32], strides = [1, 1]} : vector<31x32xf32> to vector<1x32xf32>
    %34 = vector.extract_strided_slice %0 {offsets = [1, 0], sizes = [1, 32], strides = [1, 1]} : vector<31x32xf32> to vector<1x32xf32>
    %cst = arith.constant dense<0.000000e+00> : vector<34xf32>
    %35 = vector.multi_reduction <add>, %6, %cst [1] : vector<34x32xf32> to vector<34xf32>
    %36 = vector.shape_cast %35 : vector<34xf32> to vector<34x1xf32>
    %cst_14 = arith.constant 3.200000e+01 : f32
    %37 = vector.broadcast %cst_14 : f32 to vector<34x1xf32>
    %38 = arith.divf %36, %37 : vector<34x1xf32>
    %39 = arith.mulf %6, %6 : vector<34x32xf32>
    %cst_15 = arith.constant dense<0.000000e+00> : vector<34xf32>
    %40 = vector.multi_reduction <add>, %39, %cst_15 [1] : vector<34x32xf32> to vector<34xf32>
    %41 = vector.shape_cast %40 : vector<34xf32> to vector<34x1xf32>
    %cst_16 = arith.constant 3.200000e+01 : f32
    %42 = vector.broadcast %cst_16 : f32 to vector<34x1xf32>
    %43 = arith.divf %41, %42 : vector<34x1xf32>
    %44 = vector.broadcast %38 : vector<34x1xf32> to vector<34x32xf32>
    %45 = arith.subf %6, %44 : vector<34x32xf32>
    %46 = arith.mulf %38, %38 : vector<34x1xf32>
    %47 = arith.subf %43, %46 : vector<34x1xf32>
    %cst_17 = arith.constant 9.99999974E-6 : f32
    %48 = vector.broadcast %cst_17 : f32 to vector<34x1xf32>
    %49 = arith.addf %47, %48 : vector<34x1xf32>
    %50 = math.rsqrt %49 : vector<34x1xf32>
    %51 = vector.broadcast %50 : vector<34x1xf32> to vector<34x32xf32>
    %52 = arith.mulf %45, %51 : vector<34x32xf32>
    %53 = vector.broadcast %33 : vector<1x32xf32> to vector<34x32xf32>
    %54 = arith.mulf %52, %53 : vector<34x32xf32>
    %55 = vector.broadcast %34 : vector<1x32xf32> to vector<34x32xf32>
    %56 = arith.addf %54, %55 : vector<34x32xf32>
    %57 = vector.extract_strided_slice %0 {offsets = [16, 0], sizes = [7, 32], strides = [1, 1]} : vector<31x32xf32> to vector<7x32xf32>
    %cst_18 = arith.constant 0.000000e+00 : f32
    %58 = vector.broadcast %cst_18 : f32 to vector<3x32xf32>
    %59 = vector.extract_strided_slice %56 {offsets = [0, 0], sizes = [1, 32], strides = [1, 1]} : vector<34x32xf32> to vector<1x32xf32>
    %60 = vector.extract_strided_slice %56 {offsets = [1, 0], sizes = [16, 32], strides = [1, 1]} : vector<34x32xf32> to vector<16x32xf32>
    %61 = tpu.concatenate %58, %60, %58 in 0 : vector<3x32xf32>, vector<16x32xf32>, vector<3x32xf32> -> vector<22x32xf32>
    %62 = vector.extract_strided_slice %61 {offsets = [0, 0], sizes = [7, 32], strides = [1, 1]} : vector<22x32xf32> to vector<7x32xf32>
    %63 = arith.mulf %62, %57 : vector<7x32xf32>
    %cst_19 = arith.constant dense<0.000000e+00> : vector<32xf32>
    %64 = vector.multi_reduction <add>, %63, %cst_19 [0] : vector<7x32xf32> to vector<32xf32>
    %65 = vector.shape_cast %64 : vector<32xf32> to vector<1x32xf32>
    %66 = vector.extract_strided_slice %61 {offsets = [4, 0], sizes = [7, 32], strides = [1, 1]} : vector<22x32xf32> to vector<7x32xf32>
    %67 = arith.mulf %66, %57 : vector<7x32xf32>
    %cst_20 = arith.constant dense<0.000000e+00> : vector<32xf32>
    %68 = vector.multi_reduction <add>, %67, %cst_20 [0] : vector<7x32xf32> to vector<32xf32>
    %69 = vector.shape_cast %68 : vector<32xf32> to vector<1x32xf32>
    %70 = vector.extract_strided_slice %61 {offsets = [8, 0], sizes = [7, 32], strides = [1, 1]} : vector<22x32xf32> to vector<7x32xf32>
    %71 = arith.mulf %70, %57 : vector<7x32xf32>
    %cst_21 = arith.constant dense<0.000000e+00> : vector<32xf32>
    %72 = vector.multi_reduction <add>, %71, %cst_21 [0] : vector<7x32xf32> to vector<32xf32>
    %73 = vector.shape_cast %72 : vector<32xf32> to vector<1x32xf32>
    %74 = vector.extract_strided_slice %61 {offsets = [12, 0], sizes = [7, 32], strides = [1, 1]} : vector<22x32xf32> to vector<7x32xf32>
    %75 = arith.mulf %74, %57 : vector<7x32xf32>
    %cst_22 = arith.constant dense<0.000000e+00> : vector<32xf32>
    %76 = vector.multi_reduction <add>, %75, %cst_22 [0] : vector<7x32xf32> to vector<32xf32>
    %77 = vector.shape_cast %76 : vector<32xf32> to vector<1x32xf32>
    %78 = vector.extract_strided_slice %56 {offsets = [17, 0], sizes = [1, 32], strides = [1, 1]} : vector<34x32xf32> to vector<1x32xf32>
    %79 = vector.extract_strided_slice %56 {offsets = [18, 0], sizes = [16, 32], strides = [1, 1]} : vector<34x32xf32> to vector<16x32xf32>
    %80 = tpu.concatenate %58, %79, %58 in 0 : vector<3x32xf32>, vector<16x32xf32>, vector<3x32xf32> -> vector<22x32xf32>
    %81 = vector.extract_strided_slice %80 {offsets = [0, 0], sizes = [7, 32], strides = [1, 1]} : vector<22x32xf32> to vector<7x32xf32>
    %82 = arith.mulf %81, %57 : vector<7x32xf32>
    %cst_23 = arith.constant dense<0.000000e+00> : vector<32xf32>
    %83 = vector.multi_reduction <add>, %82, %cst_23 [0] : vector<7x32xf32> to vector<32xf32>
    %84 = vector.shape_cast %83 : vector<32xf32> to vector<1x32xf32>
    %85 = vector.extract_strided_slice %80 {offsets = [4, 0], sizes = [7, 32], strides = [1, 1]} : vector<22x32xf32> to vector<7x32xf32>
    %86 = arith.mulf %85, %57 : vector<7x32xf32>
    %cst_24 = arith.constant dense<0.000000e+00> : vector<32xf32>
    %87 = vector.multi_reduction <add>, %86, %cst_24 [0] : vector<7x32xf32> to vector<32xf32>
    %88 = vector.shape_cast %87 : vector<32xf32> to vector<1x32xf32>
    %89 = vector.extract_strided_slice %80 {offsets = [8, 0], sizes = [7, 32], strides = [1, 1]} : vector<22x32xf32> to vector<7x32xf32>
    %90 = arith.mulf %89, %57 : vector<7x32xf32>
    %cst_25 = arith.constant dense<0.000000e+00> : vector<32xf32>
    %91 = vector.multi_reduction <add>, %90, %cst_25 [0] : vector<7x32xf32> to vector<32xf32>
    %92 = vector.shape_cast %91 : vector<32xf32> to vector<1x32xf32>
    %93 = vector.extract_strided_slice %80 {offsets = [12, 0], sizes = [7, 32], strides = [1, 1]} : vector<22x32xf32> to vector<7x32xf32>
    %94 = arith.mulf %93, %57 : vector<7x32xf32>
    %cst_26 = arith.constant dense<0.000000e+00> : vector<32xf32>
    %95 = vector.multi_reduction <add>, %94, %cst_26 [0] : vector<7x32xf32> to vector<32xf32>
    %96 = vector.shape_cast %95 : vector<32xf32> to vector<1x32xf32>
    %97 = tpu.concatenate %65, %69, %73, %77, %84, %88, %92, %96 in 0 : vector<1x32xf32>, vector<1x32xf32>, vector<1x32xf32>, vector<1x32xf32>, vector<1x32xf32>, vector<1x32xf32>, vector<1x32xf32>, vector<1x32xf32> -> vector<8x32xf32>
    %98 = vector.extract_strided_slice %0 {offsets = [23, 0], sizes = [1, 32], strides = [1, 1]} : vector<31x32xf32> to vector<1x32xf32>
    %99 = vector.broadcast %98 : vector<1x32xf32> to vector<8x32xf32>
    %100 = arith.addf %97, %99 : vector<8x32xf32>
    %c128 = arith.constant 128 : index
    %c0_27 = arith.constant 0 : index
    %101 = vector.load %arg4[%c128, %c0_27] : memref<544x32xbf16, #tpu.memory_space<vmem>>, vector<32x32xbf16>
    %102 = arith.truncf %100 : vector<8x32xf32> to vector<8x32xbf16>
    %cst_28 = arith.constant dense<0.000000e+00> : vector<8x32xf32>
    %103 = tpu.matmul %102, %101, %cst_28 {dimension_numbers = #tpu.dot_dimension_numbers<[1], [0], [0], [1], [0, 0, 1, 1], [], []>} : vector<8x32xbf16>, vector<32x32xbf16>, vector<8x32xf32> -> vector<8x32xf32>
    %104 = vector.extract_strided_slice %0 {offsets = [24, 0], sizes = [1, 32], strides = [1, 1]} : vector<31x32xf32> to vector<1x32xf32>
    %105 = vector.broadcast %104 : vector<1x32xf32> to vector<8x32xf32>
    %106 = arith.addf %103, %105 : vector<8x32xf32>
    %107 = vector.extract_strided_slice %0 {offsets = [14, 0], sizes = [1, 32], strides = [1, 1]} : vector<31x32xf32> to vector<1x32xf32>
    %108 = vector.extract_strided_slice %0 {offsets = [15, 0], sizes = [1, 32], strides = [1, 1]} : vector<31x32xf32> to vector<1x32xf32>
    %cst_29 = arith.constant dense<0.000000e+00> : vector<8xf32>
    %109 = vector.multi_reduction <add>, %106, %cst_29 [1] : vector<8x32xf32> to vector<8xf32>
    %110 = vector.shape_cast %109 : vector<8xf32> to vector<8x1xf32>
    %cst_30 = arith.constant 3.200000e+01 : f32
    %111 = vector.broadcast %cst_30 : f32 to vector<8x1xf32>
    %112 = arith.divf %110, %111 : vector<8x1xf32>
    %113 = arith.mulf %106, %106 : vector<8x32xf32>
    %cst_31 = arith.constant dense<0.000000e+00> : vector<8xf32>
    %114 = vector.multi_reduction <add>, %113, %cst_31 [1] : vector<8x32xf32> to vector<8xf32>
    %115 = vector.shape_cast %114 : vector<8xf32> to vector<8x1xf32>
    %cst_32 = arith.constant 3.200000e+01 : f32
    %116 = vector.broadcast %cst_32 : f32 to vector<8x1xf32>
    %117 = arith.divf %115, %116 : vector<8x1xf32>
    %118 = vector.broadcast %112 : vector<8x1xf32> to vector<8x32xf32>
    %119 = arith.subf %106, %118 : vector<8x32xf32>
    %120 = arith.mulf %112, %112 : vector<8x1xf32>
    %121 = arith.subf %117, %120 : vector<8x1xf32>
    %cst_33 = arith.constant 9.99999974E-6 : f32
    %122 = vector.broadcast %cst_33 : f32 to vector<8x1xf32>
    %123 = arith.addf %121, %122 : vector<8x1xf32>
    %124 = math.rsqrt %123 : vector<8x1xf32>
    %125 = vector.broadcast %124 : vector<8x1xf32> to vector<8x32xf32>
    %126 = arith.mulf %119, %125 : vector<8x32xf32>
    %127 = vector.broadcast %107 : vector<1x32xf32> to vector<8x32xf32>
    %128 = arith.mulf %126, %127 : vector<8x32xf32>
    %129 = vector.broadcast %108 : vector<1x32xf32> to vector<8x32xf32>
    %130 = arith.addf %128, %129 : vector<8x32xf32>
    %131 = vector.extract_strided_slice %130 {offsets = [0, 0], sizes = [4, 32], strides = [1, 1]} : vector<8x32xf32> to vector<4x32xf32>
    %132 = vector.extract_strided_slice %130 {offsets = [4, 0], sizes = [4, 32], strides = [1, 1]} : vector<8x32xf32> to vector<4x32xf32>
    %133 = tpu.concatenate %59, %131, %78, %132 in 0 : vector<1x32xf32>, vector<4x32xf32>, vector<1x32xf32>, vector<4x32xf32> -> vector<10x32xf32>
    %c0_34 = arith.constant 0 : index
    %c0_35 = arith.constant 0 : index
    %134 = vector.load %arg4[%c0_34, %c0_35] : memref<544x32xbf16, #tpu.memory_space<vmem>>, vector<32x32xbf16>
    %135 = arith.truncf %56 : vector<34x32xf32> to vector<34x32xbf16>
    %cst_36 = arith.constant dense<0.000000e+00> : vector<34x32xf32>
    %136 = tpu.matmul %135, %134, %cst_36 {dimension_numbers = #tpu.dot_dimension_numbers<[1], [0], [0], [1], [0, 0, 1, 1], [], []>} : vector<34x32xbf16>, vector<32x32xbf16>, vector<34x32xf32> -> vector<34x32xf32>
    %137 = vector.extract_strided_slice %0 {offsets = [8, 0], sizes = [1, 32], strides = [1, 1]} : vector<31x32xf32> to vector<1x32xf32>
    %138 = vector.extract_strided_slice %0 {offsets = [9, 0], sizes = [1, 32], strides = [1, 1]} : vector<31x32xf32> to vector<1x32xf32>
    %cst_37 = arith.constant dense<0.000000e+00> : vector<34xf32>
    %139 = vector.multi_reduction <add>, %136, %cst_37 [1] : vector<34x32xf32> to vector<34xf32>
    %140 = vector.shape_cast %139 : vector<34xf32> to vector<34x1xf32>
    %cst_38 = arith.constant 3.200000e+01 : f32
    %141 = vector.broadcast %cst_38 : f32 to vector<34x1xf32>
    %142 = arith.divf %140, %141 : vector<34x1xf32>
    %143 = arith.mulf %136, %136 : vector<34x32xf32>
    %cst_39 = arith.constant dense<0.000000e+00> : vector<34xf32>
    %144 = vector.multi_reduction <add>, %143, %cst_39 [1] : vector<34x32xf32> to vector<34xf32>
    %145 = vector.shape_cast %144 : vector<34xf32> to vector<34x1xf32>
    %cst_40 = arith.constant 3.200000e+01 : f32
    %146 = vector.broadcast %cst_40 : f32 to vector<34x1xf32>
    %147 = arith.divf %145, %146 : vector<34x1xf32>
    %148 = vector.broadcast %142 : vector<34x1xf32> to vector<34x32xf32>
    %149 = arith.subf %136, %148 : vector<34x32xf32>
    %150 = arith.mulf %142, %142 : vector<34x1xf32>
    %151 = arith.subf %147, %150 : vector<34x1xf32>
    %cst_41 = arith.constant 9.99999974E-6 : f32
    %152 = vector.broadcast %cst_41 : f32 to vector<34x1xf32>
    %153 = arith.addf %151, %152 : vector<34x1xf32>
    %154 = math.rsqrt %153 : vector<34x1xf32>
    %155 = vector.broadcast %154 : vector<34x1xf32> to vector<34x32xf32>
    %156 = arith.mulf %149, %155 : vector<34x32xf32>
    %157 = vector.broadcast %137 : vector<1x32xf32> to vector<34x32xf32>
    %158 = arith.mulf %156, %157 : vector<34x32xf32>
    %159 = vector.broadcast %138 : vector<1x32xf32> to vector<34x32xf32>
    %160 = arith.addf %158, %159 : vector<34x32xf32>
    %c32 = arith.constant 32 : index
    %c0_42 = arith.constant 0 : index
    %161 = vector.load %arg4[%c32, %c0_42] : memref<544x32xbf16, #tpu.memory_space<vmem>>, vector<32x32xbf16>
    %162 = arith.truncf %133 : vector<10x32xf32> to vector<10x32xbf16>
    %cst_43 = arith.constant dense<0.000000e+00> : vector<10x32xf32>
    %163 = tpu.matmul %162, %161, %cst_43 {dimension_numbers = #tpu.dot_dimension_numbers<[1], [0], [0], [1], [0, 0, 1, 1], [], []>} : vector<10x32xbf16>, vector<32x32xbf16>, vector<10x32xf32> -> vector<10x32xf32>
    %164 = vector.extract_strided_slice %0 {offsets = [10, 0], sizes = [1, 32], strides = [1, 1]} : vector<31x32xf32> to vector<1x32xf32>
    %165 = vector.extract_strided_slice %0 {offsets = [11, 0], sizes = [1, 32], strides = [1, 1]} : vector<31x32xf32> to vector<1x32xf32>
    %cst_44 = arith.constant dense<0.000000e+00> : vector<10xf32>
    %166 = vector.multi_reduction <add>, %163, %cst_44 [1] : vector<10x32xf32> to vector<10xf32>
    %167 = vector.shape_cast %166 : vector<10xf32> to vector<10x1xf32>
    %cst_45 = arith.constant 3.200000e+01 : f32
    %168 = vector.broadcast %cst_45 : f32 to vector<10x1xf32>
    %169 = arith.divf %167, %168 : vector<10x1xf32>
    %170 = arith.mulf %163, %163 : vector<10x32xf32>
    %cst_46 = arith.constant dense<0.000000e+00> : vector<10xf32>
    %171 = vector.multi_reduction <add>, %170, %cst_46 [1] : vector<10x32xf32> to vector<10xf32>
    %172 = vector.shape_cast %171 : vector<10xf32> to vector<10x1xf32>
    %cst_47 = arith.constant 3.200000e+01 : f32
    %173 = vector.broadcast %cst_47 : f32 to vector<10x1xf32>
    %174 = arith.divf %172, %173 : vector<10x1xf32>
    %175 = vector.broadcast %169 : vector<10x1xf32> to vector<10x32xf32>
    %176 = arith.subf %163, %175 : vector<10x32xf32>
    %177 = arith.mulf %169, %169 : vector<10x1xf32>
    %178 = arith.subf %174, %177 : vector<10x1xf32>
    %cst_48 = arith.constant 9.99999974E-6 : f32
    %179 = vector.broadcast %cst_48 : f32 to vector<10x1xf32>
    %180 = arith.addf %178, %179 : vector<10x1xf32>
    %181 = math.rsqrt %180 : vector<10x1xf32>
    %182 = vector.broadcast %181 : vector<10x1xf32> to vector<10x32xf32>
    %183 = arith.mulf %176, %182 : vector<10x32xf32>
    %184 = vector.broadcast %164 : vector<1x32xf32> to vector<10x32xf32>
    %185 = arith.mulf %183, %184 : vector<10x32xf32>
    %186 = vector.broadcast %165 : vector<1x32xf32> to vector<10x32xf32>
    %187 = arith.addf %185, %186 : vector<10x32xf32>
    %c64 = arith.constant 64 : index
    %c0_49 = arith.constant 0 : index
    %188 = vector.load %arg4[%c64, %c0_49] : memref<544x32xbf16, #tpu.memory_space<vmem>>, vector<32x32xbf16>
    %189 = arith.truncf %133 : vector<10x32xf32> to vector<10x32xbf16>
    %cst_50 = arith.constant dense<0.000000e+00> : vector<10x32xf32>
    %190 = tpu.matmul %189, %188, %cst_50 {dimension_numbers = #tpu.dot_dimension_numbers<[1], [0], [0], [1], [0, 0, 1, 1], [], []>} : vector<10x32xbf16>, vector<32x32xbf16>, vector<10x32xf32> -> vector<10x32xf32>
    %191 = vector.extract_strided_slice %0 {offsets = [12, 0], sizes = [1, 32], strides = [1, 1]} : vector<31x32xf32> to vector<1x32xf32>
    %192 = vector.extract_strided_slice %0 {offsets = [13, 0], sizes = [1, 32], strides = [1, 1]} : vector<31x32xf32> to vector<1x32xf32>
    %cst_51 = arith.constant dense<0.000000e+00> : vector<10xf32>
    %193 = vector.multi_reduction <add>, %190, %cst_51 [1] : vector<10x32xf32> to vector<10xf32>
    %194 = vector.shape_cast %193 : vector<10xf32> to vector<10x1xf32>
    %cst_52 = arith.constant 3.200000e+01 : f32
    %195 = vector.broadcast %cst_52 : f32 to vector<10x1xf32>
    %196 = arith.divf %194, %195 : vector<10x1xf32>
    %197 = arith.mulf %190, %190 : vector<10x32xf32>
    %cst_53 = arith.constant dense<0.000000e+00> : vector<10xf32>
    %198 = vector.multi_reduction <add>, %197, %cst_53 [1] : vector<10x32xf32> to vector<10xf32>
    %199 = vector.shape_cast %198 : vector<10xf32> to vector<10x1xf32>
    %cst_54 = arith.constant 3.200000e+01 : f32
    %200 = vector.broadcast %cst_54 : f32 to vector<10x1xf32>
    %201 = arith.divf %199, %200 : vector<10x1xf32>
    %202 = vector.broadcast %196 : vector<10x1xf32> to vector<10x32xf32>
    %203 = arith.subf %190, %202 : vector<10x32xf32>
    %204 = arith.mulf %196, %196 : vector<10x1xf32>
    %205 = arith.subf %201, %204 : vector<10x1xf32>
    %cst_55 = arith.constant 9.99999974E-6 : f32
    %206 = vector.broadcast %cst_55 : f32 to vector<10x1xf32>
    %207 = arith.addf %205, %206 : vector<10x1xf32>
    %208 = math.rsqrt %207 : vector<10x1xf32>
    %209 = vector.broadcast %208 : vector<10x1xf32> to vector<10x32xf32>
    %210 = arith.mulf %203, %209 : vector<10x32xf32>
    %211 = vector.broadcast %191 : vector<1x32xf32> to vector<10x32xf32>
    %212 = arith.mulf %210, %211 : vector<10x32xf32>
    %213 = vector.broadcast %192 : vector<1x32xf32> to vector<10x32xf32>
    %214 = arith.addf %212, %213 : vector<10x32xf32>
    %cst_56 = arith.constant 0.353553385 : f32
    %215 = vector.broadcast %cst_56 : f32 to vector<34x32xf32>
    %216 = arith.mulf %160, %215 : vector<34x32xf32>
    %217 = arith.truncf %216 : vector<34x32xf32> to vector<34x32xbf16>
    %218 = arith.truncf %187 : vector<10x32xf32> to vector<10x32xbf16>
    %219 = arith.truncf %214 : vector<10x32xf32> to vector<10x32xbf16>
    %220 = tpu.iota {dimensions = array<i32: 1>} : vector<1x32xi32>
    %c0_i32_57 = arith.constant 0 : i32
    %221 = vector.broadcast %c0_i32_57 : i32 to vector<1x32xi32>
    %222 = arith.cmpi sge, %220, %221 : vector<1x32xi32>
    %c8_i32 = arith.constant 8 : i32
    %223 = vector.broadcast %c8_i32 : i32 to vector<1x32xi32>
    %224 = arith.cmpi slt, %220, %223 : vector<1x32xi32>
    %225 = arith.andi %222, %224 : vector<1x32xi1>
    %226 = arith.extui %225 : vector<1x32xi1> to vector<1x32xi32>
    %227 = arith.sitofp %226 : vector<1x32xi32> to vector<1x32xf32>
    %228 = arith.truncf %227 : vector<1x32xf32> to vector<1x32xbf16>
    %c8_i32_58 = arith.constant 8 : i32
    %229 = vector.broadcast %c8_i32_58 : i32 to vector<1x32xi32>
    %230 = arith.cmpi sge, %220, %229 : vector<1x32xi32>
    %c16_i32_59 = arith.constant 16 : i32
    %231 = vector.broadcast %c16_i32_59 : i32 to vector<1x32xi32>
    %232 = arith.cmpi slt, %220, %231 : vector<1x32xi32>
    %233 = arith.andi %230, %232 : vector<1x32xi1>
    %234 = arith.extui %233 : vector<1x32xi1> to vector<1x32xi32>
    %235 = arith.sitofp %234 : vector<1x32xi32> to vector<1x32xf32>
    %236 = arith.truncf %235 : vector<1x32xf32> to vector<1x32xbf16>
    %c16_i32_60 = arith.constant 16 : i32
    %237 = vector.broadcast %c16_i32_60 : i32 to vector<1x32xi32>
    %238 = arith.cmpi sge, %220, %237 : vector<1x32xi32>
    %c24_i32 = arith.constant 24 : i32
    %239 = vector.broadcast %c24_i32 : i32 to vector<1x32xi32>
    %240 = arith.cmpi slt, %220, %239 : vector<1x32xi32>
    %241 = arith.andi %238, %240 : vector<1x32xi1>
    %242 = arith.extui %241 : vector<1x32xi1> to vector<1x32xi32>
    %243 = arith.sitofp %242 : vector<1x32xi32> to vector<1x32xf32>
    %244 = arith.truncf %243 : vector<1x32xf32> to vector<1x32xbf16>
    %c24_i32_61 = arith.constant 24 : i32
    %245 = vector.broadcast %c24_i32_61 : i32 to vector<1x32xi32>
    %246 = arith.cmpi sge, %220, %245 : vector<1x32xi32>
    %c32_i32 = arith.constant 32 : i32
    %247 = vector.broadcast %c32_i32 : i32 to vector<1x32xi32>
    %248 = arith.cmpi slt, %220, %247 : vector<1x32xi32>
    %249 = arith.andi %246, %248 : vector<1x32xi1>
    %250 = arith.extui %249 : vector<1x32xi1> to vector<1x32xi32>
    %251 = arith.sitofp %250 : vector<1x32xi32> to vector<1x32xf32>
    %252 = arith.truncf %251 : vector<1x32xf32> to vector<1x32xbf16>
    %253 = vector.extract_strided_slice %217 {offsets = [0, 0], sizes = [17, 32], strides = [1, 1]} : vector<34x32xbf16> to vector<17x32xbf16>
    %254 = vector.extract_strided_slice %218 {offsets = [0, 0], sizes = [5, 32], strides = [1, 1]} : vector<10x32xbf16> to vector<5x32xbf16>
    %255 = vector.extract_strided_slice %219 {offsets = [0, 0], sizes = [5, 32], strides = [1, 1]} : vector<10x32xbf16> to vector<5x32xbf16>
    %cst_62 = arith.constant 0.000000e+00 : f32
    %256 = vector.broadcast %cst_62 : f32 to vector<17x32xf32>
    %257 = vector.broadcast %228 : vector<1x32xbf16> to vector<17x32xbf16>
    %258 = arith.mulf %253, %257 : vector<17x32xbf16>
    %259 = vector.broadcast %228 : vector<1x32xbf16> to vector<5x32xbf16>
    %260 = arith.mulf %255, %259 : vector<5x32xbf16>
    %cst_63 = arith.constant dense<0.000000e+00> : vector<17x5xf32>
    %261 = tpu.matmul %258, %254, %cst_63 {dimension_numbers = #tpu.dot_dimension_numbers<[1], [1], [0], [0], [0, 0, 1, 0], [], []>} : vector<17x32xbf16>, vector<5x32xbf16>, vector<17x5xf32> -> vector<17x5xf32>
    %cst_64 = arith.constant dense<0xFF800000> : vector<17xf32>
    %262 = vector.multi_reduction <maximumf>, %261, %cst_64 [1] : vector<17x5xf32> to vector<17xf32>
    %263 = vector.shape_cast %262 : vector<17xf32> to vector<17x1xf32>
    %264 = vector.broadcast %263 : vector<17x1xf32> to vector<17x5xf32>
    %265 = arith.subf %261, %264 : vector<17x5xf32>
    %266 = math.exp %265 : vector<17x5xf32>
    %cst_65 = arith.constant dense<0.000000e+00> : vector<17xf32>
    %267 = vector.multi_reduction <add>, %266, %cst_65 [1] : vector<17x5xf32> to vector<17xf32>
    %268 = vector.shape_cast %267 : vector<17xf32> to vector<17x1xf32>
    %269 = tpu.reciprocal %268 {approx = true} : vector<17x1xf32> -> vector<17x1xf32>
    %270 = vector.broadcast %269 : vector<17x1xf32> to vector<17x5xf32>
    %271 = arith.mulf %266, %270 : vector<17x5xf32>
    %272 = arith.truncf %271 : vector<17x5xf32> to vector<17x5xbf16>
    %cst_66 = arith.constant dense<0.000000e+00> : vector<17x32xf32>
    %273 = tpu.matmul %272, %260, %cst_66 {dimension_numbers = #tpu.dot_dimension_numbers<[1], [0], [0], [1], [0, 0, 1, 1], [], []>} : vector<17x5xbf16>, vector<5x32xbf16>, vector<17x32xf32> -> vector<17x32xf32>
    %274 = arith.addf %256, %273 : vector<17x32xf32>
    %275 = vector.broadcast %236 : vector<1x32xbf16> to vector<17x32xbf16>
    %276 = arith.mulf %253, %275 : vector<17x32xbf16>
    %277 = vector.broadcast %236 : vector<1x32xbf16> to vector<5x32xbf16>
    %278 = arith.mulf %255, %277 : vector<5x32xbf16>
    %cst_67 = arith.constant dense<0.000000e+00> : vector<17x5xf32>
    %279 = tpu.matmul %276, %254, %cst_67 {dimension_numbers = #tpu.dot_dimension_numbers<[1], [1], [0], [0], [0, 0, 1, 0], [], []>} : vector<17x32xbf16>, vector<5x32xbf16>, vector<17x5xf32> -> vector<17x5xf32>
    %cst_68 = arith.constant dense<0xFF800000> : vector<17xf32>
    %280 = vector.multi_reduction <maximumf>, %279, %cst_68 [1] : vector<17x5xf32> to vector<17xf32>
    %281 = vector.shape_cast %280 : vector<17xf32> to vector<17x1xf32>
    %282 = vector.broadcast %281 : vector<17x1xf32> to vector<17x5xf32>
    %283 = arith.subf %279, %282 : vector<17x5xf32>
    %284 = math.exp %283 : vector<17x5xf32>
    %cst_69 = arith.constant dense<0.000000e+00> : vector<17xf32>
    %285 = vector.multi_reduction <add>, %284, %cst_69 [1] : vector<17x5xf32> to vector<17xf32>
    %286 = vector.shape_cast %285 : vector<17xf32> to vector<17x1xf32>
    %287 = tpu.reciprocal %286 {approx = true} : vector<17x1xf32> -> vector<17x1xf32>
    %288 = vector.broadcast %287 : vector<17x1xf32> to vector<17x5xf32>
    %289 = arith.mulf %284, %288 : vector<17x5xf32>
    %290 = arith.truncf %289 : vector<17x5xf32> to vector<17x5xbf16>
    %cst_70 = arith.constant dense<0.000000e+00> : vector<17x32xf32>
    %291 = tpu.matmul %290, %278, %cst_70 {dimension_numbers = #tpu.dot_dimension_numbers<[1], [0], [0], [1], [0, 0, 1, 1], [], []>} : vector<17x5xbf16>, vector<5x32xbf16>, vector<17x32xf32> -> vector<17x32xf32>
    %292 = arith.addf %274, %291 : vector<17x32xf32>
    %293 = vector.broadcast %244 : vector<1x32xbf16> to vector<17x32xbf16>
    %294 = arith.mulf %253, %293 : vector<17x32xbf16>
    %295 = vector.broadcast %244 : vector<1x32xbf16> to vector<5x32xbf16>
    %296 = arith.mulf %255, %295 : vector<5x32xbf16>
    %cst_71 = arith.constant dense<0.000000e+00> : vector<17x5xf32>
    %297 = tpu.matmul %294, %254, %cst_71 {dimension_numbers = #tpu.dot_dimension_numbers<[1], [1], [0], [0], [0, 0, 1, 0], [], []>} : vector<17x32xbf16>, vector<5x32xbf16>, vector<17x5xf32> -> vector<17x5xf32>
    %cst_72 = arith.constant dense<0xFF800000> : vector<17xf32>
    %298 = vector.multi_reduction <maximumf>, %297, %cst_72 [1] : vector<17x5xf32> to vector<17xf32>
    %299 = vector.shape_cast %298 : vector<17xf32> to vector<17x1xf32>
    %300 = vector.broadcast %299 : vector<17x1xf32> to vector<17x5xf32>
    %301 = arith.subf %297, %300 : vector<17x5xf32>
    %302 = math.exp %301 : vector<17x5xf32>
    %cst_73 = arith.constant dense<0.000000e+00> : vector<17xf32>
    %303 = vector.multi_reduction <add>, %302, %cst_73 [1] : vector<17x5xf32> to vector<17xf32>
    %304 = vector.shape_cast %303 : vector<17xf32> to vector<17x1xf32>
    %305 = tpu.reciprocal %304 {approx = true} : vector<17x1xf32> -> vector<17x1xf32>
    %306 = vector.broadcast %305 : vector<17x1xf32> to vector<17x5xf32>
    %307 = arith.mulf %302, %306 : vector<17x5xf32>
    %308 = arith.truncf %307 : vector<17x5xf32> to vector<17x5xbf16>
    %cst_74 = arith.constant dense<0.000000e+00> : vector<17x32xf32>
    %309 = tpu.matmul %308, %296, %cst_74 {dimension_numbers = #tpu.dot_dimension_numbers<[1], [0], [0], [1], [0, 0, 1, 1], [], []>} : vector<17x5xbf16>, vector<5x32xbf16>, vector<17x32xf32> -> vector<17x32xf32>
    %310 = arith.addf %292, %309 : vector<17x32xf32>
    %311 = vector.broadcast %252 : vector<1x32xbf16> to vector<17x32xbf16>
    %312 = arith.mulf %253, %311 : vector<17x32xbf16>
    %313 = vector.broadcast %252 : vector<1x32xbf16> to vector<5x32xbf16>
    %314 = arith.mulf %255, %313 : vector<5x32xbf16>
    %cst_75 = arith.constant dense<0.000000e+00> : vector<17x5xf32>
    %315 = tpu.matmul %312, %254, %cst_75 {dimension_numbers = #tpu.dot_dimension_numbers<[1], [1], [0], [0], [0, 0, 1, 0], [], []>} : vector<17x32xbf16>, vector<5x32xbf16>, vector<17x5xf32> -> vector<17x5xf32>
    %cst_76 = arith.constant dense<0xFF800000> : vector<17xf32>
    %316 = vector.multi_reduction <maximumf>, %315, %cst_76 [1] : vector<17x5xf32> to vector<17xf32>
    %317 = vector.shape_cast %316 : vector<17xf32> to vector<17x1xf32>
    %318 = vector.broadcast %317 : vector<17x1xf32> to vector<17x5xf32>
    %319 = arith.subf %315, %318 : vector<17x5xf32>
    %320 = math.exp %319 : vector<17x5xf32>
    %cst_77 = arith.constant dense<0.000000e+00> : vector<17xf32>
    %321 = vector.multi_reduction <add>, %320, %cst_77 [1] : vector<17x5xf32> to vector<17xf32>
    %322 = vector.shape_cast %321 : vector<17xf32> to vector<17x1xf32>
    %323 = tpu.reciprocal %322 {approx = true} : vector<17x1xf32> -> vector<17x1xf32>
    %324 = vector.broadcast %323 : vector<17x1xf32> to vector<17x5xf32>
    %325 = arith.mulf %320, %324 : vector<17x5xf32>
    %326 = arith.truncf %325 : vector<17x5xf32> to vector<17x5xbf16>
    %cst_78 = arith.constant dense<0.000000e+00> : vector<17x32xf32>
    %327 = tpu.matmul %326, %314, %cst_78 {dimension_numbers = #tpu.dot_dimension_numbers<[1], [0], [0], [1], [0, 0, 1, 1], [], []>} : vector<17x5xbf16>, vector<5x32xbf16>, vector<17x32xf32> -> vector<17x32xf32>
    %328 = arith.addf %310, %327 : vector<17x32xf32>
    %329 = vector.extract_strided_slice %217 {offsets = [17, 0], sizes = [17, 32], strides = [1, 1]} : vector<34x32xbf16> to vector<17x32xbf16>
    %330 = vector.extract_strided_slice %218 {offsets = [5, 0], sizes = [5, 32], strides = [1, 1]} : vector<10x32xbf16> to vector<5x32xbf16>
    %331 = vector.extract_strided_slice %219 {offsets = [5, 0], sizes = [5, 32], strides = [1, 1]} : vector<10x32xbf16> to vector<5x32xbf16>
    %cst_79 = arith.constant 0.000000e+00 : f32
    %332 = vector.broadcast %cst_79 : f32 to vector<17x32xf32>
    %333 = vector.broadcast %228 : vector<1x32xbf16> to vector<17x32xbf16>
    %334 = arith.mulf %329, %333 : vector<17x32xbf16>
    %335 = vector.broadcast %228 : vector<1x32xbf16> to vector<5x32xbf16>
    %336 = arith.mulf %331, %335 : vector<5x32xbf16>
    %cst_80 = arith.constant dense<0.000000e+00> : vector<17x5xf32>
    %337 = tpu.matmul %334, %330, %cst_80 {dimension_numbers = #tpu.dot_dimension_numbers<[1], [1], [0], [0], [0, 0, 1, 0], [], []>} : vector<17x32xbf16>, vector<5x32xbf16>, vector<17x5xf32> -> vector<17x5xf32>
    %cst_81 = arith.constant dense<0xFF800000> : vector<17xf32>
    %338 = vector.multi_reduction <maximumf>, %337, %cst_81 [1] : vector<17x5xf32> to vector<17xf32>
    %339 = vector.shape_cast %338 : vector<17xf32> to vector<17x1xf32>
    %340 = vector.broadcast %339 : vector<17x1xf32> to vector<17x5xf32>
    %341 = arith.subf %337, %340 : vector<17x5xf32>
    %342 = math.exp %341 : vector<17x5xf32>
    %cst_82 = arith.constant dense<0.000000e+00> : vector<17xf32>
    %343 = vector.multi_reduction <add>, %342, %cst_82 [1] : vector<17x5xf32> to vector<17xf32>
    %344 = vector.shape_cast %343 : vector<17xf32> to vector<17x1xf32>
    %345 = tpu.reciprocal %344 {approx = true} : vector<17x1xf32> -> vector<17x1xf32>
    %346 = vector.broadcast %345 : vector<17x1xf32> to vector<17x5xf32>
    %347 = arith.mulf %342, %346 : vector<17x5xf32>
    %348 = arith.truncf %347 : vector<17x5xf32> to vector<17x5xbf16>
    %cst_83 = arith.constant dense<0.000000e+00> : vector<17x32xf32>
    %349 = tpu.matmul %348, %336, %cst_83 {dimension_numbers = #tpu.dot_dimension_numbers<[1], [0], [0], [1], [0, 0, 1, 1], [], []>} : vector<17x5xbf16>, vector<5x32xbf16>, vector<17x32xf32> -> vector<17x32xf32>
    %350 = arith.addf %332, %349 : vector<17x32xf32>
    %351 = vector.broadcast %236 : vector<1x32xbf16> to vector<17x32xbf16>
    %352 = arith.mulf %329, %351 : vector<17x32xbf16>
    %353 = vector.broadcast %236 : vector<1x32xbf16> to vector<5x32xbf16>
    %354 = arith.mulf %331, %353 : vector<5x32xbf16>
    %cst_84 = arith.constant dense<0.000000e+00> : vector<17x5xf32>
    %355 = tpu.matmul %352, %330, %cst_84 {dimension_numbers = #tpu.dot_dimension_numbers<[1], [1], [0], [0], [0, 0, 1, 0], [], []>} : vector<17x32xbf16>, vector<5x32xbf16>, vector<17x5xf32> -> vector<17x5xf32>
    %cst_85 = arith.constant dense<0xFF800000> : vector<17xf32>
    %356 = vector.multi_reduction <maximumf>, %355, %cst_85 [1] : vector<17x5xf32> to vector<17xf32>
    %357 = vector.shape_cast %356 : vector<17xf32> to vector<17x1xf32>
    %358 = vector.broadcast %357 : vector<17x1xf32> to vector<17x5xf32>
    %359 = arith.subf %355, %358 : vector<17x5xf32>
    %360 = math.exp %359 : vector<17x5xf32>
    %cst_86 = arith.constant dense<0.000000e+00> : vector<17xf32>
    %361 = vector.multi_reduction <add>, %360, %cst_86 [1] : vector<17x5xf32> to vector<17xf32>
    %362 = vector.shape_cast %361 : vector<17xf32> to vector<17x1xf32>
    %363 = tpu.reciprocal %362 {approx = true} : vector<17x1xf32> -> vector<17x1xf32>
    %364 = vector.broadcast %363 : vector<17x1xf32> to vector<17x5xf32>
    %365 = arith.mulf %360, %364 : vector<17x5xf32>
    %366 = arith.truncf %365 : vector<17x5xf32> to vector<17x5xbf16>
    %cst_87 = arith.constant dense<0.000000e+00> : vector<17x32xf32>
    %367 = tpu.matmul %366, %354, %cst_87 {dimension_numbers = #tpu.dot_dimension_numbers<[1], [0], [0], [1], [0, 0, 1, 1], [], []>} : vector<17x5xbf16>, vector<5x32xbf16>, vector<17x32xf32> -> vector<17x32xf32>
    %368 = arith.addf %350, %367 : vector<17x32xf32>
    %369 = vector.broadcast %244 : vector<1x32xbf16> to vector<17x32xbf16>
    %370 = arith.mulf %329, %369 : vector<17x32xbf16>
    %371 = vector.broadcast %244 : vector<1x32xbf16> to vector<5x32xbf16>
    %372 = arith.mulf %331, %371 : vector<5x32xbf16>
    %cst_88 = arith.constant dense<0.000000e+00> : vector<17x5xf32>
    %373 = tpu.matmul %370, %330, %cst_88 {dimension_numbers = #tpu.dot_dimension_numbers<[1], [1], [0], [0], [0, 0, 1, 0], [], []>} : vector<17x32xbf16>, vector<5x32xbf16>, vector<17x5xf32> -> vector<17x5xf32>
    %cst_89 = arith.constant dense<0xFF800000> : vector<17xf32>
    %374 = vector.multi_reduction <maximumf>, %373, %cst_89 [1] : vector<17x5xf32> to vector<17xf32>
    %375 = vector.shape_cast %374 : vector<17xf32> to vector<17x1xf32>
    %376 = vector.broadcast %375 : vector<17x1xf32> to vector<17x5xf32>
    %377 = arith.subf %373, %376 : vector<17x5xf32>
    %378 = math.exp %377 : vector<17x5xf32>
    %cst_90 = arith.constant dense<0.000000e+00> : vector<17xf32>
    %379 = vector.multi_reduction <add>, %378, %cst_90 [1] : vector<17x5xf32> to vector<17xf32>
    %380 = vector.shape_cast %379 : vector<17xf32> to vector<17x1xf32>
    %381 = tpu.reciprocal %380 {approx = true} : vector<17x1xf32> -> vector<17x1xf32>
    %382 = vector.broadcast %381 : vector<17x1xf32> to vector<17x5xf32>
    %383 = arith.mulf %378, %382 : vector<17x5xf32>
    %384 = arith.truncf %383 : vector<17x5xf32> to vector<17x5xbf16>
    %cst_91 = arith.constant dense<0.000000e+00> : vector<17x32xf32>
    %385 = tpu.matmul %384, %372, %cst_91 {dimension_numbers = #tpu.dot_dimension_numbers<[1], [0], [0], [1], [0, 0, 1, 1], [], []>} : vector<17x5xbf16>, vector<5x32xbf16>, vector<17x32xf32> -> vector<17x32xf32>
    %386 = arith.addf %368, %385 : vector<17x32xf32>
    %387 = vector.broadcast %252 : vector<1x32xbf16> to vector<17x32xbf16>
    %388 = arith.mulf %329, %387 : vector<17x32xbf16>
    %389 = vector.broadcast %252 : vector<1x32xbf16> to vector<5x32xbf16>
    %390 = arith.mulf %331, %389 : vector<5x32xbf16>
    %cst_92 = arith.constant dense<0.000000e+00> : vector<17x5xf32>
    %391 = tpu.matmul %388, %330, %cst_92 {dimension_numbers = #tpu.dot_dimension_numbers<[1], [1], [0], [0], [0, 0, 1, 0], [], []>} : vector<17x32xbf16>, vector<5x32xbf16>, vector<17x5xf32> -> vector<17x5xf32>
    %cst_93 = arith.constant dense<0xFF800000> : vector<17xf32>
    %392 = vector.multi_reduction <maximumf>, %391, %cst_93 [1] : vector<17x5xf32> to vector<17xf32>
    %393 = vector.shape_cast %392 : vector<17xf32> to vector<17x1xf32>
    %394 = vector.broadcast %393 : vector<17x1xf32> to vector<17x5xf32>
    %395 = arith.subf %391, %394 : vector<17x5xf32>
    %396 = math.exp %395 : vector<17x5xf32>
    %cst_94 = arith.constant dense<0.000000e+00> : vector<17xf32>
    %397 = vector.multi_reduction <add>, %396, %cst_94 [1] : vector<17x5xf32> to vector<17xf32>
    %398 = vector.shape_cast %397 : vector<17xf32> to vector<17x1xf32>
    %399 = tpu.reciprocal %398 {approx = true} : vector<17x1xf32> -> vector<17x1xf32>
    %400 = vector.broadcast %399 : vector<17x1xf32> to vector<17x5xf32>
    %401 = arith.mulf %396, %400 : vector<17x5xf32>
    %402 = arith.truncf %401 : vector<17x5xf32> to vector<17x5xbf16>
    %cst_95 = arith.constant dense<0.000000e+00> : vector<17x32xf32>
    %403 = tpu.matmul %402, %390, %cst_95 {dimension_numbers = #tpu.dot_dimension_numbers<[1], [0], [0], [1], [0, 0, 1, 1], [], []>} : vector<17x5xbf16>, vector<5x32xbf16>, vector<17x32xf32> -> vector<17x32xf32>
    %404 = arith.addf %386, %403 : vector<17x32xf32>
    %405 = tpu.concatenate %328, %404 in 0 : vector<17x32xf32>, vector<17x32xf32> -> vector<34x32xf32>
    %c96 = arith.constant 96 : index
    %c0_96 = arith.constant 0 : index
    %406 = vector.load %arg4[%c96, %c0_96] : memref<544x32xbf16, #tpu.memory_space<vmem>>, vector<32x32xbf16>
    %407 = arith.truncf %405 : vector<34x32xf32> to vector<34x32xbf16>
    %cst_97 = arith.constant dense<0.000000e+00> : vector<34x32xf32>
    %408 = tpu.matmul %407, %406, %cst_97 {dimension_numbers = #tpu.dot_dimension_numbers<[1], [0], [0], [1], [0, 0, 1, 1], [], []>} : vector<34x32xbf16>, vector<32x32xbf16>, vector<34x32xf32> -> vector<34x32xf32>
    %409 = arith.addf %408, %6 : vector<34x32xf32>
    %410 = vector.extract_strided_slice %0 {offsets = [2, 0], sizes = [1, 32], strides = [1, 1]} : vector<31x32xf32> to vector<1x32xf32>
    %411 = vector.extract_strided_slice %0 {offsets = [3, 0], sizes = [1, 32], strides = [1, 1]} : vector<31x32xf32> to vector<1x32xf32>
    %cst_98 = arith.constant dense<0.000000e+00> : vector<34xf32>
    %412 = vector.multi_reduction <add>, %409, %cst_98 [1] : vector<34x32xf32> to vector<34xf32>
    %413 = vector.shape_cast %412 : vector<34xf32> to vector<34x1xf32>
    %cst_99 = arith.constant 3.200000e+01 : f32
    %414 = vector.broadcast %cst_99 : f32 to vector<34x1xf32>
    %415 = arith.divf %413, %414 : vector<34x1xf32>
    %416 = arith.mulf %409, %409 : vector<34x32xf32>
    %cst_100 = arith.constant dense<0.000000e+00> : vector<34xf32>
    %417 = vector.multi_reduction <add>, %416, %cst_100 [1] : vector<34x32xf32> to vector<34xf32>
    %418 = vector.shape_cast %417 : vector<34xf32> to vector<34x1xf32>
    %cst_101 = arith.constant 3.200000e+01 : f32
    %419 = vector.broadcast %cst_101 : f32 to vector<34x1xf32>
    %420 = arith.divf %418, %419 : vector<34x1xf32>
    %421 = vector.broadcast %415 : vector<34x1xf32> to vector<34x32xf32>
    %422 = arith.subf %409, %421 : vector<34x32xf32>
    %423 = arith.mulf %415, %415 : vector<34x1xf32>
    %424 = arith.subf %420, %423 : vector<34x1xf32>
    %cst_102 = arith.constant 9.99999974E-6 : f32
    %425 = vector.broadcast %cst_102 : f32 to vector<34x1xf32>
    %426 = arith.addf %424, %425 : vector<34x1xf32>
    %427 = math.rsqrt %426 : vector<34x1xf32>
    %428 = vector.broadcast %427 : vector<34x1xf32> to vector<34x32xf32>
    %429 = arith.mulf %422, %428 : vector<34x32xf32>
    %430 = vector.broadcast %410 : vector<1x32xf32> to vector<34x32xf32>
    %431 = arith.mulf %429, %430 : vector<34x32xf32>
    %432 = vector.broadcast %411 : vector<1x32xf32> to vector<34x32xf32>
    %433 = arith.addf %431, %432 : vector<34x32xf32>
    %c160 = arith.constant 160 : index
    %c0_103 = arith.constant 0 : index
    %434 = vector.load %arg4[%c160, %c0_103] : memref<544x32xbf16, #tpu.memory_space<vmem>>, vector<32x32xbf16>
    %435 = arith.truncf %433 : vector<34x32xf32> to vector<34x32xbf16>
    %cst_104 = arith.constant dense<0.000000e+00> : vector<34x32xf32>
    %436 = tpu.matmul %435, %434, %cst_104 {dimension_numbers = #tpu.dot_dimension_numbers<[1], [0], [0], [1], [0, 0, 1, 1], [], []>} : vector<34x32xbf16>, vector<32x32xbf16>, vector<34x32xf32> -> vector<34x32xf32>
    %437 = vector.extract_strided_slice %0 {offsets = [25, 0], sizes = [1, 32], strides = [1, 1]} : vector<31x32xf32> to vector<1x32xf32>
    %438 = vector.broadcast %437 : vector<1x32xf32> to vector<34x32xf32>
    %439 = arith.addf %436, %438 : vector<34x32xf32>
    %cst_105 = arith.constant 0.000000e+00 : f32
    %440 = vector.broadcast %cst_105 : f32 to vector<1x32xf32>
    %441 = vector.extract_strided_slice %439 {offsets = [0, 0], sizes = [33, 32], strides = [1, 1]} : vector<34x32xf32> to vector<33x32xf32>
    %442 = tpu.concatenate %440, %441 in 0 : vector<1x32xf32>, vector<33x32xf32> -> vector<34x32xf32>
    %cst_106 = arith.constant 0.000000e+00 : f32
    %443 = vector.shape_cast %27 : vector<34x1xi1> to vector<34x1xi1>
    %444 = vector.broadcast %443 : vector<34x1xi1> to vector<34x32xi1>
    %445 = vector.broadcast %cst_106 : f32 to vector<34x32xf32>
    %446 = arith.select %444, %445, %442 : vector<34x32xi1>, vector<34x32xf32>
    %447 = vector.extract_strided_slice %439 {offsets = [1, 0], sizes = [33, 32], strides = [1, 1]} : vector<34x32xf32> to vector<33x32xf32>
    %448 = tpu.concatenate %447, %440 in 0 : vector<33x32xf32>, vector<1x32xf32> -> vector<34x32xf32>
    %cst_107 = arith.constant 0.000000e+00 : f32
    %449 = vector.shape_cast %32 : vector<34x1xi1> to vector<34x1xi1>
    %450 = vector.broadcast %449 : vector<34x1xi1> to vector<34x32xi1>
    %451 = vector.broadcast %cst_107 : f32 to vector<34x32xf32>
    %452 = arith.select %450, %451, %448 : vector<34x32xi1>, vector<34x32xf32>
    %453 = vector.extract_strided_slice %1 {offsets = [0, 0], sizes = [3, 128], strides = [1, 1]} : vector<8x128xf32> to vector<3x128xf32>
    %454 = vector.extract_strided_slice %1 {offsets = [3, 0], sizes = [1, 128], strides = [1, 1]} : vector<8x128xf32> to vector<1x128xf32>
    %455 = tpu.concatenate %446, %446, %446, %446 in 1 : vector<34x32xf32>, vector<34x32xf32>, vector<34x32xf32>, vector<34x32xf32> -> vector<34x128xf32>
    %456 = vector.extract_strided_slice %453 {offsets = [0, 0], sizes = [1, 128], strides = [1, 1]} : vector<3x128xf32> to vector<1x128xf32>
    %457 = vector.broadcast %456 : vector<1x128xf32> to vector<34x128xf32>
    %458 = arith.mulf %455, %457 : vector<34x128xf32>
    %459 = tpu.concatenate %439, %439, %439, %439 in 1 : vector<34x32xf32>, vector<34x32xf32>, vector<34x32xf32>, vector<34x32xf32> -> vector<34x128xf32>
    %460 = vector.extract_strided_slice %453 {offsets = [1, 0], sizes = [1, 128], strides = [1, 1]} : vector<3x128xf32> to vector<1x128xf32>
    %461 = vector.broadcast %460 : vector<1x128xf32> to vector<34x128xf32>
    %462 = arith.mulf %459, %461 : vector<34x128xf32>
    %463 = arith.addf %458, %462 : vector<34x128xf32>
    %464 = tpu.concatenate %452, %452, %452, %452 in 1 : vector<34x32xf32>, vector<34x32xf32>, vector<34x32xf32>, vector<34x32xf32> -> vector<34x128xf32>
    %465 = vector.extract_strided_slice %453 {offsets = [2, 0], sizes = [1, 128], strides = [1, 1]} : vector<3x128xf32> to vector<1x128xf32>
    %466 = vector.broadcast %465 : vector<1x128xf32> to vector<34x128xf32>
    %467 = arith.mulf %464, %466 : vector<34x128xf32>
    %468 = arith.addf %463, %467 : vector<34x128xf32>
    %469 = vector.broadcast %454 : vector<1x128xf32> to vector<34x128xf32>
    %470 = arith.addf %468, %469 : vector<34x128xf32>
    %cst_108 = arith.constant 5.000000e-01 : f32
    %471 = vector.broadcast %cst_108 : f32 to vector<34x128xf32>
    %472 = arith.mulf %471, %470 : vector<34x128xf32>
    %cst_109 = arith.constant 4.471500e-02 : f32
    %473 = vector.broadcast %cst_109 : f32 to vector<34x128xf32>
    %474 = arith.mulf %473, %470 : vector<34x128xf32>
    %475 = arith.mulf %474, %470 : vector<34x128xf32>
    %476 = arith.mulf %475, %470 : vector<34x128xf32>
    %477 = arith.addf %470, %476 : vector<34x128xf32>
    %cst_110 = arith.constant 0.797884583 : f32
    %478 = vector.broadcast %cst_110 : f32 to vector<34x128xf32>
    %479 = arith.mulf %478, %477 : vector<34x128xf32>
    %480 = math.tanh %479 : vector<34x128xf32>
    %cst_111 = arith.constant 1.000000e+00 : f32
    %481 = vector.broadcast %cst_111 : f32 to vector<34x128xf32>
    %482 = arith.addf %481, %480 : vector<34x128xf32>
    %483 = arith.mulf %472, %482 : vector<34x128xf32>
    %484 = arith.truncf %483 : vector<34x128xf32> to vector<34x128xbf16>
    %c192 = arith.constant 192 : index
    %c0_112 = arith.constant 0 : index
    %485 = vector.load %arg4[%c192, %c0_112] : memref<544x32xbf16, #tpu.memory_space<vmem>>, vector<128x32xbf16>
    %cst_113 = arith.constant dense<0.000000e+00> : vector<34x32xf32>
    %486 = tpu.matmul %484, %485, %cst_113 {dimension_numbers = #tpu.dot_dimension_numbers<[1], [0], [0], [1], [0, 0, 1, 1], [], []>} : vector<34x128xbf16>, vector<128x32xbf16>, vector<34x32xf32> -> vector<34x32xf32>
    %487 = vector.extract_strided_slice %0 {offsets = [26, 0], sizes = [1, 32], strides = [1, 1]} : vector<31x32xf32> to vector<1x32xf32>
    %488 = vector.broadcast %487 : vector<1x32xf32> to vector<34x32xf32>
    %489 = arith.addf %486, %488 : vector<34x32xf32>
    %490 = vector.shape_cast %25 : vector<34x1xi1> to vector<34x1xi1>
    %491 = vector.broadcast %490 : vector<34x1xi1> to vector<34x32xi1>
    %492 = arith.select %491, %433, %489 : vector<34x32xi1>, vector<34x32xf32>
    %493 = arith.addf %492, %409 : vector<34x32xf32>
    %494 = vector.extract_strided_slice %0 {offsets = [4, 0], sizes = [1, 32], strides = [1, 1]} : vector<31x32xf32> to vector<1x32xf32>
    %495 = vector.extract_strided_slice %0 {offsets = [5, 0], sizes = [1, 32], strides = [1, 1]} : vector<31x32xf32> to vector<1x32xf32>
    %cst_114 = arith.constant dense<0.000000e+00> : vector<34xf32>
    %496 = vector.multi_reduction <add>, %493, %cst_114 [1] : vector<34x32xf32> to vector<34xf32>
    %497 = vector.shape_cast %496 : vector<34xf32> to vector<34x1xf32>
    %cst_115 = arith.constant 3.200000e+01 : f32
    %498 = vector.broadcast %cst_115 : f32 to vector<34x1xf32>
    %499 = arith.divf %497, %498 : vector<34x1xf32>
    %500 = arith.mulf %493, %493 : vector<34x32xf32>
    %cst_116 = arith.constant dense<0.000000e+00> : vector<34xf32>
    %501 = vector.multi_reduction <add>, %500, %cst_116 [1] : vector<34x32xf32> to vector<34xf32>
    %502 = vector.shape_cast %501 : vector<34xf32> to vector<34x1xf32>
    %cst_117 = arith.constant 3.200000e+01 : f32
    %503 = vector.broadcast %cst_117 : f32 to vector<34x1xf32>
    %504 = arith.divf %502, %503 : vector<34x1xf32>
    %505 = vector.broadcast %499 : vector<34x1xf32> to vector<34x32xf32>
    %506 = arith.subf %493, %505 : vector<34x32xf32>
    %507 = arith.mulf %499, %499 : vector<34x1xf32>
    %508 = arith.subf %504, %507 : vector<34x1xf32>
    %cst_118 = arith.constant 9.99999974E-6 : f32
    %509 = vector.broadcast %cst_118 : f32 to vector<34x1xf32>
    %510 = arith.addf %508, %509 : vector<34x1xf32>
    %511 = math.rsqrt %510 : vector<34x1xf32>
    %512 = vector.broadcast %511 : vector<34x1xf32> to vector<34x32xf32>
    %513 = arith.mulf %506, %512 : vector<34x32xf32>
    %514 = vector.broadcast %494 : vector<1x32xf32> to vector<34x32xf32>
    %515 = arith.mulf %513, %514 : vector<34x32xf32>
    %516 = vector.broadcast %495 : vector<1x32xf32> to vector<34x32xf32>
    %517 = arith.addf %515, %516 : vector<34x32xf32>
    %c320 = arith.constant 320 : index
    %c0_119 = arith.constant 0 : index
    %518 = vector.load %arg4[%c320, %c0_119] : memref<544x32xbf16, #tpu.memory_space<vmem>>, vector<32x32xbf16>
    %519 = arith.truncf %517 : vector<34x32xf32> to vector<34x32xbf16>
    %cst_120 = arith.constant dense<0.000000e+00> : vector<34x32xf32>
    %520 = tpu.matmul %519, %518, %cst_120 {dimension_numbers = #tpu.dot_dimension_numbers<[1], [0], [0], [1], [0, 0, 1, 1], [], []>} : vector<34x32xbf16>, vector<32x32xbf16>, vector<34x32xf32> -> vector<34x32xf32>
    %521 = vector.extract_strided_slice %0 {offsets = [27, 0], sizes = [1, 32], strides = [1, 1]} : vector<31x32xf32> to vector<1x32xf32>
    %522 = vector.broadcast %521 : vector<1x32xf32> to vector<34x32xf32>
    %523 = arith.addf %520, %522 : vector<34x32xf32>
    %cst_121 = arith.constant 0.000000e+00 : f32
    %524 = vector.broadcast %cst_121 : f32 to vector<1x32xf32>
    %525 = vector.extract_strided_slice %523 {offsets = [0, 0], sizes = [33, 32], strides = [1, 1]} : vector<34x32xf32> to vector<33x32xf32>
    %526 = tpu.concatenate %524, %525 in 0 : vector<1x32xf32>, vector<33x32xf32> -> vector<34x32xf32>
    %cst_122 = arith.constant 0.000000e+00 : f32
    %527 = vector.shape_cast %27 : vector<34x1xi1> to vector<34x1xi1>
    %528 = vector.broadcast %527 : vector<34x1xi1> to vector<34x32xi1>
    %529 = vector.broadcast %cst_122 : f32 to vector<34x32xf32>
    %530 = arith.select %528, %529, %526 : vector<34x32xi1>, vector<34x32xf32>
    %531 = vector.extract_strided_slice %523 {offsets = [1, 0], sizes = [33, 32], strides = [1, 1]} : vector<34x32xf32> to vector<33x32xf32>
    %532 = tpu.concatenate %531, %524 in 0 : vector<33x32xf32>, vector<1x32xf32> -> vector<34x32xf32>
    %cst_123 = arith.constant 0.000000e+00 : f32
    %533 = vector.shape_cast %32 : vector<34x1xi1> to vector<34x1xi1>
    %534 = vector.broadcast %533 : vector<34x1xi1> to vector<34x32xi1>
    %535 = vector.broadcast %cst_123 : f32 to vector<34x32xf32>
    %536 = arith.select %534, %535, %532 : vector<34x32xi1>, vector<34x32xf32>
    %537 = vector.extract_strided_slice %1 {offsets = [4, 0], sizes = [3, 128], strides = [1, 1]} : vector<8x128xf32> to vector<3x128xf32>
    %538 = vector.extract_strided_slice %1 {offsets = [7, 0], sizes = [1, 128], strides = [1, 1]} : vector<8x128xf32> to vector<1x128xf32>
    %539 = tpu.concatenate %530, %530, %530, %530 in 1 : vector<34x32xf32>, vector<34x32xf32>, vector<34x32xf32>, vector<34x32xf32> -> vector<34x128xf32>
    %540 = vector.extract_strided_slice %537 {offsets = [0, 0], sizes = [1, 128], strides = [1, 1]} : vector<3x128xf32> to vector<1x128xf32>
    %541 = vector.broadcast %540 : vector<1x128xf32> to vector<34x128xf32>
    %542 = arith.mulf %539, %541 : vector<34x128xf32>
    %543 = tpu.concatenate %523, %523, %523, %523 in 1 : vector<34x32xf32>, vector<34x32xf32>, vector<34x32xf32>, vector<34x32xf32> -> vector<34x128xf32>
    %544 = vector.extract_strided_slice %537 {offsets = [1, 0], sizes = [1, 128], strides = [1, 1]} : vector<3x128xf32> to vector<1x128xf32>
    %545 = vector.broadcast %544 : vector<1x128xf32> to vector<34x128xf32>
    %546 = arith.mulf %543, %545 : vector<34x128xf32>
    %547 = arith.addf %542, %546 : vector<34x128xf32>
    %548 = tpu.concatenate %536, %536, %536, %536 in 1 : vector<34x32xf32>, vector<34x32xf32>, vector<34x32xf32>, vector<34x32xf32> -> vector<34x128xf32>
    %549 = vector.extract_strided_slice %537 {offsets = [2, 0], sizes = [1, 128], strides = [1, 1]} : vector<3x128xf32> to vector<1x128xf32>
    %550 = vector.broadcast %549 : vector<1x128xf32> to vector<34x128xf32>
    %551 = arith.mulf %548, %550 : vector<34x128xf32>
    %552 = arith.addf %547, %551 : vector<34x128xf32>
    %553 = vector.broadcast %538 : vector<1x128xf32> to vector<34x128xf32>
    %554 = arith.addf %552, %553 : vector<34x128xf32>
    %cst_124 = arith.constant 5.000000e-01 : f32
    %555 = vector.broadcast %cst_124 : f32 to vector<34x128xf32>
    %556 = arith.mulf %555, %554 : vector<34x128xf32>
    %cst_125 = arith.constant 4.471500e-02 : f32
    %557 = vector.broadcast %cst_125 : f32 to vector<34x128xf32>
    %558 = arith.mulf %557, %554 : vector<34x128xf32>
    %559 = arith.mulf %558, %554 : vector<34x128xf32>
    %560 = arith.mulf %559, %554 : vector<34x128xf32>
    %561 = arith.addf %554, %560 : vector<34x128xf32>
    %cst_126 = arith.constant 0.797884583 : f32
    %562 = vector.broadcast %cst_126 : f32 to vector<34x128xf32>
    %563 = arith.mulf %562, %561 : vector<34x128xf32>
    %564 = math.tanh %563 : vector<34x128xf32>
    %cst_127 = arith.constant 1.000000e+00 : f32
    %565 = vector.broadcast %cst_127 : f32 to vector<34x128xf32>
    %566 = arith.addf %565, %564 : vector<34x128xf32>
    %567 = arith.mulf %556, %566 : vector<34x128xf32>
    %568 = arith.truncf %567 : vector<34x128xf32> to vector<34x128xbf16>
    %c352 = arith.constant 352 : index
    %c0_128 = arith.constant 0 : index
    %569 = vector.load %arg4[%c352, %c0_128] : memref<544x32xbf16, #tpu.memory_space<vmem>>, vector<128x32xbf16>
    %cst_129 = arith.constant dense<0.000000e+00> : vector<34x32xf32>
    %570 = tpu.matmul %568, %569, %cst_129 {dimension_numbers = #tpu.dot_dimension_numbers<[1], [0], [0], [1], [0, 0, 1, 1], [], []>} : vector<34x128xbf16>, vector<128x32xbf16>, vector<34x32xf32> -> vector<34x32xf32>
    %571 = vector.extract_strided_slice %0 {offsets = [28, 0], sizes = [1, 32], strides = [1, 1]} : vector<31x32xf32> to vector<1x32xf32>
    %572 = vector.broadcast %571 : vector<1x32xf32> to vector<34x32xf32>
    %573 = arith.addf %570, %572 : vector<34x32xf32>
    %574 = vector.shape_cast %25 : vector<34x1xi1> to vector<34x1xi1>
    %575 = vector.broadcast %574 : vector<34x1xi1> to vector<34x32xi1>
    %576 = arith.select %575, %517, %573 : vector<34x32xi1>, vector<34x32xf32>
    %577 = arith.addf %576, %493 : vector<34x32xf32>
    %578 = vector.extract_strided_slice %0 {offsets = [6, 0], sizes = [1, 32], strides = [1, 1]} : vector<31x32xf32> to vector<1x32xf32>
    %579 = vector.extract_strided_slice %0 {offsets = [7, 0], sizes = [1, 32], strides = [1, 1]} : vector<31x32xf32> to vector<1x32xf32>
    %cst_130 = arith.constant dense<0.000000e+00> : vector<34xf32>
    %580 = vector.multi_reduction <add>, %493, %cst_130 [1] : vector<34x32xf32> to vector<34xf32>
    %581 = vector.shape_cast %580 : vector<34xf32> to vector<34x1xf32>
    %cst_131 = arith.constant 3.200000e+01 : f32
    %582 = vector.broadcast %cst_131 : f32 to vector<34x1xf32>
    %583 = arith.divf %581, %582 : vector<34x1xf32>
    %584 = arith.mulf %493, %493 : vector<34x32xf32>
    %cst_132 = arith.constant dense<0.000000e+00> : vector<34xf32>
    %585 = vector.multi_reduction <add>, %584, %cst_132 [1] : vector<34x32xf32> to vector<34xf32>
    %586 = vector.shape_cast %585 : vector<34xf32> to vector<34x1xf32>
    %cst_133 = arith.constant 3.200000e+01 : f32
    %587 = vector.broadcast %cst_133 : f32 to vector<34x1xf32>
    %588 = arith.divf %586, %587 : vector<34x1xf32>
    %589 = vector.broadcast %583 : vector<34x1xf32> to vector<34x32xf32>
    %590 = arith.subf %493, %589 : vector<34x32xf32>
    %591 = arith.mulf %583, %583 : vector<34x1xf32>
    %592 = arith.subf %588, %591 : vector<34x1xf32>
    %cst_134 = arith.constant 9.99999974E-6 : f32
    %593 = vector.broadcast %cst_134 : f32 to vector<34x1xf32>
    %594 = arith.addf %592, %593 : vector<34x1xf32>
    %595 = math.rsqrt %594 : vector<34x1xf32>
    %596 = vector.broadcast %595 : vector<34x1xf32> to vector<34x32xf32>
    %597 = arith.mulf %590, %596 : vector<34x32xf32>
    %598 = vector.broadcast %578 : vector<1x32xf32> to vector<34x32xf32>
    %599 = arith.mulf %597, %598 : vector<34x32xf32>
    %600 = vector.broadcast %579 : vector<1x32xf32> to vector<34x32xf32>
    %601 = arith.addf %599, %600 : vector<34x32xf32>
    %c480 = arith.constant 480 : index
    %c0_135 = arith.constant 0 : index
    %602 = vector.load %arg4[%c480, %c0_135] : memref<544x32xbf16, #tpu.memory_space<vmem>>, vector<32x32xbf16>
    %603 = arith.truncf %601 : vector<34x32xf32> to vector<34x32xbf16>
    %cst_136 = arith.constant dense<0.000000e+00> : vector<34x32xf32>
    %604 = tpu.matmul %603, %602, %cst_136 {dimension_numbers = #tpu.dot_dimension_numbers<[1], [0], [0], [1], [0, 0, 1, 1], [], []>} : vector<34x32xbf16>, vector<32x32xbf16>, vector<34x32xf32> -> vector<34x32xf32>
    %605 = vector.extract_strided_slice %0 {offsets = [29, 0], sizes = [1, 32], strides = [1, 1]} : vector<31x32xf32> to vector<1x32xf32>
    %606 = vector.broadcast %605 : vector<1x32xf32> to vector<34x32xf32>
    %607 = arith.addf %604, %606 : vector<34x32xf32>
    %cst_137 = arith.constant 5.000000e-01 : f32
    %608 = vector.broadcast %cst_137 : f32 to vector<34x32xf32>
    %609 = arith.mulf %608, %607 : vector<34x32xf32>
    %cst_138 = arith.constant 4.471500e-02 : f32
    %610 = vector.broadcast %cst_138 : f32 to vector<34x32xf32>
    %611 = arith.mulf %610, %607 : vector<34x32xf32>
    %612 = arith.mulf %611, %607 : vector<34x32xf32>
    %613 = arith.mulf %612, %607 : vector<34x32xf32>
    %614 = arith.addf %607, %613 : vector<34x32xf32>
    %cst_139 = arith.constant 0.797884583 : f32
    %615 = vector.broadcast %cst_139 : f32 to vector<34x32xf32>
    %616 = arith.mulf %615, %614 : vector<34x32xf32>
    %617 = math.tanh %616 : vector<34x32xf32>
    %cst_140 = arith.constant 1.000000e+00 : f32
    %618 = vector.broadcast %cst_140 : f32 to vector<34x32xf32>
    %619 = arith.addf %618, %617 : vector<34x32xf32>
    %620 = arith.mulf %609, %619 : vector<34x32xf32>
    %c512 = arith.constant 512 : index
    %c0_141 = arith.constant 0 : index
    %621 = vector.load %arg4[%c512, %c0_141] : memref<544x32xbf16, #tpu.memory_space<vmem>>, vector<32x32xbf16>
    %622 = arith.truncf %620 : vector<34x32xf32> to vector<34x32xbf16>
    %cst_142 = arith.constant dense<0.000000e+00> : vector<34x32xf32>
    %623 = tpu.matmul %622, %621, %cst_142 {dimension_numbers = #tpu.dot_dimension_numbers<[1], [0], [0], [1], [0, 0, 1, 1], [], []>} : vector<34x32xbf16>, vector<32x32xbf16>, vector<34x32xf32> -> vector<34x32xf32>
    %624 = vector.extract_strided_slice %0 {offsets = [30, 0], sizes = [1, 32], strides = [1, 1]} : vector<31x32xf32> to vector<1x32xf32>
    %625 = vector.broadcast %624 : vector<1x32xf32> to vector<34x32xf32>
    %626 = arith.addf %623, %625 : vector<34x32xf32>
    %627 = arith.addf %626, %577 : vector<34x32xf32>
    %628 = vector.extract_strided_slice %627 {offsets = [0, 0], sizes = [17, 32], strides = [1, 1]} : vector<34x32xf32> to vector<17x32xf32>
    %c0_143 = arith.constant 0 : index
    %c0_144 = arith.constant 0 : index
    %c0_145 = arith.constant 0 : index
    %629 = vector.load %arg5[%c0_143, %c0_144, %c0_145] : memref<2x17x32xf32, #tpu.memory_space<vmem>>, vector<1x17x32xf32>
    %630 = vector.shape_cast %629 : vector<1x17x32xf32> to vector<17x32xf32>
    %631 = vector.shape_cast %628 : vector<17x32xf32> to vector<1x17x32xf32>
    tpu.vector_store %arg5[%c0_143, %c0_144, %c0_145], %631 {strides = array<i32>} : memref<2x17x32xf32, #tpu.memory_space<vmem>>, vector<1x17x32xf32>,
    %632 = vector.extract_strided_slice %627 {offsets = [17, 0], sizes = [17, 32], strides = [1, 1]} : vector<34x32xf32> to vector<17x32xf32>
    %c1_146 = arith.constant 1 : index
    %c0_147 = arith.constant 0 : index
    %c0_148 = arith.constant 0 : index
    %633 = vector.load %arg5[%c1_146, %c0_147, %c0_148] : memref<2x17x32xf32, #tpu.memory_space<vmem>>, vector<1x17x32xf32>
    %634 = vector.shape_cast %633 : vector<1x17x32xf32> to vector<17x32xf32>
    %635 = vector.shape_cast %632 : vector<17x32xf32> to vector<1x17x32xf32>
    tpu.vector_store %arg5[%c1_146, %c0_147, %c0_148], %635 {strides = array<i32>} : memref<2x17x32xf32, #tpu.memory_space<vmem>>, vector<1x17x32xf32>,
    return
  }
  func.func @transform_0(%arg0: i32) -> (i32, i32, i32) {
    %c0_i32 = arith.constant 0 : i32
    %c0_i32_0 = arith.constant 0 : i32
    %c0_i32_1 = arith.constant 0 : i32
    return %arg0, %c0_i32, %c0_i32_0 : i32, i32, i32
  }
  func.func @transform_1(%arg0: i32) -> (i32, i32) {
    %c0_i32 = arith.constant 0 : i32
    %c0_i32_0 = arith.constant 0 : i32
    %c0_i32_1 = arith.constant 0 : i32
    return %c0_i32, %c0_i32_0 : i32, i32
  }
  func.func @transform_2(%arg0: i32) -> (i32, i32) {
    %c0_i32 = arith.constant 0 : i32
    %c0_i32_0 = arith.constant 0 : i32
    %c0_i32_1 = arith.constant 0 : i32
    return %c0_i32, %c0_i32_0 : i32, i32
  }
  func.func @transform_3(%arg0: i32) -> (i32, i32) {
    %c0_i32 = arith.constant 0 : i32
    %c0_i32_0 = arith.constant 0 : i32
    %c0_i32_1 = arith.constant 0 : i32
    return %c0_i32, %c0_i32_0 : i32, i32
  }
  func.func @transform_4(%arg0: i32) -> (i32, i32, i32) {
    %c0_i32 = arith.constant 0 : i32
    %c0_i32_0 = arith.constant 0 : i32
    %c0_i32_1 = arith.constant 0 : i32
    return %arg0, %c0_i32, %c0_i32_0 : i32, i32, i32
  }
}

</mosaic_0001>

<llo_original>
// kernel: tpu_custom_call.1
$region0: #{tpu_custom_call.1}
  #allocation0 [shape = 'u32[]', space=smem, size = 0x4, offset = 0x4, fixed_abs, tag = 'smem constant byte address 0x4 - core index']
  #allocation1 [shape = 'u32[144,128]{1,0:T(1,128)}', space=vmem, size = 0x12000, scoped, tag = 'internal scratch']
  %s0 = inlined_call_operand.vmem [shape: f32[2,17,32], index: 0, kind: input, shape index: {}]
  %s1 = inlined_call_operand.vmem [shape: f32[31,32], index: 1, kind: input, shape index: {}]
  %s2 = inlined_call_operand.vmem [shape: f32[8,128], index: 2, kind: input, shape index: {}]
  %s3 = inlined_call_operand.vmem [shape: bf16[544,32], index: 3, kind: input, shape index: {}]
  %s4 = inlined_call_operand.vmem [shape: f32[2,17,32], index: 4, kind: output, shape index: {}]
  %s5 = sld [smem:[#allocation0]]
  $region26: #{tpu_custom_call.1} parent=0
    _
  %s7 = ssub.s32 1, %s5
  %s8 = scalar_select 0, %s7, %s5
  // Predicated region
  $region2: #{tpu_custom_call.1} parent=0 // pred_check
    _
  $region3: #{tpu_custom_call.1} parent=0 // pred_check_branch
    %10 = sbr.rel (0) target = $region5
  $region4: #{tpu_custom_call.1} parent=0 // pred_region
    _
  $region5: #{tpu_custom_call.1} parent=0 // pred_fallthru
    _
  // Predicated region
  $region6: #{tpu_custom_call.1} parent=0 // pred_check
    _
  $region7: #{tpu_custom_call.1} parent=0 // pred_check_branch
    %12 = sbr.rel (0) target = $region9
  $region8: #{tpu_custom_call.1} parent=0 // pred_region
    _
  $region9: #{tpu_custom_call.1} parent=0 // pred_fallthru
    _
  // Predicated region
  $region10: #{tpu_custom_call.1} parent=0 // pred_check
    _
  $region11: #{tpu_custom_call.1} parent=0 // pred_check_branch
    %14 = sbr.rel (0) target = $region13
  $region12: #{tpu_custom_call.1} parent=0 // pred_region
    _
  $region13: #{tpu_custom_call.1} parent=0 // pred_fallthru
    _
  // Predicated region
  $region14: #{tpu_custom_call.1} parent=0 // pred_check
    _
  $region15: #{tpu_custom_call.1} parent=0 // pred_check_branch
    %16 = sbr.rel (0) target = $region17
  $region16: #{tpu_custom_call.1} parent=0 // pred_region
    _
  $region17: #{tpu_custom_call.1} parent=0 // pred_fallthru
    _
  %v18 = vld [vmem:[%s1] sm:$0xff]
  %v19 = vld [vmem:[%s1 + $0x8] sm:$0xff]
  %v20 = vld [vmem:[%s1 + $0x10] sm:$0xff]
  %v21 = vld [vmem:[%s1 + $0x18] sm:$0x7f]
  %v22 = vld [vmem:[%s2] sm:$0xff]
  %v23 = vld [vmem:[%s0] sm:$0xff]
  %v24 = vld [vmem:[%s0 + $0x8] sm:$0xff]
  %v25 = vld [vmem:[%s0 + $0x10] sm:$0x1]
  %s26 = scalar_lea.vmem %s0, 24
  %v27 = vld [vmem:[%s26] sm:$0xff]
  %v28 = vld [vmem:[%s26 + $0x8] sm:$0xff]
  %v29 = vld [vmem:[%s26 + $0x10] sm:$0x1]
  %vm33 = vcmask 1040384
  %v34 = vrot.slane %v27, 7
  %v35 = vrot.slane %v28, 7
  %v36 = vsel %vm33, %v34, %v35
  %v37 = vrot.slane %v29, 7
  %v38 = vsel %vm33, %v35, %v37
  %v42 = vsel %vm33, %v25, %v34
  %v43 = vlaneseq
  %v44 = vshrl.u32 %v43, 7
  %v45 = vadd.s32 %v44, 8
  %v46 = vadd.s32 %v44, 16
  %v47 = vadd.s32 %v44, 24
  %v48 = vadd.s32 %v44, 32
  %vm49 = vcmp.lt.s32.totalorder %v44, 0
  %v50 = vsub.s32 0, %v44
  %v51 = vsel %vm49, %v50, %v44
  %v52 = vmul.u32.u64.compose %v51, 4042322161
  %v53 = vextract.low.u32 %v52
  %v54 = vextract.high.u32 %v52
  %v55 = vshrl.u32 %v54, 4
  %v56 = vmul.u32 %v55, 17
  %v57 = vsub.s32 %v51, %v56
  %v58 = vsub.s32 0, %v57
  %v59 = vsel %vm49, %v58, %v57
  %vm60 = vcmp.lt.s32.totalorder %v45, 0
  %v61 = vsub.s32 0, %v45
  %v62 = vsel %vm60, %v61, %v45
  %v63 = vmul.u32.u64.compose %v62, 4042322161
  %v64 = vextract.low.u32 %v63
  %v65 = vextract.high.u32 %v63
  %v66 = vshrl.u32 %v65, 4
  %v67 = vmul.u32 %v66, 17
  %v68 = vsub.s32 %v62, %v67
  %v69 = vsub.s32 0, %v68
  %v70 = vsel %vm60, %v69, %v68
  %vm71 = vcmp.lt.s32.totalorder %v46, 0
  %v72 = vsub.s32 0, %v46
  %v73 = vsel %vm71, %v72, %v46
  %v74 = vmul.u32.u64.compose %v73, 4042322161
  %v75 = vextract.low.u32 %v74
  %v76 = vextract.high.u32 %v74
  %v77 = vshrl.u32 %v76, 4
  %v78 = vmul.u32 %v77, 17
  %v79 = vsub.s32 %v73, %v78
  %v80 = vsub.s32 0, %v79
  %v81 = vsel %vm71, %v80, %v79
  %vm82 = vcmp.lt.s32.totalorder %v47, 0
  %v83 = vsub.s32 0, %v47
  %v84 = vsel %vm82, %v83, %v47
  %v85 = vmul.u32.u64.compose %v84, 4042322161
  %v86 = vextract.low.u32 %v85
  %v87 = vextract.high.u32 %v85
  %v88 = vshrl.u32 %v87, 4
  %v89 = vmul.u32 %v88, 17
  %v90 = vsub.s32 %v84, %v89
  %v91 = vsub.s32 0, %v90
  %v92 = vsel %vm82, %v91, %v90
  %vm93 = vcmp.lt.s32.totalorder %v48, 0
  %v94 = vsub.s32 0, %v48
  %v95 = vsel %vm93, %v94, %v48
  %v96 = vmul.u32.u64.compose %v95, 4042322161
  %v97 = vextract.low.u32 %v96
  %v98 = vextract.high.u32 %v96
  %v99 = vshrl.u32 %v98, 4
  %v100 = vmul.u32 %v99, 17
  %v101 = vsub.s32 %v95, %v100
  %v102 = vsub.s32 0, %v101
  %v103 = vsel %vm93, %v102, %v101
  %vm104 = vcmp.ne.s32.totalorder %v59, 0
  %vm105 = vcmp.ne.s32.totalorder %v70, 0
  %vm106 = vcmp.ne.s32.totalorder %v81, 0
  %vm107 = vcmp.ne.s32.totalorder %v92, 0
  %vm108 = vcmp.ne.s32.totalorder %v103, 0
  %vm109 = vcmp.lt.s32.totalorder %v59, 0
  %vm110 = vcmp.lt.s32.totalorder %v70, 0
  %vm111 = vcmp.lt.s32.totalorder %v81, 0
  %vm112 = vcmp.lt.s32.totalorder %v92, 0
  %vm113 = vcmp.lt.s32.totalorder %v103, 0
  %vm114 = vmand %vm109, %vm104
  %vm115 = vmand %vm110, %vm105
  %vm116 = vmand %vm111, %vm106
  %vm117 = vmand %vm112, %vm107
  %vm118 = vmand %vm113, %vm108
  %v119 = vadd.s32 %v59, 17
  %v120 = vadd.s32 %v70, 17
  %v121 = vadd.s32 %v81, 17
  %v122 = vadd.s32 %v92, 17
  %v123 = vadd.s32 %v103, 17
  %v124 = vsel %vm114, %v119, %v59
  %v125 = vsel %vm115, %v120, %v70
  %v126 = vsel %vm116, %v121, %v81
  %v127 = vsel %vm117, %v122, %v92
  %v128 = vsel %vm118, %v123, %v103
  %vm129 = vcmp.eq.s32.totalorder %v124, 0
  %vm130 = vcmp.eq.s32.totalorder %v125, 0
  %vm131 = vcmp.eq.s32.totalorder %v126, 0
  %vm132 = vcmp.eq.s32.totalorder %v127, 0
  %vm133 = vcmp.eq.s32.totalorder %v128, 0
  %vm134 = vcmp.le.s32.totalorder %v124, 1
  %vm135 = vcmp.le.s32.totalorder %v125, 1
  %vm136 = vcmp.le.s32.totalorder %v126, 1
  %vm137 = vcmp.le.s32.totalorder %v127, 1
  %vm138 = vcmp.le.s32.totalorder %v128, 1
  %vm139 = vcmp.eq.s32.totalorder %v124, 16
  %vm140 = vcmp.eq.s32.totalorder %v125, 16
  %vm141 = vcmp.eq.s32.totalorder %v126, 16
  %vm142 = vcmp.eq.s32.totalorder %v127, 16
  %vm143 = vcmp.eq.s32.totalorder %v128, 16
  %vm144 = vmor %vm129, %vm139
  %vm145 = vmor %vm130, %vm140
  %vm146 = vmor %vm131, %vm141
  %vm147 = vmor %vm132, %vm142
  %vm148 = vmor %vm133, %vm143
  %vm149 = vcmask 261120
  %v150 = vsel %vm149, %v23, 0.0
  %151 = vadd.xlane.f32.xlu0 %v150
  %v152 = vpop.xlane.xlu0 %151
  %v153 = vsel %vm149, %v24, 0.0
  %154 = vadd.xlane.f32.xlu0 %v153
  %v155 = vpop.xlane.xlu0 %154
  %v156 = vsel %vm149, %v42, 0.0
  %157 = vadd.xlane.f32.xlu0 %v156
  %v158 = vpop.xlane.xlu0 %157
  %v159 = vsel %vm149, %v36, 0.0
  %160 = vadd.xlane.f32.xlu0 %v159
  %v161 = vpop.xlane.xlu0 %160
  %vm162 = vcmask 254976
  %v163 = vsel %vm162, %v38, 0.0
  %164 = vadd.xlane.f32.xlu0 %v163
  %v165 = vpop.xlane.xlu0 %164
  %v166 = vrcp.pop 32.0
  %v167 = vmul.f32 %v152, %v166
  %v168 = vmul.f32 %v155, %v166
  %v169 = vmul.f32 %v158, %v166
  %v170 = vmul.f32 %v161, %v166
  %v171 = vmul.f32 %v165, %v166
  %v172 = vmul.f32 %v23, %v23
  %v173 = vmul.f32 %v24, %v24
  %v174 = vmul.f32 %v42, %v42
  %v175 = vmul.f32 %v36, %v36
  %v176 = vmul.f32 %v38, %v38
  %v177 = vsel %vm149, %v172, 0.0
  %178 = vadd.xlane.f32.xlu0 %v177
  %v179 = vpop.xlane.xlu0 %178
  %v180 = vsel %vm149, %v173, 0.0
  %181 = vadd.xlane.f32.xlu0 %v180
  %v182 = vpop.xlane.xlu0 %181
  %v183 = vsel %vm149, %v174, 0.0
  %184 = vadd.xlane.f32.xlu0 %v183
  %v185 = vpop.xlane.xlu0 %184
  %v186 = vsel %vm149, %v175, 0.0
  %187 = vadd.xlane.f32.xlu0 %v186
  %v188 = vpop.xlane.xlu0 %187
  %v189 = vsel %vm162, %v176, 0.0
  %190 = vadd.xlane.f32.xlu0 %v189
  %v191 = vpop.xlane.xlu0 %190
  %v192 = vmul.f32 %v179, %v166
  %v193 = vmul.f32 %v182, %v166
  %v194 = vmul.f32 %v185, %v166
  %v195 = vmul.f32 %v188, %v166
  %v196 = vmul.f32 %v191, %v166
  %v197 = vsub.f32 %v23, %v167
  %v198 = vsub.f32 %v24, %v168
  %v199 = vsub.f32 %v42, %v169
  %v200 = vsub.f32 %v36, %v170
  %v201 = vsub.f32 %v38, %v171
  %v202 = vmul.f32 %v167, %v167
  %v203 = vmul.f32 %v168, %v168
  %v204 = vmul.f32 %v169, %v169
  %v205 = vmul.f32 %v170, %v170
  %v206 = vmul.f32 %v171, %v171
  %v207 = vsub.f32 %v192, %v202
  %v208 = vsub.f32 %v193, %v203
  %v209 = vsub.f32 %v194, %v204
  %v210 = vsub.f32 %v195, %v205
  %v211 = vsub.f32 %v196, %v206
  %v212 = vadd.f32 %v207, 1e-05
  %v213 = vadd.f32 %v208, 1e-05
  %v214 = vadd.f32 %v209, 1e-05
  %v215 = vadd.f32 %v210, 1e-05
  %v216 = vadd.f32 %v211, 1e-05
  %v217 = vrsqrt.pop %v212
  %v218 = vrsqrt.pop %v213
  %v219 = vrsqrt.pop %v214
  %v220 = vrsqrt.pop %v215
  %v221 = vrsqrt.pop %v216
  %v222 = vmul.f32 %v197, %v217
  %v223 = vmul.f32 %v198, %v218
  %v224 = vmul.f32 %v199, %v219
  %v225 = vmul.f32 %v200, %v220
  %v226 = vmul.f32 %v201, %v221
  %v227 = vlaneseq
  %v228 = vshrl.u32 %v227, 7
  %v229 = vsub.s32 0, %v228
  %v230 = vrot.slane %v18, %v229
  %v231 = vmul.f32 %v222, %v230
  %v232 = vmul.f32 %v223, %v230
  %v233 = vmul.f32 %v224, %v230
  %v234 = vmul.f32 %v225, %v230
  %v235 = vmul.f32 %v226, %v230
  %v236 = vlaneseq
  %v237 = vshrl.u32 %v236, 7
  %v238 = vsub.s32 1, %v237
  %v239 = vrot.slane %v18, %v238
  %v240 = vadd.f32 %v231, %v239
  %v241 = vadd.f32 %v232, %v239
  %v242 = vadd.f32 %v233, %v239
  %v243 = vadd.f32 %v234, %v239
  %v244 = vadd.f32 %v235, %v239
  %vm248 = vcmask 1041408
  %v249 = vrot.slane %v240, 6
  %v250 = vrot.slane %v241, 6
  %v251 = vsel %vm248, %v249, %v250
  %v252 = vrot.slane %v242, 6
  %v253 = vsel %vm248, %v250, %v252
  %vm257 = vcmask 1042432
  %v258 = vsel %vm257, 0.0, %v249
  %v259 = vsel %vm257, %v253, 0.0
  %v260 = vmul.f32 %v258, %v20
  %vm261 = vcmask 260096
  %v262 = vsel %vm261, %v260, 0.0
  %v263 = vrot.slane %v262, 4
  %v264 = vadd.f32 %v262, %v263
  %v265 = vrot.slane %v264, 2
  %v266 = vadd.f32 %v264, %v265
  %v267 = vrot.slane %v266, 1
  %v268 = vadd.f32 %v266, %v267
  %v270 = vrot.slane %v20, 4
  %v272 = vmul.f32 %v258, %v270
  %v273 = vmul.f32 %v251, %v270
  %vm276 = vcmask 1043456
  %v277 = vrot.slane %v272, 4
  %v278 = vrot.slane %v273, 4
  %v279 = vsel %vm276, %v277, %v278
  %v281 = vsel %vm261, %v279, 0.0
  %v282 = vrot.slane %v281, 4
  %v283 = vadd.f32 %v281, %v282
  %v284 = vrot.slane %v283, 2
  %v285 = vadd.f32 %v283, %v284
  %v286 = vrot.slane %v285, 1
  %v287 = vadd.f32 %v285, %v286
  %v288 = vmul.f32 %v251, %v20
  %v289 = vsel %vm261, %v288, 0.0
  %v290 = vrot.slane %v289, 4
  %v291 = vadd.f32 %v289, %v290
  %v292 = vrot.slane %v291, 2
  %v293 = vadd.f32 %v291, %v292
  %v294 = vrot.slane %v293, 1
  %v295 = vadd.f32 %v293, %v294
  %v296 = vmul.f32 %v259, %v270
  %v298 = vrot.slane %v296, 4
  %v299 = vsel %vm276, %v278, %v298
  %v301 = vsel %vm261, %v299, 0.0
  %v302 = vrot.slane %v301, 4
  %v303 = vadd.f32 %v301, %v302
  %v304 = vrot.slane %v303, 2
  %v305 = vadd.f32 %v303, %v304
  %v306 = vrot.slane %v305, 1
  %v307 = vadd.f32 %v305, %v306
  %v310 = vrot.slane %v242, 7
  %v311 = vrot.slane %v243, 7
  %v312 = vsel %vm33, %v310, %v311
  %v313 = vrot.slane %v244, 7
  %v314 = vsel %vm33, %v311, %v313
  %v318 = vsel %vm257, 0.0, %v310
  %v319 = vsel %vm257, %v314, 0.0
  %v320 = vmul.f32 %v318, %v20
  %v321 = vsel %vm261, %v320, 0.0
  %v322 = vrot.slane %v321, 4
  %v323 = vadd.f32 %v321, %v322
  %v324 = vrot.slane %v323, 2
  %v325 = vadd.f32 %v323, %v324
  %v326 = vrot.slane %v325, 1
  %v327 = vadd.f32 %v325, %v326
  %v328 = vmul.f32 %v318, %v270
  %v329 = vmul.f32 %v312, %v270
  %v332 = vrot.slane %v328, 4
  %v333 = vrot.slane %v329, 4
  %v334 = vsel %vm276, %v332, %v333
  %v336 = vsel %vm261, %v334, 0.0
  %v337 = vrot.slane %v336, 4
  %v338 = vadd.f32 %v336, %v337
  %v339 = vrot.slane %v338, 2
  %v340 = vadd.f32 %v338, %v339
  %v341 = vrot.slane %v340, 1
  %v342 = vadd.f32 %v340, %v341
  %v343 = vmul.f32 %v312, %v20
  %v344 = vsel %vm261, %v343, 0.0
  %v345 = vrot.slane %v344, 4
  %v346 = vadd.f32 %v344, %v345
  %v347 = vrot.slane %v346, 2
  %v348 = vadd.f32 %v346, %v347
  %v349 = vrot.slane %v348, 1
  %v350 = vadd.f32 %v348, %v349
  %v351 = vmul.f32 %v319, %v270
  %v353 = vrot.slane %v351, 4
  %v354 = vsel %vm276, %v333, %v353
  %v356 = vsel %vm261, %v354, 0.0
  %v357 = vrot.slane %v356, 4
  %v358 = vadd.f32 %v356, %v357
  %v359 = vrot.slane %v358, 2
  %v360 = vadd.f32 %v358, %v359
  %v361 = vrot.slane %v360, 1
  %v362 = vadd.f32 %v360, %v361
  %v363 = vsel %vm33, %v268, %v287
  %v364 = vsel %vm248, %v363, %v295
  %v365 = vsel %vm257, %v364, %v307
  %v366 = vsel %vm276, %v365, %v327
  %vm367 = vcmask 1044480
  %v368 = vsel %vm367, %v366, %v342
  %vm369 = vcmask 1045504
  %v370 = vsel %vm369, %v368, %v350
  %vm371 = vcmask 1046528
  %v372 = vsel %vm371, %v370, %v362
  %v373 = vlaneseq
  %v374 = vshrl.u32 %v373, 7
  %v375 = vsub.s32 7, %v374
  %v376 = vrot.slane %v20, %v375
  %v377 = vadd.f32 %v372, %v376
  %v378 = vld [vmem:[%s3 + $0x40] sm:$0xf]
  %v379 = vld [vmem:[%s3 + $0x44] sm:$0xf]
  %v380 = vld [vmem:[%s3 + $0x48] sm:$0xf]
  %v381 = vld [vmem:[%s3 + $0x4c] sm:$0xf]
  %v382 = vpack.c.bf16 %v377, %v377
  %v383 = vlaneseq
  %v384 = vshrl.u32 %v383, 7
  %v385 = vsub.s32 0, %v384
  %v386 = vrot.slane %v21, %v385
  %v391 = vunpack.c.l.b16 %v378
  %v392 = vunpack.c.l.b16 %v379
  %v393 = vunpack.c.l.b16 %v380
  %v394 = vunpack.c.l.b16 %v381
  %v395 = vpack.c.b16 %v392, %v391
  %v396 = vpack.c.b16 %v394, %v393
  %v400 = vsel %vm149, %v382, 0
  %402 = vmatprep.subr.bf16.mxu0 0
  %403 = vmatpush1.bf16.msra.mxu0 %v395
  %404 = vmatprep.subr.bf16.mxu0 0
  %405 = vmatpush1.bf16.msra.mxu0 %v396
  %406 = vmatprep.subr.bf16.mxu0 0
  %407 = vmatpush1.bf16.msra.mxu0 0
  %408 = vmatprep.subr.bf16.mxu0 0
  %409 = vmatpush1.bf16.msra.mxu0 0
  %410 = vmatprep.subr.bf16.mxu0 0
  %411 = vmatpush1.bf16.msra.mxu0 0
  %412 = vmatprep.subr.bf16.mxu0 0
  %413 = vmatpush1.bf16.msra.mxu0 0
  %414 = vmatprep.subr.bf16.mxu0 0
  %415 = vmatpush1.bf16.msra.mxu0 0
  %416 = vmatprep.subr.bf16.mxu0 0
  %417 = vmatpush1.bf16.msra.mxu0 0
  %418 = vmatprep.subr.bf16.mxu0 0
  %419 = vmatpush1.bf16.msra.mxu0 0
  %420 = vmatprep.subr.bf16.mxu0 0
  %421 = vmatpush1.bf16.msra.mxu0 0
  %422 = vmatprep.subr.bf16.mxu0 0
  %423 = vmatpush1.bf16.msra.mxu0 0
  %424 = vmatprep.subr.bf16.mxu0 0
  %425 = vmatpush1.bf16.msra.mxu0 0
  %426 = vmatprep.subr.bf16.mxu0 0
  %427 = vmatpush1.bf16.msra.mxu0 0
  %428 = vmatprep.subr.bf16.mxu0 0
  %429 = vmatpush1.bf16.msra.mxu0 0
  %430 = vmatprep.subr.bf16.mxu0 0
  %431 = vmatpush1.bf16.msra.mxu0 0
  %432 = vmatprep.subr.bf16.mxu0 0
  %433 = vmatpush1.bf16.msra.mxu0 0
  %434 = vmatprep.mubr.bf16.mxu0 0
  %435 = vmatmul.mubr.bf16.gmra.mrb[0].mxu0 %v400
  %v436 = vpop.f32.mrb[0].mxu0
  %v437 = vadd.f32 %v386, %v436
  %v438 = vpop.f32.mrb[0].mxu0
  %v439 = vpop.f32.mrb[0].mxu0
  %v440 = vpop.f32.mrb[0].mxu0
  %441 = vdwg.mxu0
  %v442 = vsel %vm149, %v437, 0.0
  %443 = vadd.xlane.f32.xlu0 %v442
  %v444 = vpop.xlane.xlu0 %443
  %v445 = vmul.f32 %v444, %v166
  %v446 = vmul.f32 %v437, %v437
  %v447 = vsel %vm149, %v446, 0.0
  %448 = vadd.xlane.f32.xlu0 %v447
  %v449 = vpop.xlane.xlu0 %448
  %v450 = vmul.f32 %v449, %v166
  %v451 = vsub.f32 %v437, %v445
  %v452 = vmul.f32 %v445, %v445
  %v453 = vsub.f32 %v450, %v452
  %v454 = vadd.f32 %v453, 1e-05
  %v455 = vrsqrt.pop %v454
  %v456 = vmul.f32 %v451, %v455
  %v457 = vlaneseq
  %v458 = vshrl.u32 %v457, 7
  %v459 = vsub.s32 6, %v458
  %v460 = vrot.slane %v19, %v459
  %v461 = vmul.f32 %v456, %v460
  %v462 = vlaneseq
  %v463 = vshrl.u32 %v462, 7
  %v464 = vsub.s32 7, %v463
  %v465 = vrot.slane %v19, %v464
  %v466 = vadd.f32 %v461, %v465
  %v468 = vrot.slane %v466, 7
  %v470 = vrot.slane %v242, 4
  %v472 = vrot.slane %v466, 6
  %v474 = vsel %vm33, %v240, %v468
  %v475 = vsel %vm367, %v474, %v470
  %v476 = vsel %vm369, %v475, %v472
  %v477 = vld [vmem:[%s3] sm:$0xf]
  %v478 = vld [vmem:[%s3 + $0x4] sm:$0xf]
  %v479 = vld [vmem:[%s3 + $0x8] sm:$0xf]
  %v480 = vld [vmem:[%s3 + $0xc] sm:$0xf]
  %v481 = vpack.c.bf16 %v241, %v240
  %v482 = vpack.c.bf16 %v243, %v242
  %v483 = vpack.c.bf16 %v244, %v244
  %v488 = vunpack.c.l.b16 %v477
  %v489 = vunpack.c.l.b16 %v478
  %v490 = vunpack.c.l.b16 %v479
  %v491 = vunpack.c.l.b16 %v480
  %v492 = vpack.c.b16 %v489, %v488
  %v493 = vpack.c.b16 %v491, %v490
  %v497 = vsel %vm149, %v481, 0
  %v500 = vsel %vm149, %v482, 0
  %v503 = vsel %vm149, %v483, 0
  %505 = vmatprep.subr.bf16.mxu0 0
  %506 = vmatpush1.bf16.msra.mxu0 %v492
  %507 = vmatprep.subr.bf16.mxu0 0
  %508 = vmatpush1.bf16.msra.mxu0 %v493
  %509 = vmatprep.subr.bf16.mxu0 0
  %510 = vmatpush1.bf16.msra.mxu0 0
  %511 = vmatprep.subr.bf16.mxu0 0
  %512 = vmatpush1.bf16.msra.mxu0 0
  %513 = vmatprep.subr.bf16.mxu0 0
  %514 = vmatpush1.bf16.msra.mxu0 0
  %515 = vmatprep.subr.bf16.mxu0 0
  %516 = vmatpush1.bf16.msra.mxu0 0
  %517 = vmatprep.subr.bf16.mxu0 0
  %518 = vmatpush1.bf16.msra.mxu0 0
  %519 = vmatprep.subr.bf16.mxu0 0
  %520 = vmatpush1.bf16.msra.mxu0 0
  %521 = vmatprep.subr.bf16.mxu0 0
  %522 = vmatpush1.bf16.msra.mxu0 0
  %523 = vmatprep.subr.bf16.mxu0 0
  %524 = vmatpush1.bf16.msra.mxu0 0
  %525 = vmatprep.subr.bf16.mxu0 0
  %526 = vmatpush1.bf16.msra.mxu0 0
  %527 = vmatprep.subr.bf16.mxu0 0
  %528 = vmatpush1.bf16.msra.mxu0 0
  %529 = vmatprep.subr.bf16.mxu0 0
  %530 = vmatpush1.bf16.msra.mxu0 0
  %531 = vmatprep.subr.bf16.mxu0 0
  %532 = vmatpush1.bf16.msra.mxu0 0
  %533 = vmatprep.subr.bf16.mxu0 0
  %534 = vmatpush1.bf16.msra.mxu0 0
  %535 = vmatprep.subr.bf16.mxu0 0
  %536 = vmatpush1.bf16.msra.mxu0 0
  %537 = vmatprep.mubr.bf16.mxu0 0
  %538 = vmatmul.mubr.bf16.gmra.mrb[0].mxu0 %v497
  %v539 = vpop.f32.mrb[0].mxu0
  %v540 = vadd.f32 0.0, %v539
  %v541 = vpop.f32.mrb[0].mxu0
  %v542 = vpop.f32.mrb[0].mxu0
  %v543 = vadd.f32 0.0, %v542
  %v544 = vpop.f32.mrb[0].mxu0
  %545 = vmatprep.mubr.bf16.mxu0 0
  %546 = vmatmul.mubr.bf16.gmra.mrb[0].mxu0 %v500
  %v547 = vpop.f32.mrb[0].mxu0
  %v548 = vadd.f32 0.0, %v547
  %v549 = vpop.f32.mrb[0].mxu0
  %v550 = vpop.f32.mrb[0].mxu0
  %v551 = vadd.f32 0.0, %v550
  %v552 = vpop.f32.mrb[0].mxu0
  %553 = vmatprep.mubr.bf16.mxu0 0
  %554 = vmatmul.mubr.bf16.gmra.mrb[0].mxu0 %v503
  %v555 = vpop.f32.mrb[0].mxu0
  %v556 = vadd.f32 0.0, %v555
  %v557 = vpop.f32.mrb[0].mxu0
  %v558 = vpop.f32.mrb[0].mxu0
  %v559 = vpop.f32.mrb[0].mxu0
  %560 = vdwg.mxu0
  %v561 = vsel %vm149, %v540, 0.0
  %562 = vadd.xlane.f32.xlu0 %v561
  %v563 = vpop.xlane.xlu0 %562
  %v564 = vsel %vm149, %v543, 0.0
  %565 = vadd.xlane.f32.xlu0 %v564
  %v566 = vpop.xlane.xlu0 %565
  %v567 = vsel %vm149, %v548, 0.0
  %568 = vadd.xlane.f32.xlu0 %v567
  %v569 = vpop.xlane.xlu0 %568
  %v570 = vsel %vm149, %v551, 0.0
  %571 = vadd.xlane.f32.xlu0 %v570
  %v572 = vpop.xlane.xlu0 %571
  %v573 = vsel %vm162, %v556, 0.0
  %574 = vadd.xlane.f32.xlu0 %v573
  %v575 = vpop.xlane.xlu0 %574
  %v576 = vmul.f32 %v563, %v166
  %v577 = vmul.f32 %v566, %v166
  %v578 = vmul.f32 %v569, %v166
  %v579 = vmul.f32 %v572, %v166
  %v580 = vmul.f32 %v575, %v166
  %v581 = vmul.f32 %v540, %v540
  %v582 = vmul.f32 %v543, %v543
  %v583 = vmul.f32 %v548, %v548
  %v584 = vmul.f32 %v551, %v551
  %v585 = vmul.f32 %v556, %v556
  %v586 = vsel %vm149, %v581, 0.0
  %587 = vadd.xlane.f32.xlu0 %v586
  %v588 = vpop.xlane.xlu0 %587
  %v589 = vsel %vm149, %v582, 0.0
  %590 = vadd.xlane.f32.xlu0 %v589
  %v591 = vpop.xlane.xlu0 %590
  %v592 = vsel %vm149, %v583, 0.0
  %593 = vadd.xlane.f32.xlu0 %v592
  %v594 = vpop.xlane.xlu0 %593
  %v595 = vsel %vm149, %v584, 0.0
  %596 = vadd.xlane.f32.xlu0 %v595
  %v597 = vpop.xlane.xlu0 %596
  %v598 = vsel %vm162, %v585, 0.0
  %599 = vadd.xlane.f32.xlu0 %v598
  %v600 = vpop.xlane.xlu0 %599
  %v601 = vmul.f32 %v588, %v166
  %v602 = vmul.f32 %v591, %v166
  %v603 = vmul.f32 %v594, %v166
  %v604 = vmul.f32 %v597, %v166
  %v605 = vmul.f32 %v600, %v166
  %v606 = vsub.f32 %v540, %v576
  %v607 = vsub.f32 %v543, %v577
  %v608 = vsub.f32 %v548, %v578
  %v609 = vsub.f32 %v551, %v579
  %v610 = vsub.f32 %v556, %v580
  %v611 = vmul.f32 %v576, %v576
  %v612 = vmul.f32 %v577, %v577
  %v613 = vmul.f32 %v578, %v578
  %v614 = vmul.f32 %v579, %v579
  %v615 = vmul.f32 %v580, %v580
  %v616 = vsub.f32 %v601, %v611
  %v617 = vsub.f32 %v602, %v612
  %v618 = vsub.f32 %v603, %v613
  %v619 = vsub.f32 %v604, %v614
  %v620 = vsub.f32 %v605, %v615
  %v621 = vadd.f32 %v616, 1e-05
  %v622 = vadd.f32 %v617, 1e-05
  %v623 = vadd.f32 %v618, 1e-05
  %v624 = vadd.f32 %v619, 1e-05
  %v625 = vadd.f32 %v620, 1e-05
  %v626 = vrsqrt.pop %v621
  %v627 = vrsqrt.pop %v622
  %v628 = vrsqrt.pop %v623
  %v629 = vrsqrt.pop %v624
  %v630 = vrsqrt.pop %v625
  %v631 = vmul.f32 %v606, %v626
  %v632 = vmul.f32 %v607, %v627
  %v633 = vmul.f32 %v608, %v628
  %v634 = vmul.f32 %v609, %v629
  %v635 = vmul.f32 %v610, %v630
  %v636 = vlaneseq
  %v637 = vshrl.u32 %v636, 7
  %v638 = vsub.s32 0, %v637
  %v639 = vrot.slane %v19, %v638
  %v640 = vmul.f32 %v631, %v639
  %v641 = vmul.f32 %v632, %v639
  %v642 = vmul.f32 %v633, %v639
  %v643 = vmul.f32 %v634, %v639
  %v644 = vmul.f32 %v635, %v639
  %v645 = vlaneseq
  %v646 = vshrl.u32 %v645, 7
  %v647 = vsub.s32 1, %v646
  %v648 = vrot.slane %v19, %v647
  %v649 = vadd.f32 %v640, %v648
  %v650 = vadd.f32 %v641, %v648
  %v651 = vadd.f32 %v642, %v648
  %v652 = vadd.f32 %v643, %v648
  %v653 = vadd.f32 %v644, %v648
  %v654 = vld [vmem:[%s3 + $0x10] sm:$0xf]
  %v655 = vld [vmem:[%s3 + $0x14] sm:$0xf]
  %v656 = vld [vmem:[%s3 + $0x18] sm:$0xf]
  %v657 = vld [vmem:[%s3 + $0x1c] sm:$0xf]
  %v658 = vpack.c.bf16 %v472, %v476
  %v663 = vunpack.c.l.b16 %v654
  %v664 = vunpack.c.l.b16 %v655
  %v665 = vunpack.c.l.b16 %v656
  %v666 = vunpack.c.l.b16 %v657
  %v667 = vpack.c.b16 %v664, %v663
  %v668 = vpack.c.b16 %v666, %v665
  %v672 = vsel %vm149, %v658, 0
  %674 = vmatprep.subr.bf16.mxu0 0
  %675 = vmatpush1.bf16.msra.mxu0 %v667
  %676 = vmatprep.subr.bf16.mxu0 0
  %677 = vmatpush1.bf16.msra.mxu0 %v668
  %678 = vmatprep.subr.bf16.mxu0 0
  %679 = vmatpush1.bf16.msra.mxu0 0
  %680 = vmatprep.subr.bf16.mxu0 0
  %681 = vmatpush1.bf16.msra.mxu0 0
  %682 = vmatprep.subr.bf16.mxu0 0
  %683 = vmatpush1.bf16.msra.mxu0 0
  %684 = vmatprep.subr.bf16.mxu0 0
  %685 = vmatpush1.bf16.msra.mxu0 0
  %686 = vmatprep.subr.bf16.mxu0 0
  %687 = vmatpush1.bf16.msra.mxu0 0
  %688 = vmatprep.subr.bf16.mxu0 0
  %689 = vmatpush1.bf16.msra.mxu0 0
  %690 = vmatprep.subr.bf16.mxu0 0
  %691 = vmatpush1.bf16.msra.mxu0 0
  %692 = vmatprep.subr.bf16.mxu0 0
  %693 = vmatpush1.bf16.msra.mxu0 0
  %694 = vmatprep.subr.bf16.mxu0 0
  %695 = vmatpush1.bf16.msra.mxu0 0
  %696 = vmatprep.subr.bf16.mxu0 0
  %697 = vmatpush1.bf16.msra.mxu0 0
  %698 = vmatprep.subr.bf16.mxu0 0
  %699 = vmatpush1.bf16.msra.mxu0 0
  %700 = vmatprep.subr.bf16.mxu0 0
  %701 = vmatpush1.bf16.msra.mxu0 0
  %702 = vmatprep.subr.bf16.mxu0 0
  %703 = vmatpush1.bf16.msra.mxu0 0
  %704 = vmatprep.subr.bf16.mxu0 0
  %705 = vmatpush1.bf16.msra.mxu0 0
  %706 = vmatprep.mubr.bf16.mxu0 0
  %707 = vmatmul.mubr.bf16.gmra.mrb[0].mxu0 %v672
  %v708 = vpop.f32.mrb[0].mxu0
  %v709 = vadd.f32 0.0, %v708
  %v710 = vpop.f32.mrb[0].mxu0
  %v711 = vpop.f32.mrb[0].mxu0
  %v712 = vadd.f32 0.0, %v711
  %v713 = vpop.f32.mrb[0].mxu0
  %714 = vdwg.mxu0
  %v715 = vsel %vm149, %v709, 0.0
  %716 = vadd.xlane.f32.xlu0 %v715
  %v717 = vpop.xlane.xlu0 %716
  %v718 = vsel %vm162, %v712, 0.0
  %719 = vadd.xlane.f32.xlu0 %v718
  %v720 = vpop.xlane.xlu0 %719
  %v721 = vmul.f32 %v717, %v166
  %v722 = vmul.f32 %v720, %v166
  %v723 = vmul.f32 %v709, %v709
  %v724 = vmul.f32 %v712, %v712
  %v725 = vsel %vm149, %v723, 0.0
  %726 = vadd.xlane.f32.xlu0 %v725
  %v727 = vpop.xlane.xlu0 %726
  %v728 = vsel %vm162, %v724, 0.0
  %729 = vadd.xlane.f32.xlu0 %v728
  %v730 = vpop.xlane.xlu0 %729
  %v731 = vmul.f32 %v727, %v166
  %v732 = vmul.f32 %v730, %v166
  %v733 = vsub.f32 %v709, %v721
  %v734 = vsub.f32 %v712, %v722
  %v735 = vmul.f32 %v721, %v721
  %v736 = vmul.f32 %v722, %v722
  %v737 = vsub.f32 %v731, %v735
  %v738 = vsub.f32 %v732, %v736
  %v739 = vadd.f32 %v737, 1e-05
  %v740 = vadd.f32 %v738, 1e-05
  %v741 = vrsqrt.pop %v739
  %v742 = vrsqrt.pop %v740
  %v743 = vmul.f32 %v733, %v741
  %v744 = vmul.f32 %v734, %v742
  %v745 = vlaneseq
  %v746 = vshrl.u32 %v745, 7
  %v747 = vsub.s32 2, %v746
  %v748 = vrot.slane %v19, %v747
  %v749 = vmul.f32 %v743, %v748
  %v750 = vmul.f32 %v744, %v748
  %v751 = vlaneseq
  %v752 = vshrl.u32 %v751, 7
  %v753 = vsub.s32 3, %v752
  %v754 = vrot.slane %v19, %v753
  %v755 = vadd.f32 %v749, %v754
  %v756 = vadd.f32 %v750, %v754
  %v757 = vld [vmem:[%s3 + $0x20] sm:$0xf]
  %v758 = vld [vmem:[%s3 + $0x24] sm:$0xf]
  %v759 = vld [vmem:[%s3 + $0x28] sm:$0xf]
  %v760 = vld [vmem:[%s3 + $0x2c] sm:$0xf]
  %v765 = vunpack.c.l.b16 %v757
  %v766 = vunpack.c.l.b16 %v758
  %v767 = vunpack.c.l.b16 %v759
  %v768 = vunpack.c.l.b16 %v760
  %v769 = vpack.c.b16 %v766, %v765
  %v770 = vpack.c.b16 %v768, %v767
  %773 = vmatprep.subr.bf16.mxu0 0
  %774 = vmatpush1.bf16.msra.mxu0 %v769
  %775 = vmatprep.subr.bf16.mxu0 0
  %776 = vmatpush1.bf16.msra.mxu0 %v770
  %777 = vmatprep.subr.bf16.mxu0 0
  %778 = vmatpush1.bf16.msra.mxu0 0
  %779 = vmatprep.subr.bf16.mxu0 0
  %780 = vmatpush1.bf16.msra.mxu0 0
  %781 = vmatprep.subr.bf16.mxu0 0
  %782 = vmatpush1.bf16.msra.mxu0 0
  %783 = vmatprep.subr.bf16.mxu0 0
  %784 = vmatpush1.bf16.msra.mxu0 0
  %785 = vmatprep.subr.bf16.mxu0 0
  %786 = vmatpush1.bf16.msra.mxu0 0
  %787 = vmatprep.subr.bf16.mxu0 0
  %788 = vmatpush1.bf16.msra.mxu0 0
  %789 = vmatprep.subr.bf16.mxu0 0
  %790 = vmatpush1.bf16.msra.mxu0 0
  %791 = vmatprep.subr.bf16.mxu0 0
  %792 = vmatpush1.bf16.msra.mxu0 0
  %793 = vmatprep.subr.bf16.mxu0 0
  %794 = vmatpush1.bf16.msra.mxu0 0
  %795 = vmatprep.subr.bf16.mxu0 0
  %796 = vmatpush1.bf16.msra.mxu0 0
  %797 = vmatprep.subr.bf16.mxu0 0
  %798 = vmatpush1.bf16.msra.mxu0 0
  %799 = vmatprep.subr.bf16.mxu0 0
  %800 = vmatpush1.bf16.msra.mxu0 0
  %801 = vmatprep.subr.bf16.mxu0 0
  %802 = vmatpush1.bf16.msra.mxu0 0
  %803 = vmatprep.subr.bf16.mxu0 0
  %804 = vmatpush1.bf16.msra.mxu0 0
  %805 = vmatprep.mubr.bf16.mxu0 0
  %806 = vmatmul.mubr.bf16.gmra.mrb[0].mxu0 %v672
  %v807 = vpop.f32.mrb[0].mxu0
  %v808 = vadd.f32 0.0, %v807
  %v809 = vpop.f32.mrb[0].mxu0
  %v810 = vpop.f32.mrb[0].mxu0
  %v811 = vadd.f32 0.0, %v810
  %v812 = vpop.f32.mrb[0].mxu0
  %813 = vdwg.mxu0
  %v814 = vsel %vm149, %v808, 0.0
  %815 = vadd.xlane.f32.xlu0 %v814
  %v816 = vpop.xlane.xlu0 %815
  %v817 = vsel %vm162, %v811, 0.0
  %818 = vadd.xlane.f32.xlu0 %v817
  %v819 = vpop.xlane.xlu0 %818
  %v820 = vmul.f32 %v816, %v166
  %v821 = vmul.f32 %v819, %v166
  %v822 = vmul.f32 %v808, %v808
  %v823 = vmul.f32 %v811, %v811
  %v824 = vsel %vm149, %v822, 0.0
  %825 = vadd.xlane.f32.xlu0 %v824
  %v826 = vpop.xlane.xlu0 %825
  %v827 = vsel %vm162, %v823, 0.0
  %828 = vadd.xlane.f32.xlu0 %v827
  %v829 = vpop.xlane.xlu0 %828
  %v830 = vmul.f32 %v826, %v166
  %v831 = vmul.f32 %v829, %v166
  %v832 = vsub.f32 %v808, %v820
  %v833 = vsub.f32 %v811, %v821
  %v834 = vmul.f32 %v820, %v820
  %v835 = vmul.f32 %v821, %v821
  %v836 = vsub.f32 %v830, %v834
  %v837 = vsub.f32 %v831, %v835
  %v838 = vadd.f32 %v836, 1e-05
  %v839 = vadd.f32 %v837, 1e-05
  %v840 = vrsqrt.pop %v838
  %v841 = vrsqrt.pop %v839
  %v842 = vmul.f32 %v832, %v840
  %v843 = vmul.f32 %v833, %v841
  %v844 = vlaneseq
  %v845 = vshrl.u32 %v844, 7
  %v846 = vsub.s32 4, %v845
  %v847 = vrot.slane %v19, %v846
  %v848 = vmul.f32 %v842, %v847
  %v849 = vmul.f32 %v843, %v847
  %v850 = vlaneseq
  %v851 = vshrl.u32 %v850, 7
  %v852 = vsub.s32 5, %v851
  %v853 = vrot.slane %v19, %v852
  %v854 = vadd.f32 %v848, %v853
  %v855 = vadd.f32 %v849, %v853
  %v856 = vmul.f32 %v649, 0.35355338
  %v857 = vmul.f32 %v650, 0.35355338
  %v858 = vmul.f32 %v651, 0.35355338
  %v859 = vmul.f32 %v652, 0.35355338
  %v860 = vmul.f32 %v653, 0.35355338
  %v861 = vpack.c.bf16 %v857, %v856
  %v862 = vpack.c.bf16 %v859, %v858
  %v863 = vpack.c.bf16 %v860, %v860
  %v864 = vpack.c.bf16 %v756, %v755
  %v865 = vpack.c.bf16 %v855, %v854
  %v866 = vlaneseq
  %v867 = vand.u32 %v866, 127
  %vm868 = vcmp.ge.s32.totalorder %v867, 0
  %vm869 = vcmp.lt.s32.totalorder %v867, 8
  %vm870 = vmand %vm868, %vm869
  %v871 = vsel %vm870, 1, 0
  %v872 = vcvt.s32.f32 %v871
  %v873 = vpack.c.bf16 %v872, %v872
  %vm874 = vcmp.ge.s32.totalorder %v867, 8
  %vm875 = vcmp.lt.s32.totalorder %v867, 16
  %vm876 = vmand %vm874, %vm875
  %v877 = vsel %vm876, 1, 0
  %v878 = vcvt.s32.f32 %v877
  %v879 = vpack.c.bf16 %v878, %v878
  %vm880 = vcmp.ge.s32.totalorder %v867, 16
  %vm881 = vcmp.lt.s32.totalorder %v867, 24
  %vm882 = vmand %vm880, %vm881
  %v883 = vsel %vm882, 1, 0
  %v884 = vcvt.s32.f32 %v883
  %v885 = vpack.c.bf16 %v884, %v884
  %vm886 = vcmp.ge.s32.totalorder %v867, 24
  %vm887 = vcmp.lt.s32.totalorder %v867, 32
  %vm888 = vmand %vm886, %vm887
  %v889 = vsel %vm888, 1, 0
  %v890 = vcvt.s32.f32 %v889
  %v891 = vpack.c.bf16 %v890, %v890
  %v892 = vmul.bf16 %v861, %v873
  %v893 = vmul.bf16 %v862, %v873
  %v894 = vmul.bf16 %v865, %v873
  %v896 = vsel %vm149, %v892, 0
  %v899 = vsel %vm149, %v893, 0
  %v902 = vsel %vm149, %v864, 0
  %904 = vmatprep.subr.bf16.mxu0 0
  %905 = vmatpush1.bf16.xpose.msra.mxu0 %v902
  %906 = vmatprep.subr.bf16.mxu0 0
  %907 = vmatpush1.bf16.xpose.msra.mxu0 0
  %908 = vmatprep.subr.bf16.mxu0 0
  %909 = vmatpush1.bf16.xpose.msra.mxu0 0
  %910 = vmatprep.subr.bf16.mxu0 0
  %911 = vmatpush1.bf16.xpose.msra.mxu0 0
  %912 = vmatprep.subr.bf16.mxu0 0
  %913 = vmatpush1.bf16.xpose.msra.mxu0 0
  %914 = vmatprep.subr.bf16.mxu0 0
  %915 = vmatpush1.bf16.xpose.msra.mxu0 0
  %916 = vmatprep.subr.bf16.mxu0 0
  %917 = vmatpush1.bf16.xpose.msra.mxu0 0
  %918 = vmatprep.subr.bf16.mxu0 0
  %919 = vmatpush1.bf16.xpose.msra.mxu0 0
  %920 = vmatprep.subr.bf16.mxu0 0
  %921 = vmatpush1.bf16.xpose.msra.mxu0 0
  %922 = vmatprep.subr.bf16.mxu0 0
  %923 = vmatpush1.bf16.xpose.msra.mxu0 0
  %924 = vmatprep.subr.bf16.mxu0 0
  %925 = vmatpush1.bf16.xpose.msra.mxu0 0
  %926 = vmatprep.subr.bf16.mxu0 0
  %927 = vmatpush1.bf16.xpose.msra.mxu0 0
  %928 = vmatprep.subr.bf16.mxu0 0
  %929 = vmatpush1.bf16.xpose.msra.mxu0 0
  %930 = vmatprep.subr.bf16.mxu0 0
  %931 = vmatpush1.bf16.xpose.msra.mxu0 0
  %932 = vmatprep.subr.bf16.mxu0 0
  %933 = vmatpush1.bf16.xpose.msra.mxu0 0
  %934 = vmatprep.subr.bf16.mxu0 0
  %935 = vmatpush1.bf16.xpose.msra.mxu0 0
  %936 = vmatprep.mubr.bf16.mxu0 0
  %937 = vmatmul.mubr.bf16.gmra.mrb[0].mxu0 %v896
  %v938 = vpop.f32.mrb[0].mxu0
  %v939 = vadd.f32 0.0, %v938
  %v940 = vpop.f32.mrb[0].mxu0
  %v941 = vpop.f32.mrb[0].mxu0
  %v942 = vadd.f32 0.0, %v941
  %v943 = vpop.f32.mrb[0].mxu0
  %944 = vmatprep.mubr.bf16.mxu0 0
  %945 = vmatmul.mubr.bf16.gmra.mrb[0].mxu0 %v899
  %v946 = vpop.f32.mrb[0].mxu0
  %v947 = vadd.f32 0.0, %v946
  %v948 = vpop.f32.mrb[0].mxu0
  %v949 = vpop.f32.mrb[0].mxu0
  %v950 = vpop.f32.mrb[0].mxu0
  %951 = vdwg.mxu0
  %vm952 = vcmask 39936
  %v953 = vsel %vm952, %v939, -inf
  %954 = vmax.xlane.f32.xlu0 %v953
  %v955 = vpop.xlane.xlu0 %954
  %v956 = vsel %vm952, %v942, -inf
  %957 = vmax.xlane.f32.xlu0 %v956
  %v958 = vpop.xlane.xlu0 %957
  %vm959 = vcmask 32768
  %v960 = vsel %vm959, %v947, -inf
  %961 = vmax.xlane.f32.xlu0 %v960
  %v962 = vpop.xlane.xlu0 %961
  %v963 = vsub.f32 %v939, %v955
  %v964 = vsub.f32 %v942, %v958
  %v965 = vsub.f32 %v947, %v962
  %v966 = vmul.f32 %v963, 1.442695
  %v967 = vpow.pop %v966
  %v968 = vmul.f32 %v964, 1.442695
  %v969 = vpow.pop %v968
  %v970 = vmul.f32 %v965, 1.442695
  %v971 = vpow.pop %v970
  %v972 = vsel %vm952, %v967, 0.0
  %973 = vadd.xlane.f32.xlu0 %v972
  %v974 = vpop.xlane.xlu0 %973
  %v975 = vsel %vm952, %v969, 0.0
  %976 = vadd.xlane.f32.xlu0 %v975
  %v977 = vpop.xlane.xlu0 %976
  %v978 = vsel %vm959, %v971, 0.0
  %979 = vadd.xlane.f32.xlu0 %v978
  %v980 = vpop.xlane.xlu0 %979
  %v981 = vrcp.pop %v974
  %v982 = vrcp.pop %v977
  %v983 = vrcp.pop %v980
  %v984 = vmul.f32 %v967, %v981
  %v985 = vmul.f32 %v969, %v982
  %v986 = vmul.f32 %v971, %v983
  %v987 = vpack.c.bf16 %v985, %v984
  %v988 = vpack.c.bf16 %v986, %v986
  %v989 = vmul.bf16 %v861, %v879
  %v990 = vmul.bf16 %v862, %v879
  %v991 = vmul.bf16 %v865, %v879
  %v993 = vsel %vm149, %v989, 0
  %v996 = vsel %vm149, %v990, 0
  %998 = vmatprep.subr.bf16.mxu0 0
  %999 = vmatpush1.bf16.xpose.msra.mxu0 %v902
  %1000 = vmatprep.subr.bf16.mxu0 0
  %1001 = vmatpush1.bf16.xpose.msra.mxu0 0
  %1002 = vmatprep.subr.bf16.mxu0 0
  %1003 = vmatpush1.bf16.xpose.msra.mxu0 0
  %1004 = vmatprep.subr.bf16.mxu0 0
  %1005 = vmatpush1.bf16.xpose.msra.mxu0 0
  %1006 = vmatprep.subr.bf16.mxu0 0
  %1007 = vmatpush1.bf16.xpose.msra.mxu0 0
  %1008 = vmatprep.subr.bf16.mxu0 0
  %1009 = vmatpush1.bf16.xpose.msra.mxu0 0
  %1010 = vmatprep.subr.bf16.mxu0 0
  %1011 = vmatpush1.bf16.xpose.msra.mxu0 0
  %1012 = vmatprep.subr.bf16.mxu0 0
  %1013 = vmatpush1.bf16.xpose.msra.mxu0 0
  %1014 = vmatprep.subr.bf16.mxu0 0
  %1015 = vmatpush1.bf16.xpose.msra.mxu0 0
  %1016 = vmatprep.subr.bf16.mxu0 0
  %1017 = vmatpush1.bf16.xpose.msra.mxu0 0
  %1018 = vmatprep.subr.bf16.mxu0 0
  %1019 = vmatpush1.bf16.xpose.msra.mxu0 0
  %1020 = vmatprep.subr.bf16.mxu0 0
  %1021 = vmatpush1.bf16.xpose.msra.mxu0 0
  %1022 = vmatprep.subr.bf16.mxu0 0
  %1023 = vmatpush1.bf16.xpose.msra.mxu0 0
  %1024 = vmatprep.subr.bf16.mxu0 0
  %1025 = vmatpush1.bf16.xpose.msra.mxu0 0
  %1026 = vmatprep.subr.bf16.mxu0 0
  %1027 = vmatpush1.bf16.xpose.msra.mxu0 0
  %1028 = vmatprep.subr.bf16.mxu0 0
  %1029 = vmatpush1.bf16.xpose.msra.mxu0 0
  %1030 = vmatprep.mubr.bf16.mxu0 0
  %1031 = vmatmul.mubr.bf16.gmra.mrb[0].mxu0 %v993
  %v1032 = vpop.f32.mrb[0].mxu0
  %v1033 = vadd.f32 0.0, %v1032
  %v1034 = vpop.f32.mrb[0].mxu0
  %v1035 = vpop.f32.mrb[0].mxu0
  %v1036 = vadd.f32 0.0, %v1035
  %v1037 = vpop.f32.mrb[0].mxu0
  %1038 = vmatprep.mubr.bf16.mxu0 0
  %1039 = vmatmul.mubr.bf16.gmra.mrb[0].mxu0 %v996
  %v1040 = vpop.f32.mrb[0].mxu0
  %v1041 = vadd.f32 0.0, %v1040
  %v1042 = vpop.f32.mrb[0].mxu0
  %v1043 = vpop.f32.mrb[0].mxu0
  %v1044 = vpop.f32.mrb[0].mxu0
  %1045 = vdwg.mxu0
  %v1046 = vsel %vm952, %v1033, -inf
  %1047 = vmax.xlane.f32.xlu0 %v1046
  %v1048 = vpop.xlane.xlu0 %1047
  %v1049 = vsel %vm952, %v1036, -inf
  %1050 = vmax.xlane.f32.xlu0 %v1049
  %v1051 = vpop.xlane.xlu0 %1050
  %v1052 = vsel %vm959, %v1041, -inf
  %1053 = vmax.xlane.f32.xlu0 %v1052
  %v1054 = vpop.xlane.xlu0 %1053
  %v1055 = vsub.f32 %v1033, %v1048
  %v1056 = vsub.f32 %v1036, %v1051
  %v1057 = vsub.f32 %v1041, %v1054
  %v1058 = vmul.f32 %v1055, 1.442695
  %v1059 = vpow.pop %v1058
  %v1060 = vmul.f32 %v1056, 1.442695
  %v1061 = vpow.pop %v1060
  %v1062 = vmul.f32 %v1057, 1.442695
  %v1063 = vpow.pop %v1062
  %v1064 = vsel %vm952, %v1059, 0.0
  %1065 = vadd.xlane.f32.xlu0 %v1064
  %v1066 = vpop.xlane.xlu0 %1065
  %v1067 = vsel %vm952, %v1061, 0.0
  %1068 = vadd.xlane.f32.xlu0 %v1067
  %v1069 = vpop.xlane.xlu0 %1068
  %v1070 = vsel %vm959, %v1063, 0.0
  %1071 = vadd.xlane.f32.xlu0 %v1070
  %v1072 = vpop.xlane.xlu0 %1071
  %v1073 = vrcp.pop %v1066
  %v1074 = vrcp.pop %v1069
  %v1075 = vrcp.pop %v1072
  %v1076 = vmul.f32 %v1059, %v1073
  %v1077 = vmul.f32 %v1061, %v1074
  %v1078 = vmul.f32 %v1063, %v1075
  %v1079 = vpack.c.bf16 %v1077, %v1076
  %v1080 = vpack.c.bf16 %v1078, %v1078
  %v1082 = vsel %vm952, %v1079, 0
  %v1085 = vsel %vm952, %v1080, 0
  %v1087 = vsel %vm248, 4294967295, 65535
  %v1088 = vsel %vm257, %v1087, 0
  %v1090 = vand.u32 %v991, %v1088
  %1092 = vmatprep.subr.bf16.mxu0 0
  %1093 = vmatpush1.bf16.msra.mxu0 %v1090
  %1094 = vmatprep.subr.bf16.mxu0 0
  %1095 = vmatpush1.bf16.msra.mxu0 0
  %1096 = vmatprep.subr.bf16.mxu0 0
  %1097 = vmatpush1.bf16.msra.mxu0 0
  %1098 = vmatprep.subr.bf16.mxu0 0
  %1099 = vmatpush1.bf16.msra.mxu0 0
  %1100 = vmatprep.subr.bf16.mxu0 0
  %1101 = vmatpush1.bf16.msra.mxu0 0
  %1102 = vmatprep.subr.bf16.mxu0 0
  %1103 = vmatpush1.bf16.msra.mxu0 0
  %1104 = vmatprep.subr.bf16.mxu0 0
  %1105 = vmatpush1.bf16.msra.mxu0 0
  %1106 = vmatprep.subr.bf16.mxu0 0
  %1107 = vmatpush1.bf16.msra.mxu0 0
  %1108 = vmatprep.subr.bf16.mxu0 0
  %1109 = vmatpush1.bf16.msra.mxu0 0
  %1110 = vmatprep.subr.bf16.mxu0 0
  %1111 = vmatpush1.bf16.msra.mxu0 0
  %1112 = vmatprep.subr.bf16.mxu0 0
  %1113 = vmatpush1.bf16.msra.mxu0 0
  %1114 = vmatprep.subr.bf16.mxu0 0
  %1115 = vmatpush1.bf16.msra.mxu0 0
  %1116 = vmatprep.subr.bf16.mxu0 0
  %1117 = vmatpush1.bf16.msra.mxu0 0
  %1118 = vmatprep.subr.bf16.mxu0 0
  %1119 = vmatpush1.bf16.msra.mxu0 0
  %1120 = vmatprep.subr.bf16.mxu0 0
  %1121 = vmatpush1.bf16.msra.mxu0 0
  %1122 = vmatprep.subr.bf16.mxu0 0
  %1123 = vmatpush1.bf16.msra.mxu0 0
  %1124 = vmatprep.mubr.bf16.mxu0 0
  %1125 = vmatmul.mubr.bf16.gmra.mrb[0].mxu0 %v1082
  %v1126 = vpop.f32.mrb[0].mxu0
  %v1127 = vadd.f32 0.0, %v1126
  %v1128 = vpop.f32.mrb[0].mxu0
  %v1129 = vpop.f32.mrb[0].mxu0
  %v1130 = vadd.f32 0.0, %v1129
  %v1131 = vpop.f32.mrb[0].mxu0
  %1132 = vmatprep.mubr.bf16.mxu0 0
  %1133 = vmatmul.mubr.bf16.gmra.mrb[0].mxu0 %v1085
  %v1134 = vpop.f32.mrb[0].mxu0
  %v1135 = vadd.f32 0.0, %v1134
  %v1136 = vpop.f32.mrb[0].mxu0
  %v1137 = vpop.f32.mrb[0].mxu0
  %v1138 = vpop.f32.mrb[0].mxu0
  %1139 = vdwg.mxu0
  %v1141 = vsel %vm952, %v987, 0
  %v1144 = vsel %vm952, %v988, 0
  %v1147 = vand.u32 %v894, %v1088
  %1149 = vmatprep.subr.bf16.mxu0 0
  %1150 = vmatpush1.bf16.msra.mxu0 %v1147
  %1151 = vmatprep.subr.bf16.mxu0 0
  %1152 = vmatpush1.bf16.msra.mxu0 0
  %1153 = vmatprep.subr.bf16.mxu0 0
  %1154 = vmatpush1.bf16.msra.mxu0 0
  %1155 = vmatprep.subr.bf16.mxu0 0
  %1156 = vmatpush1.bf16.msra.mxu0 0
  %1157 = vmatprep.subr.bf16.mxu0 0
  %1158 = vmatpush1.bf16.msra.mxu0 0
  %1159 = vmatprep.subr.bf16.mxu0 0
  %1160 = vmatpush1.bf16.msra.mxu0 0
  %1161 = vmatprep.subr.bf16.mxu0 0
  %1162 = vmatpush1.bf16.msra.mxu0 0
  %1163 = vmatprep.subr.bf16.mxu0 0
  %1164 = vmatpush1.bf16.msra.mxu0 0
  %1165 = vmatprep.subr.bf16.mxu0 0
  %1166 = vmatpush1.bf16.msra.mxu0 0
  %1167 = vmatprep.subr.bf16.mxu0 0
  %1168 = vmatpush1.bf16.msra.mxu0 0
  %1169 = vmatprep.subr.bf16.mxu0 0
  %1170 = vmatpush1.bf16.msra.mxu0 0
  %1171 = vmatprep.subr.bf16.mxu0 0
  %1172 = vmatpush1.bf16.msra.mxu0 0
  %1173 = vmatprep.subr.bf16.mxu0 0
  %1174 = vmatpush1.bf16.msra.mxu0 0
  %1175 = vmatprep.subr.bf16.mxu0 0
  %1176 = vmatpush1.bf16.msra.mxu0 0
  %1177 = vmatprep.subr.bf16.mxu0 0
  %1178 = vmatpush1.bf16.msra.mxu0 0
  %1179 = vmatprep.subr.bf16.mxu0 0
  %1180 = vmatpush1.bf16.msra.mxu0 0
  %1181 = vmatprep.mubr.bf16.mxu0 0
  %1182 = vmatmul.mubr.bf16.gmra.mrb[0].mxu0 %v1141
  %v1183 = vpop.f32.mrb[0].mxu0
  %v1184 = vadd.f32 %v1127, %v1183
  %v1185 = vpop.f32.mrb[0].mxu0
  %v1186 = vpop.f32.mrb[0].mxu0
  %v1187 = vadd.f32 %v1130, %v1186
  %v1188 = vpop.f32.mrb[0].mxu0
  %1189 = vmatprep.mubr.bf16.mxu0 0
  %1190 = vmatmul.mubr.bf16.gmra.mrb[0].mxu0 %v1144
  %v1191 = vpop.f32.mrb[0].mxu0
  %v1192 = vadd.f32 %v1135, %v1191
  %v1193 = vpop.f32.mrb[0].mxu0
  %v1194 = vpop.f32.mrb[0].mxu0
  %v1195 = vpop.f32.mrb[0].mxu0
  %1196 = vdwg.mxu0
  %v1197 = vmul.bf16 %v861, %v885
  %v1198 = vmul.bf16 %v862, %v885
  %v1199 = vmul.bf16 %v865, %v885
  %v1201 = vsel %vm149, %v1197, 0
  %v1204 = vsel %vm149, %v1198, 0
  %1206 = vmatprep.subr.bf16.mxu0 0
  %1207 = vmatpush1.bf16.xpose.msra.mxu0 %v902
  %1208 = vmatprep.subr.bf16.mxu0 0
  %1209 = vmatpush1.bf16.xpose.msra.mxu0 0
  %1210 = vmatprep.subr.bf16.mxu0 0
  %1211 = vmatpush1.bf16.xpose.msra.mxu0 0
  %1212 = vmatprep.subr.bf16.mxu0 0
  %1213 = vmatpush1.bf16.xpose.msra.mxu0 0
  %1214 = vmatprep.subr.bf16.mxu0 0
  %1215 = vmatpush1.bf16.xpose.msra.mxu0 0
  %1216 = vmatprep.subr.bf16.mxu0 0
  %1217 = vmatpush1.bf16.xpose.msra.mxu0 0
  %1218 = vmatprep.subr.bf16.mxu0 0
  %1219 = vmatpush1.bf16.xpose.msra.mxu0 0
  %1220 = vmatprep.subr.bf16.mxu0 0
  %1221 = vmatpush1.bf16.xpose.msra.mxu0 0
  %1222 = vmatprep.subr.bf16.mxu0 0
  %1223 = vmatpush1.bf16.xpose.msra.mxu0 0
  %1224 = vmatprep.subr.bf16.mxu0 0
  %1225 = vmatpush1.bf16.xpose.msra.mxu0 0
  %1226 = vmatprep.subr.bf16.mxu0 0
  %1227 = vmatpush1.bf16.xpose.msra.mxu0 0
  %1228 = vmatprep.subr.bf16.mxu0 0
  %1229 = vmatpush1.bf16.xpose.msra.mxu0 0
  %1230 = vmatprep.subr.bf16.mxu0 0
  %1231 = vmatpush1.bf16.xpose.msra.mxu0 0
  %1232 = vmatprep.subr.bf16.mxu0 0
  %1233 = vmatpush1.bf16.xpose.msra.mxu0 0
  %1234 = vmatprep.subr.bf16.mxu0 0
  %1235 = vmatpush1.bf16.xpose.msra.mxu0 0
  %1236 = vmatprep.subr.bf16.mxu0 0
  %1237 = vmatpush1.bf16.xpose.msra.mxu0 0
  %1238 = vmatprep.mubr.bf16.mxu0 0
  %1239 = vmatmul.mubr.bf16.gmra.mrb[0].mxu0 %v1201
  %v1240 = vpop.f32.mrb[0].mxu0
  %v1241 = vadd.f32 0.0, %v1240
  %v1242 = vpop.f32.mrb[0].mxu0
  %v1243 = vpop.f32.mrb[0].mxu0
  %v1244 = vadd.f32 0.0, %v1243
  %v1245 = vpop.f32.mrb[0].mxu0
  %1246 = vmatprep.mubr.bf16.mxu0 0
  %1247 = vmatmul.mubr.bf16.gmra.mrb[0].mxu0 %v1204
  %v1248 = vpop.f32.mrb[0].mxu0
  %v1249 = vadd.f32 0.0, %v1248
  %v1250 = vpop.f32.mrb[0].mxu0
  %v1251 = vpop.f32.mrb[0].mxu0
  %v1252 = vpop.f32.mrb[0].mxu0
  %1253 = vdwg.mxu0
  %v1254 = vsel %vm952, %v1241, -inf
  %1255 = vmax.xlane.f32.xlu0 %v1254
  %v1256 = vpop.xlane.xlu0 %1255
  %v1257 = vsel %vm952, %v1244, -inf
  %1258 = vmax.xlane.f32.xlu0 %v1257
  %v1259 = vpop.xlane.xlu0 %1258
  %v1260 = vsel %vm959, %v1249, -inf
  %1261 = vmax.xlane.f32.xlu0 %v1260
  %v1262 = vpop.xlane.xlu0 %1261
  %v1263 = vsub.f32 %v1241, %v1256
  %v1264 = vsub.f32 %v1244, %v1259
  %v1265 = vsub.f32 %v1249, %v1262
  %v1266 = vmul.f32 %v1263, 1.442695
  %v1267 = vpow.pop %v1266
  %v1268 = vmul.f32 %v1264, 1.442695
  %v1269 = vpow.pop %v1268
  %v1270 = vmul.f32 %v1265, 1.442695
  %v1271 = vpow.pop %v1270
  %v1272 = vsel %vm952, %v1267, 0.0
  %1273 = vadd.xlane.f32.xlu0 %v1272
  %v1274 = vpop.xlane.xlu0 %1273
  %v1275 = vsel %vm952, %v1269, 0.0
  %1276 = vadd.xlane.f32.xlu0 %v1275
  %v1277 = vpop.xlane.xlu0 %1276
  %v1278 = vsel %vm959, %v1271, 0.0
  %1279 = vadd.xlane.f32.xlu0 %v1278
  %v1280 = vpop.xlane.xlu0 %1279
  %v1281 = vrcp.pop %v1274
  %v1282 = vrcp.pop %v1277
  %v1283 = vrcp.pop %v1280
  %v1284 = vmul.f32 %v1267, %v1281
  %v1285 = vmul.f32 %v1269, %v1282
  %v1286 = vmul.f32 %v1271, %v1283
  %v1287 = vpack.c.bf16 %v1285, %v1284
  %v1288 = vpack.c.bf16 %v1286, %v1286
  %v1290 = vsel %vm952, %v1287, 0
  %v1293 = vsel %vm952, %v1288, 0
  %v1296 = vand.u32 %v1199, %v1088
  %1298 = vmatprep.subr.bf16.mxu0 0
  %1299 = vmatpush1.bf16.msra.mxu0 %v1296
  %1300 = vmatprep.subr.bf16.mxu0 0
  %1301 = vmatpush1.bf16.msra.mxu0 0
  %1302 = vmatprep.subr.bf16.mxu0 0
  %1303 = vmatpush1.bf16.msra.mxu0 0
  %1304 = vmatprep.subr.bf16.mxu0 0
  %1305 = vmatpush1.bf16.msra.mxu0 0
  %1306 = vmatprep.subr.bf16.mxu0 0
  %1307 = vmatpush1.bf16.msra.mxu0 0
  %1308 = vmatprep.subr.bf16.mxu0 0
  %1309 = vmatpush1.bf16.msra.mxu0 0
  %1310 = vmatprep.subr.bf16.mxu0 0
  %1311 = vmatpush1.bf16.msra.mxu0 0
  %1312 = vmatprep.subr.bf16.mxu0 0
  %1313 = vmatpush1.bf16.msra.mxu0 0
  %1314 = vmatprep.subr.bf16.mxu0 0
  %1315 = vmatpush1.bf16.msra.mxu0 0
  %1316 = vmatprep.subr.bf16.mxu0 0
  %1317 = vmatpush1.bf16.msra.mxu0 0
  %1318 = vmatprep.subr.bf16.mxu0 0
  %1319 = vmatpush1.bf16.msra.mxu0 0
  %1320 = vmatprep.subr.bf16.mxu0 0
  %1321 = vmatpush1.bf16.msra.mxu0 0
  %1322 = vmatprep.subr.bf16.mxu0 0
  %1323 = vmatpush1.bf16.msra.mxu0 0
  %1324 = vmatprep.subr.bf16.mxu0 0
  %1325 = vmatpush1.bf16.msra.mxu0 0
  %1326 = vmatprep.subr.bf16.mxu0 0
  %1327 = vmatpush1.bf16.msra.mxu0 0
  %1328 = vmatprep.subr.bf16.mxu0 0
  %1329 = vmatpush1.bf16.msra.mxu0 0
  %1330 = vmatprep.mubr.bf16.mxu0 0
  %1331 = vmatmul.mubr.bf16.gmra.mrb[0].mxu0 %v1290
  %v1332 = vpop.f32.mrb[0].mxu0
  %v1333 = vadd.f32 0.0, %v1332
  %v1334 = vpop.f32.mrb[0].mxu0
  %v1335 = vpop.f32.mrb[0].mxu0
  %v1336 = vadd.f32 0.0, %v1335
  %v1337 = vpop.f32.mrb[0].mxu0
  %1338 = vmatprep.mubr.bf16.mxu0 0
  %1339 = vmatmul.mubr.bf16.gmra.mrb[0].mxu0 %v1293
  %v1340 = vpop.f32.mrb[0].mxu0
  %v1341 = vadd.f32 0.0, %v1340
  %v1342 = vpop.f32.mrb[0].mxu0
  %v1343 = vpop.f32.mrb[0].mxu0
  %v1344 = vpop.f32.mrb[0].mxu0
  %1345 = vdwg.mxu0
  %v1346 = vadd.f32 %v1184, %v1333
  %v1347 = vadd.f32 %v1187, %v1336
  %v1348 = vadd.f32 %v1192, %v1341
  %v1349 = vmul.bf16 %v861, %v891
  %v1350 = vmul.bf16 %v862, %v891
  %v1351 = vmul.bf16 %v865, %v891
  %v1353 = vsel %vm149, %v1349, 0
  %v1356 = vsel %vm149, %v1350, 0
  %1358 = vmatprep.subr.bf16.mxu0 0
  %1359 = vmatpush1.bf16.xpose.msra.mxu0 %v902
  %1360 = vmatprep.subr.bf16.mxu0 0
  %1361 = vmatpush1.bf16.xpose.msra.mxu0 0
  %1362 = vmatprep.subr.bf16.mxu0 0
  %1363 = vmatpush1.bf16.xpose.msra.mxu0 0
  %1364 = vmatprep.subr.bf16.mxu0 0
  %1365 = vmatpush1.bf16.xpose.msra.mxu0 0
  %1366 = vmatprep.subr.bf16.mxu0 0
  %1367 = vmatpush1.bf16.xpose.msra.mxu0 0
  %1368 = vmatprep.subr.bf16.mxu0 0
  %1369 = vmatpush1.bf16.xpose.msra.mxu0 0
  %1370 = vmatprep.subr.bf16.mxu0 0
  %1371 = vmatpush1.bf16.xpose.msra.mxu0 0
  %1372 = vmatprep.subr.bf16.mxu0 0
  %1373 = vmatpush1.bf16.xpose.msra.mxu0 0
  %1374 = vmatprep.subr.bf16.mxu0 0
  %1375 = vmatpush1.bf16.xpose.msra.mxu0 0
  %1376 = vmatprep.subr.bf16.mxu0 0
  %1377 = vmatpush1.bf16.xpose.msra.mxu0 0
  %1378 = vmatprep.subr.bf16.mxu0 0
  %1379 = vmatpush1.bf16.xpose.msra.mxu0 0
  %1380 = vmatprep.subr.bf16.mxu0 0
  %1381 = vmatpush1.bf16.xpose.msra.mxu0 0
  %1382 = vmatprep.subr.bf16.mxu0 0
  %1383 = vmatpush1.bf16.xpose.msra.mxu0 0
  %1384 = vmatprep.subr.bf16.mxu0 0
  %1385 = vmatpush1.bf16.xpose.msra.mxu0 0
  %1386 = vmatprep.subr.bf16.mxu0 0
  %1387 = vmatpush1.bf16.xpose.msra.mxu0 0
  %1388 = vmatprep.subr.bf16.mxu0 0
  %1389 = vmatpush1.bf16.xpose.msra.mxu0 0
  %1390 = vmatprep.mubr.bf16.mxu0 0
  %1391 = vmatmul.mubr.bf16.gmra.mrb[0].mxu0 %v1353
  %v1392 = vpop.f32.mrb[0].mxu0
  %v1393 = vadd.f32 0.0, %v1392
  %v1394 = vpop.f32.mrb[0].mxu0
  %v1395 = vpop.f32.mrb[0].mxu0
  %v1396 = vadd.f32 0.0, %v1395
  %v1397 = vpop.f32.mrb[0].mxu0
  %1398 = vmatprep.mubr.bf16.mxu0 0
  %1399 = vmatmul.mubr.bf16.gmra.mrb[0].mxu0 %v1356
  %v1400 = vpop.f32.mrb[0].mxu0
  %v1401 = vadd.f32 0.0, %v1400
  %v1402 = vpop.f32.mrb[0].mxu0
  %v1403 = vpop.f32.mrb[0].mxu0
  %v1404 = vpop.f32.mrb[0].mxu0
  %1405 = vdwg.mxu0
  %v1406 = vsel %vm952, %v1393, -inf
  %1407 = vmax.xlane.f32.xlu0 %v1406
  %v1408 = vpop.xlane.xlu0 %1407
  %v1409 = vsel %vm952, %v1396, -inf
  %1410 = vmax.xlane.f32.xlu0 %v1409
  %v1411 = vpop.xlane.xlu0 %1410
  %v1412 = vsel %vm959, %v1401, -inf
  %1413 = vmax.xlane.f32.xlu0 %v1412
  %v1414 = vpop.xlane.xlu0 %1413
  %v1415 = vsub.f32 %v1393, %v1408
  %v1416 = vsub.f32 %v1396, %v1411
  %v1417 = vsub.f32 %v1401, %v1414
  %v1418 = vmul.f32 %v1415, 1.442695
  %v1419 = vpow.pop %v1418
  %v1420 = vmul.f32 %v1416, 1.442695
  %v1421 = vpow.pop %v1420
  %v1422 = vmul.f32 %v1417, 1.442695
  %v1423 = vpow.pop %v1422
  %v1424 = vsel %vm952, %v1419, 0.0
  %1425 = vadd.xlane.f32.xlu0 %v1424
  %v1426 = vpop.xlane.xlu0 %1425
  %v1427 = vsel %vm952, %v1421, 0.0
  %1428 = vadd.xlane.f32.xlu0 %v1427
  %v1429 = vpop.xlane.xlu0 %1428
  %v1430 = vsel %vm959, %v1423, 0.0
  %1431 = vadd.xlane.f32.xlu0 %v1430
  %v1432 = vpop.xlane.xlu0 %1431
  %v1433 = vrcp.pop %v1426
  %v1434 = vrcp.pop %v1429
  %v1435 = vrcp.pop %v1432
  %v1436 = vmul.f32 %v1419, %v1433
  %v1437 = vmul.f32 %v1421, %v1434
  %v1438 = vmul.f32 %v1423, %v1435
  %v1439 = vpack.c.bf16 %v1437, %v1436
  %v1440 = vpack.c.bf16 %v1438, %v1438
  %v1442 = vsel %vm952, %v1439, 0
  %v1445 = vsel %vm952, %v1440, 0
  %v1448 = vand.u32 %v1351, %v1088
  %1450 = vmatprep.subr.bf16.mxu0 0
  %1451 = vmatpush1.bf16.msra.mxu0 %v1448
  %1452 = vmatprep.subr.bf16.mxu0 0
  %1453 = vmatpush1.bf16.msra.mxu0 0
  %1454 = vmatprep.subr.bf16.mxu0 0
  %1455 = vmatpush1.bf16.msra.mxu0 0
  %1456 = vmatprep.subr.bf16.mxu0 0
  %1457 = vmatpush1.bf16.msra.mxu0 0
  %1458 = vmatprep.subr.bf16.mxu0 0
  %1459 = vmatpush1.bf16.msra.mxu0 0
  %1460 = vmatprep.subr.bf16.mxu0 0
  %1461 = vmatpush1.bf16.msra.mxu0 0
  %1462 = vmatprep.subr.bf16.mxu0 0
  %1463 = vmatpush1.bf16.msra.mxu0 0
  %1464 = vmatprep.subr.bf16.mxu0 0
  %1465 = vmatpush1.bf16.msra.mxu0 0
  %1466 = vmatprep.subr.bf16.mxu0 0
  %1467 = vmatpush1.bf16.msra.mxu0 0
  %1468 = vmatprep.subr.bf16.mxu0 0
  %1469 = vmatpush1.bf16.msra.mxu0 0
  %1470 = vmatprep.subr.bf16.mxu0 0
  %1471 = vmatpush1.bf16.msra.mxu0 0
  %1472 = vmatprep.subr.bf16.mxu0 0
  %1473 = vmatpush1.bf16.msra.mxu0 0
  %1474 = vmatprep.subr.bf16.mxu0 0
  %1475 = vmatpush1.bf16.msra.mxu0 0
  %1476 = vmatprep.subr.bf16.mxu0 0
  %1477 = vmatpush1.bf16.msra.mxu0 0
  %1478 = vmatprep.subr.bf16.mxu0 0
  %1479 = vmatpush1.bf16.msra.mxu0 0
  %1480 = vmatprep.subr.bf16.mxu0 0
  %1481 = vmatpush1.bf16.msra.mxu0 0
  %1482 = vmatprep.mubr.bf16.mxu0 0
  %1483 = vmatmul.mubr.bf16.gmra.mrb[0].mxu0 %v1442
  %v1484 = vpop.f32.mrb[0].mxu0
  %v1485 = vadd.f32 0.0, %v1484
  %v1486 = vpop.f32.mrb[0].mxu0
  %v1487 = vpop.f32.mrb[0].mxu0
  %v1488 = vadd.f32 0.0, %v1487
  %v1489 = vpop.f32.mrb[0].mxu0
  %1490 = vmatprep.mubr.bf16.mxu0 0
  %1491 = vmatmul.mubr.bf16.gmra.mrb[0].mxu0 %v1445
  %v1492 = vpop.f32.mrb[0].mxu0
  %v1493 = vadd.f32 0.0, %v1492
  %v1494 = vpop.f32.mrb[0].mxu0
  %v1495 = vpop.f32.mrb[0].mxu0
  %v1496 = vpop.f32.mrb[0].mxu0
  %1497 = vdwg.mxu0
  %v1498 = vadd.f32 %v1346, %v1485
  %v1499 = vadd.f32 %v1347, %v1488
  %v1500 = vadd.f32 %v1348, %v1493
  %v1501 = vmul.bf16 %v863, %v873
  %vm1502 = vsmask.f32 7424
  %v1503 = vshrl.u32 %v893, 16
  %v1505 = vshll.u32 %v893, 16
  %v1507 = vrot.slane %v1505, 1
  %v1508 = vor.u32 %v1503, %v1507
  %v1510 = vshll.u32 %v1501, 16
  %v1512 = vrot.slane %v1510, 1
  %v1513 = vsel %vm1502, %v1508, %v1512
  %v1514 = vshrl.u32 %v1501, 16
  %v1516 = vshrl.u32 %v864, 16
  %v1518 = vrot.slane %v1516, 2
  %v1519 = vshll.u32 %v864, 16
  %v1521 = vrot.slane %v1519, 3
  %v1522 = vor.u32 %v1518, %v1521
  %v1524 = vsel %vm149, %v1513, 0
  %v1527 = vsel %vm149, %v1514, 0
  %v1530 = vsel %vm149, %v1522, 0
  %1532 = vmatprep.subr.bf16.mxu0 0
  %1533 = vmatpush1.bf16.xpose.msra.mxu0 %v1530
  %1534 = vmatprep.subr.bf16.mxu0 0
  %1535 = vmatpush1.bf16.xpose.msra.mxu0 0
  %1536 = vmatprep.subr.bf16.mxu0 0
  %1537 = vmatpush1.bf16.xpose.msra.mxu0 0
  %1538 = vmatprep.subr.bf16.mxu0 0
  %1539 = vmatpush1.bf16.xpose.msra.mxu0 0
  %1540 = vmatprep.subr.bf16.mxu0 0
  %1541 = vmatpush1.bf16.xpose.msra.mxu0 0
  %1542 = vmatprep.subr.bf16.mxu0 0
  %1543 = vmatpush1.bf16.xpose.msra.mxu0 0
  %1544 = vmatprep.subr.bf16.mxu0 0
  %1545 = vmatpush1.bf16.xpose.msra.mxu0 0
  %1546 = vmatprep.subr.bf16.mxu0 0
  %1547 = vmatpush1.bf16.xpose.msra.mxu0 0
  %1548 = vmatprep.subr.bf16.mxu0 0
  %1549 = vmatpush1.bf16.xpose.msra.mxu0 0
  %1550 = vmatprep.subr.bf16.mxu0 0
  %1551 = vmatpush1.bf16.xpose.msra.mxu0 0
  %1552 = vmatprep.subr.bf16.mxu0 0
  %1553 = vmatpush1.bf16.xpose.msra.mxu0 0
  %1554 = vmatprep.subr.bf16.mxu0 0
  %1555 = vmatpush1.bf16.xpose.msra.mxu0 0
  %1556 = vmatprep.subr.bf16.mxu0 0
  %1557 = vmatpush1.bf16.xpose.msra.mxu0 0
  %1558 = vmatprep.subr.bf16.mxu0 0
  %1559 = vmatpush1.bf16.xpose.msra.mxu0 0
  %1560 = vmatprep.subr.bf16.mxu0 0
  %1561 = vmatpush1.bf16.xpose.msra.mxu0 0
  %1562 = vmatprep.subr.bf16.mxu0 0
  %1563 = vmatpush1.bf16.xpose.msra.mxu0 0
  %1564 = vmatprep.mubr.bf16.mxu0 0
  %1565 = vmatmul.mubr.bf16.gmra.mrb[0].mxu0 %v1524
  %v1566 = vpop.f32.mrb[0].mxu0
  %v1567 = vadd.f32 0.0, %v1566
  %v1568 = vpop.f32.mrb[0].mxu0
  %v1569 = vpop.f32.mrb[0].mxu0
  %v1570 = vadd.f32 0.0, %v1569
  %v1571 = vpop.f32.mrb[0].mxu0
  %1572 = vmatprep.mubr.bf16.mxu0 0
  %1573 = vmatmul.mubr.bf16.gmra.mrb[0].mxu0 %v1527
  %v1574 = vpop.f32.mrb[0].mxu0
  %v1575 = vadd.f32 0.0, %v1574
  %v1576 = vpop.f32.mrb[0].mxu0
  %v1577 = vpop.f32.mrb[0].mxu0
  %v1578 = vpop.f32.mrb[0].mxu0
  %1579 = vdwg.mxu0
  %v1580 = vsel %vm952, %v1567, -inf
  %1581 = vmax.xlane.f32.xlu0 %v1580
  %v1582 = vpop.xlane.xlu0 %1581
  %v1583 = vsel %vm952, %v1570, -inf
  %1584 = vmax.xlane.f32.xlu0 %v1583
  %v1585 = vpop.xlane.xlu0 %1584
  %v1586 = vsel %vm959, %v1575, -inf
  %1587 = vmax.xlane.f32.xlu0 %v1586
  %v1588 = vpop.xlane.xlu0 %1587
  %v1589 = vsub.f32 %v1567, %v1582
  %v1590 = vsub.f32 %v1570, %v1585
  %v1591 = vsub.f32 %v1575, %v1588
  %v1592 = vmul.f32 %v1589, 1.442695
  %v1593 = vpow.pop %v1592
  %v1594 = vmul.f32 %v1590, 1.442695
  %v1595 = vpow.pop %v1594
  %v1596 = vmul.f32 %v1591, 1.442695
  %v1597 = vpow.pop %v1596
  %v1598 = vsel %vm952, %v1593, 0.0
  %1599 = vadd.xlane.f32.xlu0 %v1598
  %v1600 = vpop.xlane.xlu0 %1599
  %v1601 = vsel %vm952, %v1595, 0.0
  %1602 = vadd.xlane.f32.xlu0 %v1601
  %v1603 = vpop.xlane.xlu0 %1602
  %v1604 = vsel %vm959, %v1597, 0.0
  %1605 = vadd.xlane.f32.xlu0 %v1604
  %v1606 = vpop.xlane.xlu0 %1605
  %v1607 = vrcp.pop %v1600
  %v1608 = vrcp.pop %v1603
  %v1609 = vrcp.pop %v1606
  %v1610 = vmul.f32 %v1593, %v1607
  %v1611 = vmul.f32 %v1595, %v1608
  %v1612 = vmul.f32 %v1597, %v1609
  %v1613 = vpack.c.bf16 %v1611, %v1610
  %v1614 = vpack.c.bf16 %v1612, %v1612
  %v1615 = vmul.bf16 %v863, %v879
  %v1616 = vshrl.u32 %v990, 16
  %v1618 = vshll.u32 %v990, 16
  %v1620 = vrot.slane %v1618, 1
  %v1621 = vor.u32 %v1616, %v1620
  %v1623 = vshll.u32 %v1615, 16
  %v1625 = vrot.slane %v1623, 1
  %v1626 = vsel %vm1502, %v1621, %v1625
  %v1627 = vshrl.u32 %v1615, 16
  %v1630 = vsel %vm149, %v1626, 0
  %v1633 = vsel %vm149, %v1627, 0
  %1635 = vmatprep.subr.bf16.mxu0 0
  %1636 = vmatpush1.bf16.xpose.msra.mxu0 %v1530
  %1637 = vmatprep.subr.bf16.mxu0 0
  %1638 = vmatpush1.bf16.xpose.msra.mxu0 0
  %1639 = vmatprep.subr.bf16.mxu0 0
  %1640 = vmatpush1.bf16.xpose.msra.mxu0 0
  %1641 = vmatprep.subr.bf16.mxu0 0
  %1642 = vmatpush1.bf16.xpose.msra.mxu0 0
  %1643 = vmatprep.subr.bf16.mxu0 0
  %1644 = vmatpush1.bf16.xpose.msra.mxu0 0
  %1645 = vmatprep.subr.bf16.mxu0 0
  %1646 = vmatpush1.bf16.xpose.msra.mxu0 0
  %1647 = vmatprep.subr.bf16.mxu0 0
  %1648 = vmatpush1.bf16.xpose.msra.mxu0 0
  %1649 = vmatprep.subr.bf16.mxu0 0
  %1650 = vmatpush1.bf16.xpose.msra.mxu0 0
  %1651 = vmatprep.subr.bf16.mxu0 0
  %1652 = vmatpush1.bf16.xpose.msra.mxu0 0
  %1653 = vmatprep.subr.bf16.mxu0 0
  %1654 = vmatpush1.bf16.xpose.msra.mxu0 0
  %1655 = vmatprep.subr.bf16.mxu0 0
  %1656 = vmatpush1.bf16.xpose.msra.mxu0 0
  %1657 = vmatprep.subr.bf16.mxu0 0
  %1658 = vmatpush1.bf16.xpose.msra.mxu0 0
  %1659 = vmatprep.subr.bf16.mxu0 0
  %1660 = vmatpush1.bf16.xpose.msra.mxu0 0
  %1661 = vmatprep.subr.bf16.mxu0 0
  %1662 = vmatpush1.bf16.xpose.msra.mxu0 0
  %1663 = vmatprep.subr.bf16.mxu0 0
  %1664 = vmatpush1.bf16.xpose.msra.mxu0 0
  %1665 = vmatprep.subr.bf16.mxu0 0
  %1666 = vmatpush1.bf16.xpose.msra.mxu0 0
  %1667 = vmatprep.mubr.bf16.mxu0 0
  %1668 = vmatmul.mubr.bf16.gmra.mrb[0].mxu0 %v1630
  %v1669 = vpop.f32.mrb[0].mxu0
  %v1670 = vadd.f32 0.0, %v1669
  %v1671 = vpop.f32.mrb[0].mxu0
  %v1672 = vpop.f32.mrb[0].mxu0
  %v1673 = vadd.f32 0.0, %v1672
  %v1674 = vpop.f32.mrb[0].mxu0
  %1675 = vmatprep.mubr.bf16.mxu0 0
  %1676 = vmatmul.mubr.bf16.gmra.mrb[0].mxu0 %v1633
  %v1677 = vpop.f32.mrb[0].mxu0
  %v1678 = vadd.f32 0.0, %v1677
  %v1679 = vpop.f32.mrb[0].mxu0
  %v1680 = vpop.f32.mrb[0].mxu0
  %v1681 = vpop.f32.mrb[0].mxu0
  %1682 = vdwg.mxu0
  %v1683 = vsel %vm952, %v1670, -inf
  %1684 = vmax.xlane.f32.xlu0 %v1683
  %v1685 = vpop.xlane.xlu0 %1684
  %v1686 = vsel %vm952, %v1673, -inf
  %1687 = vmax.xlane.f32.xlu0 %v1686
  %v1688 = vpop.xlane.xlu0 %1687
  %v1689 = vsel %vm959, %v1678, -inf
  %1690 = vmax.xlane.f32.xlu0 %v1689
  %v1691 = vpop.xlane.xlu0 %1690
  %v1692 = vsub.f32 %v1670, %v1685
  %v1693 = vsub.f32 %v1673, %v1688
  %v1694 = vsub.f32 %v1678, %v1691
  %v1695 = vmul.f32 %v1692, 1.442695
  %v1696 = vpow.pop %v1695
  %v1697 = vmul.f32 %v1693, 1.442695
  %v1698 = vpow.pop %v1697
  %v1699 = vmul.f32 %v1694, 1.442695
  %v1700 = vpow.pop %v1699
  %v1701 = vsel %vm952, %v1696, 0.0
  %1702 = vadd.xlane.f32.xlu0 %v1701
  %v1703 = vpop.xlane.xlu0 %1702
  %v1704 = vsel %vm952, %v1698, 0.0
  %1705 = vadd.xlane.f32.xlu0 %v1704
  %v1706 = vpop.xlane.xlu0 %1705
  %v1707 = vsel %vm959, %v1700, 0.0
  %1708 = vadd.xlane.f32.xlu0 %v1707
  %v1709 = vpop.xlane.xlu0 %1708
  %v1710 = vrcp.pop %v1703
  %v1711 = vrcp.pop %v1706
  %v1712 = vrcp.pop %v1709
  %v1713 = vmul.f32 %v1696, %v1710
  %v1714 = vmul.f32 %v1698, %v1711
  %v1715 = vmul.f32 %v1700, %v1712
  %v1716 = vpack.c.bf16 %v1714, %v1713
  %v1717 = vpack.c.bf16 %v1715, %v1715
  %v1718 = vshrl.u32 %v991, 16
  %v1720 = vrot.slane %v1718, 2
  %v1721 = vshll.u32 %v991, 16
  %v1723 = vrot.slane %v1721, 3
  %v1724 = vor.u32 %v1720, %v1723
  %v1726 = vsel %vm952, %v1716, 0
  %v1729 = vsel %vm952, %v1717, 0
  %v1732 = vand.u32 %v1724, %v1088
  %1734 = vmatprep.subr.bf16.mxu0 0
  %1735 = vmatpush1.bf16.msra.mxu0 %v1732
  %1736 = vmatprep.subr.bf16.mxu0 0
  %1737 = vmatpush1.bf16.msra.mxu0 0
  %1738 = vmatprep.subr.bf16.mxu0 0
  %1739 = vmatpush1.bf16.msra.mxu0 0
  %1740 = vmatprep.subr.bf16.mxu0 0
  %1741 = vmatpush1.bf16.msra.mxu0 0
  %1742 = vmatprep.subr.bf16.mxu0 0
  %1743 = vmatpush1.bf16.msra.mxu0 0
  %1744 = vmatprep.subr.bf16.mxu0 0
  %1745 = vmatpush1.bf16.msra.mxu0 0
  %1746 = vmatprep.subr.bf16.mxu0 0
  %1747 = vmatpush1.bf16.msra.mxu0 0
  %1748 = vmatprep.subr.bf16.mxu0 0
  %1749 = vmatpush1.bf16.msra.mxu0 0
  %1750 = vmatprep.subr.bf16.mxu0 0
  %1751 = vmatpush1.bf16.msra.mxu0 0
  %1752 = vmatprep.subr.bf16.mxu0 0
  %1753 = vmatpush1.bf16.msra.mxu0 0
  %1754 = vmatprep.subr.bf16.mxu0 0
  %1755 = vmatpush1.bf16.msra.mxu0 0
  %1756 = vmatprep.subr.bf16.mxu0 0
  %1757 = vmatpush1.bf16.msra.mxu0 0
  %1758 = vmatprep.subr.bf16.mxu0 0
  %1759 = vmatpush1.bf16.msra.mxu0 0
  %1760 = vmatprep.subr.bf16.mxu0 0
  %1761 = vmatpush1.bf16.msra.mxu0 0
  %1762 = vmatprep.subr.bf16.mxu0 0
  %1763 = vmatpush1.bf16.msra.mxu0 0
  %1764 = vmatprep.subr.bf16.mxu0 0
  %1765 = vmatpush1.bf16.msra.mxu0 0
  %1766 = vmatprep.mubr.bf16.mxu0 0
  %1767 = vmatmul.mubr.bf16.gmra.mrb[0].mxu0 %v1726
  %v1768 = vpop.f32.mrb[0].mxu0
  %v1769 = vadd.f32 0.0, %v1768
  %v1770 = vpop.f32.mrb[0].mxu0
  %v1771 = vpop.f32.mrb[0].mxu0
  %v1772 = vadd.f32 0.0, %v1771
  %v1773 = vpop.f32.mrb[0].mxu0
  %1774 = vmatprep.mubr.bf16.mxu0 0
  %1775 = vmatmul.mubr.bf16.gmra.mrb[0].mxu0 %v1729
  %v1776 = vpop.f32.mrb[0].mxu0
  %v1777 = vadd.f32 0.0, %v1776
  %v1778 = vpop.f32.mrb[0].mxu0
  %v1779 = vpop.f32.mrb[0].mxu0
  %v1780 = vpop.f32.mrb[0].mxu0
  %1781 = vdwg.mxu0
  %v1782 = vshrl.u32 %v894, 16
  %v1784 = vrot.slane %v1782, 2
  %v1785 = vshll.u32 %v894, 16
  %v1787 = vrot.slane %v1785, 3
  %v1788 = vor.u32 %v1784, %v1787
  %v1790 = vsel %vm952, %v1613, 0
  %v1793 = vsel %vm952, %v1614, 0
  %v1796 = vand.u32 %v1788, %v1088
  %1798 = vmatprep.subr.bf16.mxu0 0
  %1799 = vmatpush1.bf16.msra.mxu0 %v1796
  %1800 = vmatprep.subr.bf16.mxu0 0
  %1801 = vmatpush1.bf16.msra.mxu0 0
  %1802 = vmatprep.subr.bf16.mxu0 0
  %1803 = vmatpush1.bf16.msra.mxu0 0
  %1804 = vmatprep.subr.bf16.mxu0 0
  %1805 = vmatpush1.bf16.msra.mxu0 0
  %1806 = vmatprep.subr.bf16.mxu0 0
  %1807 = vmatpush1.bf16.msra.mxu0 0
  %1808 = vmatprep.subr.bf16.mxu0 0
  %1809 = vmatpush1.bf16.msra.mxu0 0
  %1810 = vmatprep.subr.bf16.mxu0 0
  %1811 = vmatpush1.bf16.msra.mxu0 0
  %1812 = vmatprep.subr.bf16.mxu0 0
  %1813 = vmatpush1.bf16.msra.mxu0 0
  %1814 = vmatprep.subr.bf16.mxu0 0
  %1815 = vmatpush1.bf16.msra.mxu0 0
  %1816 = vmatprep.subr.bf16.mxu0 0
  %1817 = vmatpush1.bf16.msra.mxu0 0
  %1818 = vmatprep.subr.bf16.mxu0 0
  %1819 = vmatpush1.bf16.msra.mxu0 0
  %1820 = vmatprep.subr.bf16.mxu0 0
  %1821 = vmatpush1.bf16.msra.mxu0 0
  %1822 = vmatprep.subr.bf16.mxu0 0
  %1823 = vmatpush1.bf16.msra.mxu0 0
  %1824 = vmatprep.subr.bf16.mxu0 0
  %1825 = vmatpush1.bf16.msra.mxu0 0
  %1826 = vmatprep.subr.bf16.mxu0 0
  %1827 = vmatpush1.bf16.msra.mxu0 0
  %1828 = vmatprep.subr.bf16.mxu0 0
  %1829 = vmatpush1.bf16.msra.mxu0 0
  %1830 = vmatprep.mubr.bf16.mxu0 0
  %1831 = vmatmul.mubr.bf16.gmra.mrb[0].mxu0 %v1790
  %v1832 = vpop.f32.mrb[0].mxu0
  %v1833 = vadd.f32 %v1769, %v1832
  %v1834 = vpop.f32.mrb[0].mxu0
  %v1835 = vpop.f32.mrb[0].mxu0
  %v1836 = vadd.f32 %v1772, %v1835
  %v1837 = vpop.f32.mrb[0].mxu0
  %1838 = vmatprep.mubr.bf16.mxu0 0
  %1839 = vmatmul.mubr.bf16.gmra.mrb[0].mxu0 %v1793
  %v1840 = vpop.f32.mrb[0].mxu0
  %v1841 = vadd.f32 %v1777, %v1840
  %v1842 = vpop.f32.mrb[0].mxu0
  %v1843 = vpop.f32.mrb[0].mxu0
  %v1844 = vpop.f32.mrb[0].mxu0
  %1845 = vdwg.mxu0
  %v1846 = vmul.bf16 %v863, %v885
  %v1847 = vshrl.u32 %v1198, 16
  %v1849 = vshll.u32 %v1198, 16
  %v1851 = vrot.slane %v1849, 1
  %v1852 = vor.u32 %v1847, %v1851
  %v1854 = vshll.u32 %v1846, 16
  %v1856 = vrot.slane %v1854, 1
  %v1857 = vsel %vm1502, %v1852, %v1856
  %v1858 = vshrl.u32 %v1846, 16
  %v1861 = vsel %vm149, %v1857, 0
  %v1864 = vsel %vm149, %v1858, 0
  %1866 = vmatprep.subr.bf16.mxu0 0
  %1867 = vmatpush1.bf16.xpose.msra.mxu0 %v1530
  %1868 = vmatprep.subr.bf16.mxu0 0
  %1869 = vmatpush1.bf16.xpose.msra.mxu0 0
  %1870 = vmatprep.subr.bf16.mxu0 0
  %1871 = vmatpush1.bf16.xpose.msra.mxu0 0
  %1872 = vmatprep.subr.bf16.mxu0 0
  %1873 = vmatpush1.bf16.xpose.msra.mxu0 0
  %1874 = vmatprep.subr.bf16.mxu0 0
  %1875 = vmatpush1.bf16.xpose.msra.mxu0 0
  %1876 = vmatprep.subr.bf16.mxu0 0
  %1877 = vmatpush1.bf16.xpose.msra.mxu0 0
  %1878 = vmatprep.subr.bf16.mxu0 0
  %1879 = vmatpush1.bf16.xpose.msra.mxu0 0
  %1880 = vmatprep.subr.bf16.mxu0 0
  %1881 = vmatpush1.bf16.xpose.msra.mxu0 0
  %1882 = vmatprep.subr.bf16.mxu0 0
  %1883 = vmatpush1.bf16.xpose.msra.mxu0 0
  %1884 = vmatprep.subr.bf16.mxu0 0
  %1885 = vmatpush1.bf16.xpose.msra.mxu0 0
  %1886 = vmatprep.subr.bf16.mxu0 0
  %1887 = vmatpush1.bf16.xpose.msra.mxu0 0
  %1888 = vmatprep.subr.bf16.mxu0 0
  %1889 = vmatpush1.bf16.xpose.msra.mxu0 0
  %1890 = vmatprep.subr.bf16.mxu0 0
  %1891 = vmatpush1.bf16.xpose.msra.mxu0 0
  %1892 = vmatprep.subr.bf16.mxu0 0
  %1893 = vmatpush1.bf16.xpose.msra.mxu0 0
  %1894 = vmatprep.subr.bf16.mxu0 0
  %1895 = vmatpush1.bf16.xpose.msra.mxu0 0
  %1896 = vmatprep.subr.bf16.mxu0 0
  %1897 = vmatpush1.bf16.xpose.msra.mxu0 0
  %1898 = vmatprep.mubr.bf16.mxu0 0
  %1899 = vmatmul.mubr.bf16.gmra.mrb[0].mxu0 %v1861
  %v1900 = vpop.f32.mrb[0].mxu0
  %v1901 = vadd.f32 0.0, %v1900
  %v1902 = vpop.f32.mrb[0].mxu0
  %v1903 = vpop.f32.mrb[0].mxu0
  %v1904 = vadd.f32 0.0, %v1903
  %v1905 = vpop.f32.mrb[0].mxu0
  %1906 = vmatprep.mubr.bf16.mxu0 0
  %1907 = vmatmul.mubr.bf16.gmra.mrb[0].mxu0 %v1864
  %v1908 = vpop.f32.mrb[0].mxu0
  %v1909 = vadd.f32 0.0, %v1908
  %v1910 = vpop.f32.mrb[0].mxu0
  %v1911 = vpop.f32.mrb[0].mxu0
  %v1912 = vpop.f32.mrb[0].mxu0
  %1913 = vdwg.mxu0
  %v1914 = vsel %vm952, %v1901, -inf
  %1915 = vmax.xlane.f32.xlu0 %v1914
  %v1916 = vpop.xlane.xlu0 %1915
  %v1917 = vsel %vm952, %v1904, -inf
  %1918 = vmax.xlane.f32.xlu0 %v1917
  %v1919 = vpop.xlane.xlu0 %1918
  %v1920 = vsel %vm959, %v1909, -inf
  %1921 = vmax.xlane.f32.xlu0 %v1920
  %v1922 = vpop.xlane.xlu0 %1921
  %v1923 = vsub.f32 %v1901, %v1916
  %v1924 = vsub.f32 %v1904, %v1919
  %v1925 = vsub.f32 %v1909, %v1922
  %v1926 = vmul.f32 %v1923, 1.442695
  %v1927 = vpow.pop %v1926
  %v1928 = vmul.f32 %v1924, 1.442695
  %v1929 = vpow.pop %v1928
  %v1930 = vmul.f32 %v1925, 1.442695
  %v1931 = vpow.pop %v1930
  %v1932 = vsel %vm952, %v1927, 0.0
  %1933 = vadd.xlane.f32.xlu0 %v1932
  %v1934 = vpop.xlane.xlu0 %1933
  %v1935 = vsel %vm952, %v1929, 0.0
  %1936 = vadd.xlane.f32.xlu0 %v1935
  %v1937 = vpop.xlane.xlu0 %1936
  %v1938 = vsel %vm959, %v1931, 0.0
  %1939 = vadd.xlane.f32.xlu0 %v1938
  %v1940 = vpop.xlane.xlu0 %1939
  %v1941 = vrcp.pop %v1934
  %v1942 = vrcp.pop %v1937
  %v1943 = vrcp.pop %v1940
  %v1944 = vmul.f32 %v1927, %v1941
  %v1945 = vmul.f32 %v1929, %v1942
  %v1946 = vmul.f32 %v1931, %v1943
  %v1947 = vpack.c.bf16 %v1945, %v1944
  %v1948 = vpack.c.bf16 %v1946, %v1946
  %v1949 = vshrl.u32 %v1199, 16
  %v1951 = vrot.slane %v1949, 2
  %v1952 = vshll.u32 %v1199, 16
  %v1954 = vrot.slane %v1952, 3
  %v1955 = vor.u32 %v1951, %v1954
  %v1957 = vsel %vm952, %v1947, 0
  %v1960 = vsel %vm952, %v1948, 0
  %v1963 = vand.u32 %v1955, %v1088
  %1965 = vmatprep.subr.bf16.mxu0 0
  %1966 = vmatpush1.bf16.msra.mxu0 %v1963
  %1967 = vmatprep.subr.bf16.mxu0 0
  %1968 = vmatpush1.bf16.msra.mxu0 0
  %1969 = vmatprep.subr.bf16.mxu0 0
  %1970 = vmatpush1.bf16.msra.mxu0 0
  %1971 = vmatprep.subr.bf16.mxu0 0
  %1972 = vmatpush1.bf16.msra.mxu0 0
  %1973 = vmatprep.subr.bf16.mxu0 0
  %1974 = vmatpush1.bf16.msra.mxu0 0
  %1975 = vmatprep.subr.bf16.mxu0 0
  %1976 = vmatpush1.bf16.msra.mxu0 0
  %1977 = vmatprep.subr.bf16.mxu0 0
  %1978 = vmatpush1.bf16.msra.mxu0 0
  %1979 = vmatprep.subr.bf16.mxu0 0
  %1980 = vmatpush1.bf16.msra.mxu0 0
  %1981 = vmatprep.subr.bf16.mxu0 0
  %1982 = vmatpush1.bf16.msra.mxu0 0
  %1983 = vmatprep.subr.bf16.mxu0 0
  %1984 = vmatpush1.bf16.msra.mxu0 0
  %1985 = vmatprep.subr.bf16.mxu0 0
  %1986 = vmatpush1.bf16.msra.mxu0 0
  %1987 = vmatprep.subr.bf16.mxu0 0
  %1988 = vmatpush1.bf16.msra.mxu0 0
  %1989 = vmatprep.subr.bf16.mxu0 0
  %1990 = vmatpush1.bf16.msra.mxu0 0
  %1991 = vmatprep.subr.bf16.mxu0 0
  %1992 = vmatpush1.bf16.msra.mxu0 0
  %1993 = vmatprep.subr.bf16.mxu0 0
  %1994 = vmatpush1.bf16.msra.mxu0 0
  %1995 = vmatprep.subr.bf16.mxu0 0
  %1996 = vmatpush1.bf16.msra.mxu0 0
  %1997 = vmatprep.mubr.bf16.mxu0 0
  %1998 = vmatmul.mubr.bf16.gmra.mrb[0].mxu0 %v1957
  %v1999 = vpop.f32.mrb[0].mxu0
  %v2000 = vadd.f32 0.0, %v1999
  %v2001 = vpop.f32.mrb[0].mxu0
  %v2002 = vpop.f32.mrb[0].mxu0
  %v2003 = vadd.f32 0.0, %v2002
  %v2004 = vpop.f32.mrb[0].mxu0
  %2005 = vmatprep.mubr.bf16.mxu0 0
  %2006 = vmatmul.mubr.bf16.gmra.mrb[0].mxu0 %v1960
  %v2007 = vpop.f32.mrb[0].mxu0
  %v2008 = vadd.f32 0.0, %v2007
  %v2009 = vpop.f32.mrb[0].mxu0
  %v2010 = vpop.f32.mrb[0].mxu0
  %v2011 = vpop.f32.mrb[0].mxu0
  %2012 = vdwg.mxu0
  %v2013 = vadd.f32 %v1833, %v2000
  %v2014 = vadd.f32 %v1836, %v2003
  %v2015 = vadd.f32 %v1841, %v2008
  %v2016 = vmul.bf16 %v863, %v891
  %v2017 = vshrl.u32 %v1350, 16
  %v2019 = vshll.u32 %v1350, 16
  %v2021 = vrot.slane %v2019, 1
  %v2022 = vor.u32 %v2017, %v2021
  %v2024 = vshll.u32 %v2016, 16
  %v2026 = vrot.slane %v2024, 1
  %v2027 = vsel %vm1502, %v2022, %v2026
  %v2028 = vshrl.u32 %v2016, 16
  %v2031 = vsel %vm149, %v2027, 0
  %v2034 = vsel %vm149, %v2028, 0
  %2036 = vmatprep.subr.bf16.mxu0 0
  %2037 = vmatpush1.bf16.xpose.msra.mxu0 %v1530
  %2038 = vmatprep.subr.bf16.mxu0 0
  %2039 = vmatpush1.bf16.xpose.msra.mxu0 0
  %2040 = vmatprep.subr.bf16.mxu0 0
  %2041 = vmatpush1.bf16.xpose.msra.mxu0 0
  %2042 = vmatprep.subr.bf16.mxu0 0
  %2043 = vmatpush1.bf16.xpose.msra.mxu0 0
  %2044 = vmatprep.subr.bf16.mxu0 0
  %2045 = vmatpush1.bf16.xpose.msra.mxu0 0
  %2046 = vmatprep.subr.bf16.mxu0 0
  %2047 = vmatpush1.bf16.xpose.msra.mxu0 0
  %2048 = vmatprep.subr.bf16.mxu0 0
  %2049 = vmatpush1.bf16.xpose.msra.mxu0 0
  %2050 = vmatprep.subr.bf16.mxu0 0
  %2051 = vmatpush1.bf16.xpose.msra.mxu0 0
  %2052 = vmatprep.subr.bf16.mxu0 0
  %2053 = vmatpush1.bf16.xpose.msra.mxu0 0
  %2054 = vmatprep.subr.bf16.mxu0 0
  %2055 = vmatpush1.bf16.xpose.msra.mxu0 0
  %2056 = vmatprep.subr.bf16.mxu0 0
  %2057 = vmatpush1.bf16.xpose.msra.mxu0 0
  %2058 = vmatprep.subr.bf16.mxu0 0
  %2059 = vmatpush1.bf16.xpose.msra.mxu0 0
  %2060 = vmatprep.subr.bf16.mxu0 0
  %2061 = vmatpush1.bf16.xpose.msra.mxu0 0
  %2062 = vmatprep.subr.bf16.mxu0 0
  %2063 = vmatpush1.bf16.xpose.msra.mxu0 0
  %2064 = vmatprep.subr.bf16.mxu0 0
  %2065 = vmatpush1.bf16.xpose.msra.mxu0 0
  %2066 = vmatprep.subr.bf16.mxu0 0
  %2067 = vmatpush1.bf16.xpose.msra.mxu0 0
  %2068 = vmatprep.mubr.bf16.mxu0 0
  %2069 = vmatmul.mubr.bf16.gmra.mrb[0].mxu0 %v2031
  %v2070 = vpop.f32.mrb[0].mxu0
  %v2071 = vadd.f32 0.0, %v2070
  %v2072 = vpop.f32.mrb[0].mxu0
  %v2073 = vpop.f32.mrb[0].mxu0
  %v2074 = vadd.f32 0.0, %v2073
  %v2075 = vpop.f32.mrb[0].mxu0
  %2076 = vmatprep.mubr.bf16.mxu0 0
  %2077 = vmatmul.mubr.bf16.gmra.mrb[0].mxu0 %v2034
  %v2078 = vpop.f32.mrb[0].mxu0
  %v2079 = vadd.f32 0.0, %v2078
  %v2080 = vpop.f32.mrb[0].mxu0
  %v2081 = vpop.f32.mrb[0].mxu0
  %v2082 = vpop.f32.mrb[0].mxu0
  %2083 = vdwg.mxu0
  %v2084 = vsel %vm952, %v2071, -inf
  %2085 = vmax.xlane.f32.xlu0 %v2084
  %v2086 = vpop.xlane.xlu0 %2085
  %v2087 = vsel %vm952, %v2074, -inf
  %2088 = vmax.xlane.f32.xlu0 %v2087
  %v2089 = vpop.xlane.xlu0 %2088
  %v2090 = vsel %vm959, %v2079, -inf
  %2091 = vmax.xlane.f32.xlu0 %v2090
  %v2092 = vpop.xlane.xlu0 %2091
  %v2093 = vsub.f32 %v2071, %v2086
  %v2094 = vsub.f32 %v2074, %v2089
  %v2095 = vsub.f32 %v2079, %v2092
  %v2096 = vmul.f32 %v2093, 1.442695
  %v2097 = vpow.pop %v2096
  %v2098 = vmul.f32 %v2094, 1.442695
  %v2099 = vpow.pop %v2098
  %v2100 = vmul.f32 %v2095, 1.442695
  %v2101 = vpow.pop %v2100
  %v2102 = vsel %vm952, %v2097, 0.0
  %2103 = vadd.xlane.f32.xlu0 %v2102
  %v2104 = vpop.xlane.xlu0 %2103
  %v2105 = vsel %vm952, %v2099, 0.0
  %2106 = vadd.xlane.f32.xlu0 %v2105
  %v2107 = vpop.xlane.xlu0 %2106
  %v2108 = vsel %vm959, %v2101, 0.0
  %2109 = vadd.xlane.f32.xlu0 %v2108
  %v2110 = vpop.xlane.xlu0 %2109
  %v2111 = vrcp.pop %v2104
  %v2112 = vrcp.pop %v2107
  %v2113 = vrcp.pop %v2110
  %v2114 = vmul.f32 %v2097, %v2111
  %v2115 = vmul.f32 %v2099, %v2112
  %v2116 = vmul.f32 %v2101, %v2113
  %v2117 = vpack.c.bf16 %v2115, %v2114
  %v2118 = vpack.c.bf16 %v2116, %v2116
  %v2119 = vshrl.u32 %v1351, 16
  %v2121 = vrot.slane %v2119, 2
  %v2122 = vshll.u32 %v1351, 16
  %v2124 = vrot.slane %v2122, 3
  %v2125 = vor.u32 %v2121, %v2124
  %v2127 = vsel %vm952, %v2117, 0
  %v2130 = vsel %vm952, %v2118, 0
  %v2133 = vand.u32 %v2125, %v1088
  %2135 = vmatprep.subr.bf16.mxu0 0
  %2136 = vmatpush1.bf16.msra.mxu0 %v2133
  %2137 = vmatprep.subr.bf16.mxu0 0
  %2138 = vmatpush1.bf16.msra.mxu0 0
  %2139 = vmatprep.subr.bf16.mxu0 0
  %2140 = vmatpush1.bf16.msra.mxu0 0
  %2141 = vmatprep.subr.bf16.mxu0 0
  %2142 = vmatpush1.bf16.msra.mxu0 0
  %2143 = vmatprep.subr.bf16.mxu0 0
  %2144 = vmatpush1.bf16.msra.mxu0 0
  %2145 = vmatprep.subr.bf16.mxu0 0
  %2146 = vmatpush1.bf16.msra.mxu0 0
  %2147 = vmatprep.subr.bf16.mxu0 0
  %2148 = vmatpush1.bf16.msra.mxu0 0
  %2149 = vmatprep.subr.bf16.mxu0 0
  %2150 = vmatpush1.bf16.msra.mxu0 0
  %2151 = vmatprep.subr.bf16.mxu0 0
  %2152 = vmatpush1.bf16.msra.mxu0 0
  %2153 = vmatprep.subr.bf16.mxu0 0
  %2154 = vmatpush1.bf16.msra.mxu0 0
  %2155 = vmatprep.subr.bf16.mxu0 0
  %2156 = vmatpush1.bf16.msra.mxu0 0
  %2157 = vmatprep.subr.bf16.mxu0 0
  %2158 = vmatpush1.bf16.msra.mxu0 0
  %2159 = vmatprep.subr.bf16.mxu0 0
  %2160 = vmatpush1.bf16.msra.mxu0 0
  %2161 = vmatprep.subr.bf16.mxu0 0
  %2162 = vmatpush1.bf16.msra.mxu0 0
  %2163 = vmatprep.subr.bf16.mxu0 0
  %2164 = vmatpush1.bf16.msra.mxu0 0
  %2165 = vmatprep.subr.bf16.mxu0 0
  %2166 = vmatpush1.bf16.msra.mxu0 0
  %2167 = vmatprep.mubr.bf16.mxu0 0
  %2168 = vmatmul.mubr.bf16.gmra.mrb[0].mxu0 %v2127
  %v2169 = vpop.f32.mrb[0].mxu0
  %v2170 = vadd.f32 0.0, %v2169
  %v2171 = vpop.f32.mrb[0].mxu0
  %v2172 = vpop.f32.mrb[0].mxu0
  %v2173 = vadd.f32 0.0, %v2172
  %v2174 = vpop.f32.mrb[0].mxu0
  %2175 = vmatprep.mubr.bf16.mxu0 0
  %2176 = vmatmul.mubr.bf16.gmra.mrb[0].mxu0 %v2130
  %v2177 = vpop.f32.mrb[0].mxu0
  %v2178 = vadd.f32 0.0, %v2177
  %v2179 = vpop.f32.mrb[0].mxu0
  %v2180 = vpop.f32.mrb[0].mxu0
  %v2181 = vpop.f32.mrb[0].mxu0
  %2182 = vdwg.mxu0
  %v2183 = vadd.f32 %v2013, %v2170
  %v2184 = vadd.f32 %v2014, %v2173
  %v2185 = vadd.f32 %v2015, %v2178
  %v2189 = vrot.slane %v2183, 7
  %v2190 = vrot.slane %v2184, 7
  %v2191 = vsel %vm33, %v2189, %v2190
  %v2192 = vrot.slane %v2185, 7
  %v2193 = vsel %vm33, %v2190, %v2192
  %v2197 = vsel %vm33, %v1500, %v2189
  %v2198 = vld [vmem:[%s3 + $0x30] sm:$0xf]
  %v2199 = vld [vmem:[%s3 + $0x34] sm:$0xf]
  %v2200 = vld [vmem:[%s3 + $0x38] sm:$0xf]
  %v2201 = vld [vmem:[%s3 + $0x3c] sm:$0xf]
  %v2202 = vpack.c.bf16 %v1499, %v1498
  %v2203 = vpack.c.bf16 %v2191, %v2197
  %v2204 = vpack.c.bf16 %v2193, %v2193
  %v2209 = vunpack.c.l.b16 %v2198
  %v2210 = vunpack.c.l.b16 %v2199
  %v2211 = vunpack.c.l.b16 %v2200
  %v2212 = vunpack.c.l.b16 %v2201
  %v2213 = vpack.c.b16 %v2210, %v2209
  %v2214 = vpack.c.b16 %v2212, %v2211
  %v2218 = vsel %vm149, %v2202, 0
  %v2221 = vsel %vm149, %v2203, 0
  %v2224 = vsel %vm149, %v2204, 0
  %2226 = vmatprep.subr.bf16.mxu0 0
  %2227 = vmatpush1.bf16.msra.mxu0 %v2213
  %2228 = vmatprep.subr.bf16.mxu0 0
  %2229 = vmatpush1.bf16.msra.mxu0 %v2214
  %2230 = vmatprep.subr.bf16.mxu0 0
  %2231 = vmatpush1.bf16.msra.mxu0 0
  %2232 = vmatprep.subr.bf16.mxu0 0
  %2233 = vmatpush1.bf16.msra.mxu0 0
  %2234 = vmatprep.subr.bf16.mxu0 0
  %2235 = vmatpush1.bf16.msra.mxu0 0
  %2236 = vmatprep.subr.bf16.mxu0 0
  %2237 = vmatpush1.bf16.msra.mxu0 0
  %2238 = vmatprep.subr.bf16.mxu0 0
  %2239 = vmatpush1.bf16.msra.mxu0 0
  %2240 = vmatprep.subr.bf16.mxu0 0
  %2241 = vmatpush1.bf16.msra.mxu0 0
  %2242 = vmatprep.subr.bf16.mxu0 0
  %2243 = vmatpush1.bf16.msra.mxu0 0
  %2244 = vmatprep.subr.bf16.mxu0 0
  %2245 = vmatpush1.bf16.msra.mxu0 0
  %2246 = vmatprep.subr.bf16.mxu0 0
  %2247 = vmatpush1.bf16.msra.mxu0 0
  %2248 = vmatprep.subr.bf16.mxu0 0
  %2249 = vmatpush1.bf16.msra.mxu0 0
  %2250 = vmatprep.subr.bf16.mxu0 0
  %2251 = vmatpush1.bf16.msra.mxu0 0
  %2252 = vmatprep.subr.bf16.mxu0 0
  %2253 = vmatpush1.bf16.msra.mxu0 0
  %2254 = vmatprep.subr.bf16.mxu0 0
  %2255 = vmatpush1.bf16.msra.mxu0 0
  %2256 = vmatprep.subr.bf16.mxu0 0
  %2257 = vmatpush1.bf16.msra.mxu0 0
  %2258 = vmatprep.mubr.bf16.mxu0 0
  %2259 = vmatmul.mubr.bf16.gmra.mrb[0].mxu0 %v2218
  %v2260 = vpop.f32.mrb[0].mxu0
  %v2261 = vadd.f32 %v23, %v2260
  %v2262 = vpop.f32.mrb[0].mxu0
  %v2263 = vpop.f32.mrb[0].mxu0
  %v2264 = vadd.f32 %v24, %v2263
  %v2265 = vpop.f32.mrb[0].mxu0
  %2266 = vmatprep.mubr.bf16.mxu0 0
  %2267 = vmatmul.mubr.bf16.gmra.mrb[0].mxu0 %v2221
  %v2268 = vpop.f32.mrb[0].mxu0
  %v2269 = vadd.f32 %v42, %v2268
  %v2270 = vpop.f32.mrb[0].mxu0
  %v2271 = vpop.f32.mrb[0].mxu0
  %v2272 = vadd.f32 %v36, %v2271
  %v2273 = vpop.f32.mrb[0].mxu0
  %2274 = vmatprep.mubr.bf16.mxu0 0
  %2275 = vmatmul.mubr.bf16.gmra.mrb[0].mxu0 %v2224
  %v2276 = vpop.f32.mrb[0].mxu0
  %v2277 = vadd.f32 %v38, %v2276
  %v2278 = vpop.f32.mrb[0].mxu0
  %v2279 = vpop.f32.mrb[0].mxu0
  %v2280 = vpop.f32.mrb[0].mxu0
  %2281 = vdwg.mxu0
  %v2282 = vsel %vm149, %v2261, 0.0
  %2283 = vadd.xlane.f32.xlu0 %v2282
  %v2284 = vpop.xlane.xlu0 %2283
  %v2285 = vsel %vm149, %v2264, 0.0
  %2286 = vadd.xlane.f32.xlu0 %v2285
  %v2287 = vpop.xlane.xlu0 %2286
  %v2288 = vsel %vm149, %v2269, 0.0
  %2289 = vadd.xlane.f32.xlu0 %v2288
  %v2290 = vpop.xlane.xlu0 %2289
  %v2291 = vsel %vm149, %v2272, 0.0
  %2292 = vadd.xlane.f32.xlu0 %v2291
  %v2293 = vpop.xlane.xlu0 %2292
  %v2294 = vsel %vm162, %v2277, 0.0
  %2295 = vadd.xlane.f32.xlu0 %v2294
  %v2296 = vpop.xlane.xlu0 %2295
  %v2297 = vmul.f32 %v2284, %v166
  %v2298 = vmul.f32 %v2287, %v166
  %v2299 = vmul.f32 %v2290, %v166
  %v2300 = vmul.f32 %v2293, %v166
  %v2301 = vmul.f32 %v2296, %v166
  %v2302 = vmul.f32 %v2261, %v2261
  %v2303 = vmul.f32 %v2264, %v2264
  %v2304 = vmul.f32 %v2269, %v2269
  %v2305 = vmul.f32 %v2272, %v2272
  %v2306 = vmul.f32 %v2277, %v2277
  %v2307 = vsel %vm149, %v2302, 0.0
  %2308 = vadd.xlane.f32.xlu0 %v2307
  %v2309 = vpop.xlane.xlu0 %2308
  %v2310 = vsel %vm149, %v2303, 0.0
  %2311 = vadd.xlane.f32.xlu0 %v2310
  %v2312 = vpop.xlane.xlu0 %2311
  %v2313 = vsel %vm149, %v2304, 0.0
  %2314 = vadd.xlane.f32.xlu0 %v2313
  %v2315 = vpop.xlane.xlu0 %2314
  %v2316 = vsel %vm149, %v2305, 0.0
  %2317 = vadd.xlane.f32.xlu0 %v2316
  %v2318 = vpop.xlane.xlu0 %2317
  %v2319 = vsel %vm162, %v2306, 0.0
  %2320 = vadd.xlane.f32.xlu0 %v2319
  %v2321 = vpop.xlane.xlu0 %2320
  %v2322 = vmul.f32 %v2309, %v166
  %v2323 = vmul.f32 %v2312, %v166
  %v2324 = vmul.f32 %v2315, %v166
  %v2325 = vmul.f32 %v2318, %v166
  %v2326 = vmul.f32 %v2321, %v166
  %v2327 = vsub.f32 %v2261, %v2297
  %v2328 = vsub.f32 %v2264, %v2298
  %v2329 = vsub.f32 %v2269, %v2299
  %v2330 = vsub.f32 %v2272, %v2300
  %v2331 = vsub.f32 %v2277, %v2301
  %v2332 = vmul.f32 %v2297, %v2297
  %v2333 = vmul.f32 %v2298, %v2298
  %v2334 = vmul.f32 %v2299, %v2299
  %v2335 = vmul.f32 %v2300, %v2300
  %v2336 = vmul.f32 %v2301, %v2301
  %v2337 = vsub.f32 %v2322, %v2332
  %v2338 = vsub.f32 %v2323, %v2333
  %v2339 = vsub.f32 %v2324, %v2334
  %v2340 = vsub.f32 %v2325, %v2335
  %v2341 = vsub.f32 %v2326, %v2336
  %v2342 = vadd.f32 %v2337, 1e-05
  %v2343 = vadd.f32 %v2338, 1e-05
  %v2344 = vadd.f32 %v2339, 1e-05
  %v2345 = vadd.f32 %v2340, 1e-05
  %v2346 = vadd.f32 %v2341, 1e-05
  %v2347 = vrsqrt.pop %v2342
  %v2348 = vrsqrt.pop %v2343
  %v2349 = vrsqrt.pop %v2344
  %v2350 = vrsqrt.pop %v2345
  %v2351 = vrsqrt.pop %v2346
  %v2352 = vmul.f32 %v2327, %v2347
  %v2353 = vmul.f32 %v2328, %v2348
  %v2354 = vmul.f32 %v2329, %v2349
  %v2355 = vmul.f32 %v2330, %v2350
  %v2356 = vmul.f32 %v2331, %v2351
  %v2357 = vlaneseq
  %v2358 = vshrl.u32 %v2357, 7
  %v2359 = vsub.s32 2, %v2358
  %v2360 = vrot.slane %v18, %v2359
  %v2361 = vmul.f32 %v2352, %v2360
  %v2362 = vmul.f32 %v2353, %v2360
  %v2363 = vmul.f32 %v2354, %v2360
  %v2364 = vmul.f32 %v2355, %v2360
  %v2365 = vmul.f32 %v2356, %v2360
  %v2366 = vlaneseq
  %v2367 = vshrl.u32 %v2366, 7
  %v2368 = vsub.s32 3, %v2367
  %v2369 = vrot.slane %v18, %v2368
  %v2370 = vadd.f32 %v2361, %v2369
  %v2371 = vadd.f32 %v2362, %v2369
  %v2372 = vadd.f32 %v2363, %v2369
  %v2373 = vadd.f32 %v2364, %v2369
  %v2374 = vadd.f32 %v2365, %v2369
  %v2375 = vld [vmem:[%s3 + $0x50] sm:$0xf]
  %v2376 = vld [vmem:[%s3 + $0x54] sm:$0xf]
  %v2377 = vld [vmem:[%s3 + $0x58] sm:$0xf]
  %v2378 = vld [vmem:[%s3 + $0x5c] sm:$0xf]
  %v2379 = vpack.c.bf16 %v2371, %v2370
  %v2380 = vpack.c.bf16 %v2373, %v2372
  %v2381 = vpack.c.bf16 %v2374, %v2374
  %v2382 = vlaneseq
  %v2383 = vshrl.u32 %v2382, 7
  %v2384 = vsub.s32 1, %v2383
  %v2385 = vrot.slane %v21, %v2384
  %v2390 = vunpack.c.l.b16 %v2375
  %v2391 = vunpack.c.l.b16 %v2376
  %v2392 = vunpack.c.l.b16 %v2377
  %v2393 = vunpack.c.l.b16 %v2378
  %v2394 = vpack.c.b16 %v2391, %v2390
  %v2395 = vpack.c.b16 %v2393, %v2392
  %v2399 = vsel %vm149, %v2379, 0
  %v2402 = vsel %vm149, %v2380, 0
  %v2405 = vsel %vm149, %v2381, 0
  %2407 = vmatprep.subr.bf16.mxu0 0
  %2408 = vmatpush1.bf16.msra.mxu0 %v2394
  %2409 = vmatprep.subr.bf16.mxu0 0
  %2410 = vmatpush1.bf16.msra.mxu0 %v2395
  %2411 = vmatprep.subr.bf16.mxu0 0
  %2412 = vmatpush1.bf16.msra.mxu0 0
  %2413 = vmatprep.subr.bf16.mxu0 0
  %2414 = vmatpush1.bf16.msra.mxu0 0
  %2415 = vmatprep.subr.bf16.mxu0 0
  %2416 = vmatpush1.bf16.msra.mxu0 0
  %2417 = vmatprep.subr.bf16.mxu0 0
  %2418 = vmatpush1.bf16.msra.mxu0 0
  %2419 = vmatprep.subr.bf16.mxu0 0
  %2420 = vmatpush1.bf16.msra.mxu0 0
  %2421 = vmatprep.subr.bf16.mxu0 0
  %2422 = vmatpush1.bf16.msra.mxu0 0
  %2423 = vmatprep.subr.bf16.mxu0 0
  %2424 = vmatpush1.bf16.msra.mxu0 0
  %2425 = vmatprep.subr.bf16.mxu0 0
  %2426 = vmatpush1.bf16.msra.mxu0 0
  %2427 = vmatprep.subr.bf16.mxu0 0
  %2428 = vmatpush1.bf16.msra.mxu0 0
  %2429 = vmatprep.subr.bf16.mxu0 0
  %2430 = vmatpush1.bf16.msra.mxu0 0
  %2431 = vmatprep.subr.bf16.mxu0 0
  %2432 = vmatpush1.bf16.msra.mxu0 0
  %2433 = vmatprep.subr.bf16.mxu0 0
  %2434 = vmatpush1.bf16.msra.mxu0 0
  %2435 = vmatprep.subr.bf16.mxu0 0
  %2436 = vmatpush1.bf16.msra.mxu0 0
  %2437 = vmatprep.subr.bf16.mxu0 0
  %2438 = vmatpush1.bf16.msra.mxu0 0
  %2439 = vmatprep.mubr.bf16.mxu0 0
  %2440 = vmatmul.mubr.bf16.gmra.mrb[0].mxu0 %v2399
  %v2441 = vpop.f32.mrb[0].mxu0
  %v2442 = vadd.f32 %v2385, %v2441
  %v2443 = vpop.f32.mrb[0].mxu0
  %v2444 = vpop.f32.mrb[0].mxu0
  %v2445 = vadd.f32 %v2385, %v2444
  %v2446 = vpop.f32.mrb[0].mxu0
  %2447 = vmatprep.mubr.bf16.mxu0 0
  %2448 = vmatmul.mubr.bf16.gmra.mrb[0].mxu0 %v2402
  %v2449 = vpop.f32.mrb[0].mxu0
  %v2450 = vadd.f32 %v2385, %v2449
  %v2451 = vpop.f32.mrb[0].mxu0
  %v2452 = vpop.f32.mrb[0].mxu0
  %v2453 = vadd.f32 %v2385, %v2452
  %v2454 = vpop.f32.mrb[0].mxu0
  %2455 = vmatprep.mubr.bf16.mxu0 0
  %2456 = vmatmul.mubr.bf16.gmra.mrb[0].mxu0 %v2405
  %v2457 = vpop.f32.mrb[0].mxu0
  %v2458 = vadd.f32 %v2385, %v2457
  %v2459 = vpop.f32.mrb[0].mxu0
  %v2460 = vpop.f32.mrb[0].mxu0
  %v2461 = vpop.f32.mrb[0].mxu0
  %2462 = vdwg.mxu0
  %v2468 = vrot.slane %v2442, 7
  %v2469 = vrot.slane %v2445, 7
  %v2470 = vsel %vm33, %v2468, %v2469
  %v2471 = vrot.slane %v2450, 7
  %v2472 = vsel %vm33, %v2469, %v2471
  %v2473 = vrot.slane %v2453, 7
  %v2474 = vsel %vm33, %v2471, %v2473
  %v2475 = vrot.slane %v2458, 7
  %v2476 = vsel %vm33, %v2473, %v2475
  %v2482 = vsel %vm33, 0.0, %v2468
  %v2483 = vsel %vm134, 1, 0
  %v2484 = vsel %vm135, 1, 0
  %v2485 = vsel %vm136, 1, 0
  %v2486 = vsel %vm137, 1, 0
  %v2487 = vsel %vm138, 1, 0
  %vm2488 = vcmp.eq.s32.totalorder %v2483, 1
  %vm2489 = vcmp.eq.s32.totalorder %v2484, 1
  %vm2490 = vcmp.eq.s32.totalorder %v2485, 1
  %vm2491 = vcmp.eq.s32.totalorder %v2486, 1
  %vm2492 = vcmp.eq.s32.totalorder %v2487, 1
  %v2493 = vsel %vm2488, 0.0, %v2482
  %v2494 = vsel %vm2489, 0.0, %v2470
  %v2495 = vsel %vm2490, 0.0, %v2472
  %v2496 = vsel %vm2491, 0.0, %v2474
  %v2497 = vsel %vm2492, 0.0, %v2476
  %v2498 = vrot.slane %v2442, 1
  %v2499 = vrot.slane %v2445, 1
  %v2500 = vsel %vm371, %v2498, %v2499
  %v2501 = vrot.slane %v2450, 1
  %v2502 = vsel %vm371, %v2499, %v2501
  %v2503 = vrot.slane %v2453, 1
  %v2504 = vsel %vm371, %v2501, %v2503
  %v2505 = vrot.slane %v2458, 1
  %v2506 = vsel %vm371, %v2503, %v2505
  %v2512 = vsel %vm33, %v2505, 0.0
  %v2513 = vsel %vm144, 1, 0
  %v2514 = vsel %vm145, 1, 0
  %v2515 = vsel %vm146, 1, 0
  %v2516 = vsel %vm147, 1, 0
  %v2517 = vsel %vm148, 1, 0
  %vm2518 = vcmp.eq.s32.totalorder %v2513, 1
  %vm2519 = vcmp.eq.s32.totalorder %v2514, 1
  %vm2520 = vcmp.eq.s32.totalorder %v2515, 1
  %vm2521 = vcmp.eq.s32.totalorder %v2516, 1
  %vm2522 = vcmp.eq.s32.totalorder %v2517, 1
  %v2523 = vsel %vm2518, 0.0, %v2500
  %v2524 = vsel %vm2519, 0.0, %v2502
  %v2525 = vsel %vm2520, 0.0, %v2504
  %v2526 = vsel %vm2521, 0.0, %v2506
  %v2527 = vsel %vm2522, 0.0, %v2512
  %2533 = vrot.lane.b32.xlu0 %v2493, 32
  %v2534 = vpop.permute.xlu0 %2533
  %2535 = vrot.lane.b32.xlu0 %v2494, 32
  %v2536 = vpop.permute.xlu0 %2535
  %2537 = vrot.lane.b32.xlu0 %v2495, 32
  %v2538 = vpop.permute.xlu0 %2537
  %2539 = vrot.lane.b32.xlu0 %v2496, 32
  %v2540 = vpop.permute.xlu0 %2539
  %2541 = vrot.lane.b32.xlu0 %v2497, 32
  %v2542 = vpop.permute.xlu0 %2541
  %2548 = vrot.lane.b32.xlu0 %v2493, 64
  %v2549 = vpop.permute.xlu0 %2548
  %2550 = vrot.lane.b32.xlu0 %v2494, 64
  %v2551 = vpop.permute.xlu0 %2550
  %2552 = vrot.lane.b32.xlu0 %v2495, 64
  %v2553 = vpop.permute.xlu0 %2552
  %2554 = vrot.lane.b32.xlu0 %v2496, 64
  %v2555 = vpop.permute.xlu0 %2554
  %2556 = vrot.lane.b32.xlu0 %v2497, 64
  %v2557 = vpop.permute.xlu0 %2556
  %2563 = vrot.lane.b32.xlu0 %v2493, 96
  %v2564 = vpop.permute.xlu0 %2563
  %2565 = vrot.lane.b32.xlu0 %v2494, 96
  %v2566 = vpop.permute.xlu0 %2565
  %2567 = vrot.lane.b32.xlu0 %v2495, 96
  %v2568 = vpop.permute.xlu0 %2567
  %2569 = vrot.lane.b32.xlu0 %v2496, 96
  %v2570 = vpop.permute.xlu0 %2569
  %2571 = vrot.lane.b32.xlu0 %v2497, 96
  %v2572 = vpop.permute.xlu0 %2571
  %v2578 = vsel %vm149, %v2493, %v2534
  %v2579 = vsel %vm149, %v2494, %v2536
  %v2580 = vsel %vm149, %v2495, %v2538
  %v2581 = vsel %vm149, %v2496, %v2540
  %v2582 = vsel %vm149, %v2497, %v2542
  %vm2583 = vcmask 523264
  %v2584 = vsel %vm2583, %v2578, %v2549
  %v2585 = vsel %vm2583, %v2579, %v2551
  %v2586 = vsel %vm2583, %v2580, %v2553
  %v2587 = vsel %vm2583, %v2581, %v2555
  %v2588 = vsel %vm2583, %v2582, %v2557
  %vm2589 = vcmask 785408
  %v2590 = vsel %vm2589, %v2584, %v2564
  %v2591 = vsel %vm2589, %v2585, %v2566
  %v2592 = vsel %vm2589, %v2586, %v2568
  %v2593 = vsel %vm2589, %v2587, %v2570
  %v2594 = vsel %vm2589, %v2588, %v2572
  %v2595 = vlaneseq
  %v2596 = vshrl.u32 %v2595, 7
  %v2597 = vsub.s32 0, %v2596
  %v2598 = vrot.slane %v22, %v2597
  %v2599 = vmul.f32 %v2590, %v2598
  %v2600 = vmul.f32 %v2591, %v2598
  %v2601 = vmul.f32 %v2592, %v2598
  %v2602 = vmul.f32 %v2593, %v2598
  %v2603 = vmul.f32 %v2594, %v2598
  %2604 = vrot.lane.b32.xlu0 %v2442, 32
  %v2605 = vpop.permute.xlu0 %2604
  %2606 = vrot.lane.b32.xlu0 %v2445, 32
  %v2607 = vpop.permute.xlu0 %2606
  %2608 = vrot.lane.b32.xlu0 %v2450, 32
  %v2609 = vpop.permute.xlu0 %2608
  %2610 = vrot.lane.b32.xlu0 %v2453, 32
  %v2611 = vpop.permute.xlu0 %2610
  %2612 = vrot.lane.b32.xlu0 %v2458, 32
  %v2613 = vpop.permute.xlu0 %2612
  %2619 = vrot.lane.b32.xlu0 %v2442, 64
  %v2620 = vpop.permute.xlu0 %2619
  %2621 = vrot.lane.b32.xlu0 %v2445, 64
  %v2622 = vpop.permute.xlu0 %2621
  %2623 = vrot.lane.b32.xlu0 %v2450, 64
  %v2624 = vpop.permute.xlu0 %2623
  %2625 = vrot.lane.b32.xlu0 %v2453, 64
  %v2626 = vpop.permute.xlu0 %2625
  %2627 = vrot.lane.b32.xlu0 %v2458, 64
  %v2628 = vpop.permute.xlu0 %2627
  %2634 = vrot.lane.b32.xlu0 %v2442, 96
  %v2635 = vpop.permute.xlu0 %2634
  %2636 = vrot.lane.b32.xlu0 %v2445, 96
  %v2637 = vpop.permute.xlu0 %2636
  %2638 = vrot.lane.b32.xlu0 %v2450, 96
  %v2639 = vpop.permute.xlu0 %2638
  %2640 = vrot.lane.b32.xlu0 %v2453, 96
  %v2641 = vpop.permute.xlu0 %2640
  %2642 = vrot.lane.b32.xlu0 %v2458, 96
  %v2643 = vpop.permute.xlu0 %2642
  %v2649 = vsel %vm149, %v2442, %v2605
  %v2650 = vsel %vm149, %v2445, %v2607
  %v2651 = vsel %vm149, %v2450, %v2609
  %v2652 = vsel %vm149, %v2453, %v2611
  %v2653 = vsel %vm149, %v2458, %v2613
  %v2654 = vsel %vm2583, %v2649, %v2620
  %v2655 = vsel %vm2583, %v2650, %v2622
  %v2656 = vsel %vm2583, %v2651, %v2624
  %v2657 = vsel %vm2583, %v2652, %v2626
  %v2658 = vsel %vm2583, %v2653, %v2628
  %v2659 = vsel %vm2589, %v2654, %v2635
  %v2660 = vsel %vm2589, %v2655, %v2637
  %v2661 = vsel %vm2589, %v2656, %v2639
  %v2662 = vsel %vm2589, %v2657, %v2641
  %v2663 = vsel %vm2589, %v2658, %v2643
  %v2664 = vlaneseq
  %v2665 = vshrl.u32 %v2664, 7
  %v2666 = vsub.s32 1, %v2665
  %v2667 = vrot.slane %v22, %v2666
  %v2668 = vmul.f32 %v2659, %v2667
  %v2669 = vmul.f32 %v2660, %v2667
  %v2670 = vmul.f32 %v2661, %v2667
  %v2671 = vmul.f32 %v2662, %v2667
  %v2672 = vmul.f32 %v2663, %v2667
  %v2673 = vadd.f32 %v2599, %v2668
  %v2674 = vadd.f32 %v2600, %v2669
  %v2675 = vadd.f32 %v2601, %v2670
  %v2676 = vadd.f32 %v2602, %v2671
  %v2677 = vadd.f32 %v2603, %v2672
  %2683 = vrot.lane.b32.xlu0 %v2523, 32
  %v2684 = vpop.permute.xlu0 %2683
  %2685 = vrot.lane.b32.xlu0 %v2524, 32
  %v2686 = vpop.permute.xlu0 %2685
  %2687 = vrot.lane.b32.xlu0 %v2525, 32
  %v2688 = vpop.permute.xlu0 %2687
  %2689 = vrot.lane.b32.xlu0 %v2526, 32
  %v2690 = vpop.permute.xlu0 %2689
  %2691 = vrot.lane.b32.xlu0 %v2527, 32
  %v2692 = vpop.permute.xlu0 %2691
  %2698 = vrot.lane.b32.xlu0 %v2523, 64
  %v2699 = vpop.permute.xlu0 %2698
  %2700 = vrot.lane.b32.xlu0 %v2524, 64
  %v2701 = vpop.permute.xlu0 %2700
  %2702 = vrot.lane.b32.xlu0 %v2525, 64
  %v2703 = vpop.permute.xlu0 %2702
  %2704 = vrot.lane.b32.xlu0 %v2526, 64
  %v2705 = vpop.permute.xlu0 %2704
  %2706 = vrot.lane.b32.xlu0 %v2527, 64
  %v2707 = vpop.permute.xlu0 %2706
  %2713 = vrot.lane.b32.xlu0 %v2523, 96
  %v2714 = vpop.permute.xlu0 %2713
  %2715 = vrot.lane.b32.xlu0 %v2524, 96
  %v2716 = vpop.permute.xlu0 %2715
  %2717 = vrot.lane.b32.xlu0 %v2525, 96
  %v2718 = vpop.permute.xlu0 %2717
  %2719 = vrot.lane.b32.xlu0 %v2526, 96
  %v2720 = vpop.permute.xlu0 %2719
  %2721 = vrot.lane.b32.xlu0 %v2527, 96
  %v2722 = vpop.permute.xlu0 %2721
  %v2728 = vsel %vm149, %v2523, %v2684
  %v2729 = vsel %vm149, %v2524, %v2686
  %v2730 = vsel %vm149, %v2525, %v2688
  %v2731 = vsel %vm149, %v2526, %v2690
  %v2732 = vsel %vm149, %v2527, %v2692
  %v2733 = vsel %vm2583, %v2728, %v2699
  %v2734 = vsel %vm2583, %v2729, %v2701
  %v2735 = vsel %vm2583, %v2730, %v2703
  %v2736 = vsel %vm2583, %v2731, %v2705
  %v2737 = vsel %vm2583, %v2732, %v2707
  %v2738 = vsel %vm2589, %v2733, %v2714
  %v2739 = vsel %vm2589, %v2734, %v2716
  %v2740 = vsel %vm2589, %v2735, %v2718
  %v2741 = vsel %vm2589, %v2736, %v2720
  %v2742 = vsel %vm2589, %v2737, %v2722
  %v2743 = vlaneseq
  %v2744 = vshrl.u32 %v2743, 7
  %v2745 = vsub.s32 2, %v2744
  %v2746 = vrot.slane %v22, %v2745
  %v2747 = vmul.f32 %v2738, %v2746
  %v2748 = vmul.f32 %v2739, %v2746
  %v2749 = vmul.f32 %v2740, %v2746
  %v2750 = vmul.f32 %v2741, %v2746
  %v2751 = vmul.f32 %v2742, %v2746
  %v2752 = vadd.f32 %v2673, %v2747
  %v2753 = vadd.f32 %v2674, %v2748
  %v2754 = vadd.f32 %v2675, %v2749
  %v2755 = vadd.f32 %v2676, %v2750
  %v2756 = vadd.f32 %v2677, %v2751
  %v2757 = vlaneseq
  %v2758 = vshrl.u32 %v2757, 7
  %v2759 = vsub.s32 3, %v2758
  %v2760 = vrot.slane %v22, %v2759
  %v2761 = vadd.f32 %v2752, %v2760
  %v2762 = vadd.f32 %v2753, %v2760
  %v2763 = vadd.f32 %v2754, %v2760
  %v2764 = vadd.f32 %v2755, %v2760
  %v2765 = vadd.f32 %v2756, %v2760
  %v2766 = vmul.f32 %v2761, 0.5
  %v2767 = vmul.f32 %v2762, 0.5
  %v2768 = vmul.f32 %v2763, 0.5
  %v2769 = vmul.f32 %v2764, 0.5
  %v2770 = vmul.f32 %v2765, 0.5
  %v2771 = vmul.f32 %v2761, 0.044715
  %v2772 = vmul.f32 %v2762, 0.044715
  %v2773 = vmul.f32 %v2763, 0.044715
  %v2774 = vmul.f32 %v2764, 0.044715
  %v2775 = vmul.f32 %v2765, 0.044715
  %v2776 = vmul.f32 %v2771, %v2761
  %v2777 = vmul.f32 %v2772, %v2762
  %v2778 = vmul.f32 %v2773, %v2763
  %v2779 = vmul.f32 %v2774, %v2764
  %v2780 = vmul.f32 %v2775, %v2765
  %v2781 = vmul.f32 %v2776, %v2761
  %v2782 = vmul.f32 %v2777, %v2762
  %v2783 = vmul.f32 %v2778, %v2763
  %v2784 = vmul.f32 %v2779, %v2764
  %v2785 = vmul.f32 %v2780, %v2765
  %v2786 = vadd.f32 %v2761, %v2781
  %v2787 = vadd.f32 %v2762, %v2782
  %v2788 = vadd.f32 %v2763, %v2783
  %v2789 = vadd.f32 %v2764, %v2784
  %v2790 = vadd.f32 %v2765, %v2785
  %v2791 = vmul.f32 %v2786, 0.7978846
  %v2792 = vmul.f32 %v2787, 0.7978846
  %v2793 = vmul.f32 %v2788, 0.7978846
  %v2794 = vmul.f32 %v2789, 0.7978846
  %v2795 = vmul.f32 %v2790, 0.7978846
  %v2796 = vtanh.pop %v2791
  %v2797 = vtanh.pop %v2792
  %v2798 = vtanh.pop %v2793
  %v2799 = vtanh.pop %v2794
  %v2800 = vtanh.pop %v2795
  %v2801 = vadd.f32 %v2796, 1.0
  %v2802 = vadd.f32 %v2797, 1.0
  %v2803 = vadd.f32 %v2798, 1.0
  %v2804 = vadd.f32 %v2799, 1.0
  %v2805 = vadd.f32 %v2800, 1.0
  %v2806 = vmul.f32 %v2766, %v2801
  %v2807 = vmul.f32 %v2767, %v2802
  %v2808 = vmul.f32 %v2768, %v2803
  %v2809 = vmul.f32 %v2769, %v2804
  %v2810 = vmul.f32 %v2770, %v2805
  %v2811 = vpack.c.bf16 %v2807, %v2806
  %v2812 = vpack.c.bf16 %v2809, %v2808
  %v2813 = vpack.c.bf16 %v2810, %v2810
  %v2814 = vld [vmem:[%s3 + $0x60] sm:$0xf]
  %v2815 = vld [vmem:[%s3 + $0x64] sm:$0xf]
  %v2816 = vld [vmem:[%s3 + $0x68] sm:$0xf]
  %v2817 = vld [vmem:[%s3 + $0x6c] sm:$0xf]
  %v2818 = vld [vmem:[%s3 + $0x70] sm:$0xf]
  %v2819 = vld [vmem:[%s3 + $0x74] sm:$0xf]
  %v2820 = vld [vmem:[%s3 + $0x78] sm:$0xf]
  %v2821 = vld [vmem:[%s3 + $0x7c] sm:$0xf]
  %v2822 = vld [vmem:[%s3 + $0x80] sm:$0xf]
  %v2823 = vld [vmem:[%s3 + $0x84] sm:$0xf]
  %v2824 = vld [vmem:[%s3 + $0x88] sm:$0xf]
  %v2825 = vld [vmem:[%s3 + $0x8c] sm:$0xf]
  %v2826 = vld [vmem:[%s3 + $0x90] sm:$0xf]
  %v2827 = vld [vmem:[%s3 + $0x94] sm:$0xf]
  %v2828 = vld [vmem:[%s3 + $0x98] sm:$0xf]
  %v2829 = vld [vmem:[%s3 + $0x9c] sm:$0xf]
  %v2830 = vlaneseq
  %v2831 = vshrl.u32 %v2830, 7
  %v2832 = vsub.s32 2, %v2831
  %v2833 = vrot.slane %v21, %v2832
  %v2850 = vunpack.c.l.b16 %v2814
  %v2851 = vunpack.c.l.b16 %v2815
  %v2852 = vunpack.c.l.b16 %v2816
  %v2853 = vunpack.c.l.b16 %v2817
  %v2854 = vunpack.c.l.b16 %v2818
  %v2855 = vunpack.c.l.b16 %v2819
  %v2856 = vunpack.c.l.b16 %v2820
  %v2857 = vunpack.c.l.b16 %v2821
  %v2858 = vunpack.c.l.b16 %v2822
  %v2859 = vunpack.c.l.b16 %v2823
  %v2860 = vunpack.c.l.b16 %v2824
  %v2861 = vunpack.c.l.b16 %v2825
  %v2862 = vunpack.c.l.b16 %v2826
  %v2863 = vunpack.c.l.b16 %v2827
  %v2864 = vunpack.c.l.b16 %v2828
  %v2865 = vunpack.c.l.b16 %v2829
  %v2866 = vpack.c.b16 %v2851, %v2850
  %v2867 = vpack.c.b16 %v2853, %v2852
  %v2868 = vpack.c.b16 %v2855, %v2854
  %v2869 = vpack.c.b16 %v2857, %v2856
  %v2870 = vpack.c.b16 %v2859, %v2858
  %v2871 = vpack.c.b16 %v2861, %v2860
  %v2872 = vpack.c.b16 %v2863, %v2862
  %v2873 = vpack.c.b16 %v2865, %v2864
  %2882 = vmatprep.subr.bf16.mxu0 0
  %2883 = vmatpush1.bf16.msra.mxu0 %v2866
  %2884 = vmatprep.subr.bf16.mxu0 0
  %2885 = vmatpush1.bf16.msra.mxu0 %v2867
  %2886 = vmatprep.subr.bf16.mxu0 0
  %2887 = vmatpush1.bf16.msra.mxu0 %v2868
  %2888 = vmatprep.subr.bf16.mxu0 0
  %2889 = vmatpush1.bf16.msra.mxu0 %v2869
  %2890 = vmatprep.subr.bf16.mxu0 0
  %2891 = vmatpush1.bf16.msra.mxu0 %v2870
  %2892 = vmatprep.subr.bf16.mxu0 0
  %2893 = vmatpush1.bf16.msra.mxu0 %v2871
  %2894 = vmatprep.subr.bf16.mxu0 0
  %2895 = vmatpush1.bf16.msra.mxu0 %v2872
  %2896 = vmatprep.subr.bf16.mxu0 0
  %2897 = vmatpush1.bf16.msra.mxu0 %v2873
  %2898 = vmatprep.subr.bf16.mxu0 0
  %2899 = vmatpush1.bf16.msra.mxu0 0
  %2900 = vmatprep.subr.bf16.mxu0 0
  %2901 = vmatpush1.bf16.msra.mxu0 0
  %2902 = vmatprep.subr.bf16.mxu0 0
  %2903 = vmatpush1.bf16.msra.mxu0 0
  %2904 = vmatprep.subr.bf16.mxu0 0
  %2905 = vmatpush1.bf16.msra.mxu0 0
  %2906 = vmatprep.subr.bf16.mxu0 0
  %2907 = vmatpush1.bf16.msra.mxu0 0
  %2908 = vmatprep.subr.bf16.mxu0 0
  %2909 = vmatpush1.bf16.msra.mxu0 0
  %2910 = vmatprep.subr.bf16.mxu0 0
  %2911 = vmatpush1.bf16.msra.mxu0 0
  %2912 = vmatprep.subr.bf16.mxu0 0
  %2913 = vmatpush1.bf16.msra.mxu0 0
  %2914 = vmatprep.mubr.bf16.mxu0 0
  %2915 = vmatmul.mubr.bf16.gmra.mrb[0].mxu0 %v2811
  %v2916 = vpop.f32.mrb[0].mxu0
  %v2917 = vadd.f32 %v2833, %v2916
  %v2918 = vpop.f32.mrb[0].mxu0
  %v2919 = vpop.f32.mrb[0].mxu0
  %v2920 = vadd.f32 %v2833, %v2919
  %v2921 = vpop.f32.mrb[0].mxu0
  %2922 = vmatprep.mubr.bf16.mxu0 0
  %2923 = vmatmul.mubr.bf16.gmra.mrb[0].mxu0 %v2812
  %v2924 = vpop.f32.mrb[0].mxu0
  %v2925 = vadd.f32 %v2833, %v2924
  %v2926 = vpop.f32.mrb[0].mxu0
  %v2927 = vpop.f32.mrb[0].mxu0
  %v2928 = vadd.f32 %v2833, %v2927
  %v2929 = vpop.f32.mrb[0].mxu0
  %2930 = vmatprep.mubr.bf16.mxu0 0
  %2931 = vmatmul.mubr.bf16.gmra.mrb[0].mxu0 %v2813
  %v2932 = vpop.f32.mrb[0].mxu0
  %v2933 = vadd.f32 %v2833, %v2932
  %v2934 = vpop.f32.mrb[0].mxu0
  %v2935 = vpop.f32.mrb[0].mxu0
  %v2936 = vpop.f32.mrb[0].mxu0
  %2937 = vdwg.mxu0
  %v2938 = vsel %vm129, 1, 0
  %v2939 = vsel %vm130, 1, 0
  %v2940 = vsel %vm131, 1, 0
  %v2941 = vsel %vm132, 1, 0
  %v2942 = vsel %vm133, 1, 0
  %vm2943 = vcmp.eq.s32.totalorder %v2938, 1
  %vm2944 = vcmp.eq.s32.totalorder %v2939, 1
  %vm2945 = vcmp.eq.s32.totalorder %v2940, 1
  %vm2946 = vcmp.eq.s32.totalorder %v2941, 1
  %vm2947 = vcmp.eq.s32.totalorder %v2942, 1
  %v2948 = vsel %vm2943, %v2370, %v2917
  %v2949 = vsel %vm2944, %v2371, %v2920
  %v2950 = vsel %vm2945, %v2372, %v2925
  %v2951 = vsel %vm2946, %v2373, %v2928
  %v2952 = vsel %vm2947, %v2374, %v2933
  %v2953 = vadd.f32 %v2948, %v2261
  %v2954 = vadd.f32 %v2949, %v2264
  %v2955 = vadd.f32 %v2950, %v2269
  %v2956 = vadd.f32 %v2951, %v2272
  %v2957 = vadd.f32 %v2952, %v2277
  %v2958 = vsel %vm149, %v2953, 0.0
  %2959 = vadd.xlane.f32.xlu0 %v2958
  %v2960 = vpop.xlane.xlu0 %2959
  %v2961 = vsel %vm149, %v2954, 0.0
  %2962 = vadd.xlane.f32.xlu0 %v2961
  %v2963 = vpop.xlane.xlu0 %2962
  %v2964 = vsel %vm149, %v2955, 0.0
  %2965 = vadd.xlane.f32.xlu0 %v2964
  %v2966 = vpop.xlane.xlu0 %2965
  %v2967 = vsel %vm149, %v2956, 0.0
  %2968 = vadd.xlane.f32.xlu0 %v2967
  %v2969 = vpop.xlane.xlu0 %2968
  %v2970 = vsel %vm162, %v2957, 0.0
  %2971 = vadd.xlane.f32.xlu0 %v2970
  %v2972 = vpop.xlane.xlu0 %2971
  %v2973 = vmul.f32 %v2960, %v166
  %v2974 = vmul.f32 %v2963, %v166
  %v2975 = vmul.f32 %v2966, %v166
  %v2976 = vmul.f32 %v2969, %v166
  %v2977 = vmul.f32 %v2972, %v166
  %v2978 = vmul.f32 %v2953, %v2953
  %v2979 = vmul.f32 %v2954, %v2954
  %v2980 = vmul.f32 %v2955, %v2955
  %v2981 = vmul.f32 %v2956, %v2956
  %v2982 = vmul.f32 %v2957, %v2957
  %v2983 = vsel %vm149, %v2978, 0.0
  %2984 = vadd.xlane.f32.xlu0 %v2983
  %v2985 = vpop.xlane.xlu0 %2984
  %v2986 = vsel %vm149, %v2979, 0.0
  %2987 = vadd.xlane.f32.xlu0 %v2986
  %v2988 = vpop.xlane.xlu0 %2987
  %v2989 = vsel %vm149, %v2980, 0.0
  %2990 = vadd.xlane.f32.xlu0 %v2989
  %v2991 = vpop.xlane.xlu0 %2990
  %v2992 = vsel %vm149, %v2981, 0.0
  %2993 = vadd.xlane.f32.xlu0 %v2992
  %v2994 = vpop.xlane.xlu0 %2993
  %v2995 = vsel %vm162, %v2982, 0.0
  %2996 = vadd.xlane.f32.xlu0 %v2995
  %v2997 = vpop.xlane.xlu0 %2996
  %v2998 = vmul.f32 %v2985, %v166
  %v2999 = vmul.f32 %v2988, %v166
  %v3000 = vmul.f32 %v2991, %v166
  %v3001 = vmul.f32 %v2994, %v166
  %v3002 = vmul.f32 %v2997, %v166
  %v3003 = vsub.f32 %v2953, %v2973
  %v3004 = vsub.f32 %v2954, %v2974
  %v3005 = vsub.f32 %v2955, %v2975
  %v3006 = vsub.f32 %v2956, %v2976
  %v3007 = vsub.f32 %v2957, %v2977
  %v3008 = vmul.f32 %v2973, %v2973
  %v3009 = vmul.f32 %v2974, %v2974
  %v3010 = vmul.f32 %v2975, %v2975
  %v3011 = vmul.f32 %v2976, %v2976
  %v3012 = vmul.f32 %v2977, %v2977
  %v3013 = vsub.f32 %v2998, %v3008
  %v3014 = vsub.f32 %v2999, %v3009
  %v3015 = vsub.f32 %v3000, %v3010
  %v3016 = vsub.f32 %v3001, %v3011
  %v3017 = vsub.f32 %v3002, %v3012
  %v3018 = vadd.f32 %v3013, 1e-05
  %v3019 = vadd.f32 %v3014, 1e-05
  %v3020 = vadd.f32 %v3015, 1e-05
  %v3021 = vadd.f32 %v3016, 1e-05
  %v3022 = vadd.f32 %v3017, 1e-05
  %v3023 = vrsqrt.pop %v3018
  %v3024 = vrsqrt.pop %v3019
  %v3025 = vrsqrt.pop %v3020
  %v3026 = vrsqrt.pop %v3021
  %v3027 = vrsqrt.pop %v3022
  %v3028 = vmul.f32 %v3003, %v3023
  %v3029 = vmul.f32 %v3004, %v3024
  %v3030 = vmul.f32 %v3005, %v3025
  %v3031 = vmul.f32 %v3006, %v3026
  %v3032 = vmul.f32 %v3007, %v3027
  %v3033 = vlaneseq
  %v3034 = vshrl.u32 %v3033, 7
  %v3035 = vsub.s32 4, %v3034
  %v3036 = vrot.slane %v18, %v3035
  %v3037 = vmul.f32 %v3028, %v3036
  %v3038 = vmul.f32 %v3029, %v3036
  %v3039 = vmul.f32 %v3030, %v3036
  %v3040 = vmul.f32 %v3031, %v3036
  %v3041 = vmul.f32 %v3032, %v3036
  %v3042 = vlaneseq
  %v3043 = vshrl.u32 %v3042, 7
  %v3044 = vsub.s32 5, %v3043
  %v3045 = vrot.slane %v18, %v3044
  %v3046 = vadd.f32 %v3037, %v3045
  %v3047 = vadd.f32 %v3038, %v3045
  %v3048 = vadd.f32 %v3039, %v3045
  %v3049 = vadd.f32 %v3040, %v3045
  %v3050 = vadd.f32 %v3041, %v3045
  %v3051 = vld [vmem:[%s3 + $0xa0] sm:$0xf]
  %v3052 = vld [vmem:[%s3 + $0xa4] sm:$0xf]
  %v3053 = vld [vmem:[%s3 + $0xa8] sm:$0xf]
  %v3054 = vld [vmem:[%s3 + $0xac] sm:$0xf]
  %v3055 = vpack.c.bf16 %v3047, %v3046
  %v3056 = vpack.c.bf16 %v3049, %v3048
  %v3057 = vpack.c.bf16 %v3050, %v3050
  %v3058 = vlaneseq
  %v3059 = vshrl.u32 %v3058, 7
  %v3060 = vsub.s32 3, %v3059
  %v3061 = vrot.slane %v21, %v3060
  %v3066 = vunpack.c.l.b16 %v3051
  %v3067 = vunpack.c.l.b16 %v3052
  %v3068 = vunpack.c.l.b16 %v3053
  %v3069 = vunpack.c.l.b16 %v3054
  %v3070 = vpack.c.b16 %v3067, %v3066
  %v3071 = vpack.c.b16 %v3069, %v3068
  %v3075 = vsel %vm149, %v3055, 0
  %v3078 = vsel %vm149, %v3056, 0
  %v3081 = vsel %vm149, %v3057, 0
  %3083 = vmatprep.subr.bf16.mxu0 0
  %3084 = vmatpush1.bf16.msra.mxu0 %v3070
  %3085 = vmatprep.subr.bf16.mxu0 0
  %3086 = vmatpush1.bf16.msra.mxu0 %v3071
  %3087 = vmatprep.subr.bf16.mxu0 0
  %3088 = vmatpush1.bf16.msra.mxu0 0
  %3089 = vmatprep.subr.bf16.mxu0 0
  %3090 = vmatpush1.bf16.msra.mxu0 0
  %3091 = vmatprep.subr.bf16.mxu0 0
  %3092 = vmatpush1.bf16.msra.mxu0 0
  %3093 = vmatprep.subr.bf16.mxu0 0
  %3094 = vmatpush1.bf16.msra.mxu0 0
  %3095 = vmatprep.subr.bf16.mxu0 0
  %3096 = vmatpush1.bf16.msra.mxu0 0
  %3097 = vmatprep.subr.bf16.mxu0 0
  %3098 = vmatpush1.bf16.msra.mxu0 0
  %3099 = vmatprep.subr.bf16.mxu0 0
  %3100 = vmatpush1.bf16.msra.mxu0 0
  %3101 = vmatprep.subr.bf16.mxu0 0
  %3102 = vmatpush1.bf16.msra.mxu0 0
  %3103 = vmatprep.subr.bf16.mxu0 0
  %3104 = vmatpush1.bf16.msra.mxu0 0
  %3105 = vmatprep.subr.bf16.mxu0 0
  %3106 = vmatpush1.bf16.msra.mxu0 0
  %3107 = vmatprep.subr.bf16.mxu0 0
  %3108 = vmatpush1.bf16.msra.mxu0 0
  %3109 = vmatprep.subr.bf16.mxu0 0
  %3110 = vmatpush1.bf16.msra.mxu0 0
  %3111 = vmatprep.subr.bf16.mxu0 0
  %3112 = vmatpush1.bf16.msra.mxu0 0
  %3113 = vmatprep.subr.bf16.mxu0 0
  %3114 = vmatpush1.bf16.msra.mxu0 0
  %3115 = vmatprep.mubr.bf16.mxu0 0
  %3116 = vmatmul.mubr.bf16.gmra.mrb[0].mxu0 %v3075
  %v3117 = vpop.f32.mrb[0].mxu0
  %v3118 = vadd.f32 %v3061, %v3117
  %v3119 = vpop.f32.mrb[0].mxu0
  %v3120 = vpop.f32.mrb[0].mxu0
  %v3121 = vadd.f32 %v3061, %v3120
  %v3122 = vpop.f32.mrb[0].mxu0
  %3123 = vmatprep.mubr.bf16.mxu0 0
  %3124 = vmatmul.mubr.bf16.gmra.mrb[0].mxu0 %v3078
  %v3125 = vpop.f32.mrb[0].mxu0
  %v3126 = vadd.f32 %v3061, %v3125
  %v3127 = vpop.f32.mrb[0].mxu0
  %v3128 = vpop.f32.mrb[0].mxu0
  %v3129 = vadd.f32 %v3061, %v3128
  %v3130 = vpop.f32.mrb[0].mxu0
  %3131 = vmatprep.mubr.bf16.mxu0 0
  %3132 = vmatmul.mubr.bf16.gmra.mrb[0].mxu0 %v3081
  %v3133 = vpop.f32.mrb[0].mxu0
  %v3134 = vadd.f32 %v3061, %v3133
  %v3135 = vpop.f32.mrb[0].mxu0
  %v3136 = vpop.f32.mrb[0].mxu0
  %v3137 = vpop.f32.mrb[0].mxu0
  %3138 = vdwg.mxu0
  %v3144 = vrot.slane %v3118, 7
  %v3145 = vrot.slane %v3121, 7
  %v3146 = vsel %vm33, %v3144, %v3145
  %v3147 = vrot.slane %v3126, 7
  %v3148 = vsel %vm33, %v3145, %v3147
  %v3149 = vrot.slane %v3129, 7
  %v3150 = vsel %vm33, %v3147, %v3149
  %v3151 = vrot.slane %v3134, 7
  %v3152 = vsel %vm33, %v3149, %v3151
  %v3158 = vsel %vm33, 0.0, %v3144
  %v3159 = vsel %vm2488, 0.0, %v3158
  %v3160 = vsel %vm2489, 0.0, %v3146
  %v3161 = vsel %vm2490, 0.0, %v3148
  %v3162 = vsel %vm2491, 0.0, %v3150
  %v3163 = vsel %vm2492, 0.0, %v3152
  %v3164 = vrot.slane %v3118, 1
  %v3165 = vrot.slane %v3121, 1
  %v3166 = vsel %vm371, %v3164, %v3165
  %v3167 = vrot.slane %v3126, 1
  %v3168 = vsel %vm371, %v3165, %v3167
  %v3169 = vrot.slane %v3129, 1
  %v3170 = vsel %vm371, %v3167, %v3169
  %v3171 = vrot.slane %v3134, 1
  %v3172 = vsel %vm371, %v3169, %v3171
  %v3178 = vsel %vm33, %v3171, 0.0
  %v3179 = vsel %vm2518, 0.0, %v3166
  %v3180 = vsel %vm2519, 0.0, %v3168
  %v3181 = vsel %vm2520, 0.0, %v3170
  %v3182 = vsel %vm2521, 0.0, %v3172
  %v3183 = vsel %vm2522, 0.0, %v3178
  %3189 = vrot.lane.b32.xlu0 %v3159, 32
  %v3190 = vpop.permute.xlu0 %3189
  %3191 = vrot.lane.b32.xlu0 %v3160, 32
  %v3192 = vpop.permute.xlu0 %3191
  %3193 = vrot.lane.b32.xlu0 %v3161, 32
  %v3194 = vpop.permute.xlu0 %3193
  %3195 = vrot.lane.b32.xlu0 %v3162, 32
  %v3196 = vpop.permute.xlu0 %3195
  %3197 = vrot.lane.b32.xlu0 %v3163, 32
  %v3198 = vpop.permute.xlu0 %3197
  %3204 = vrot.lane.b32.xlu0 %v3159, 64
  %v3205 = vpop.permute.xlu0 %3204
  %3206 = vrot.lane.b32.xlu0 %v3160, 64
  %v3207 = vpop.permute.xlu0 %3206
  %3208 = vrot.lane.b32.xlu0 %v3161, 64
  %v3209 = vpop.permute.xlu0 %3208
  %3210 = vrot.lane.b32.xlu0 %v3162, 64
  %v3211 = vpop.permute.xlu0 %3210
  %3212 = vrot.lane.b32.xlu0 %v3163, 64
  %v3213 = vpop.permute.xlu0 %3212
  %3219 = vrot.lane.b32.xlu0 %v3159, 96
  %v3220 = vpop.permute.xlu0 %3219
  %3221 = vrot.lane.b32.xlu0 %v3160, 96
  %v3222 = vpop.permute.xlu0 %3221
  %3223 = vrot.lane.b32.xlu0 %v3161, 96
  %v3224 = vpop.permute.xlu0 %3223
  %3225 = vrot.lane.b32.xlu0 %v3162, 96
  %v3226 = vpop.permute.xlu0 %3225
  %3227 = vrot.lane.b32.xlu0 %v3163, 96
  %v3228 = vpop.permute.xlu0 %3227
  %v3234 = vsel %vm149, %v3159, %v3190
  %v3235 = vsel %vm149, %v3160, %v3192
  %v3236 = vsel %vm149, %v3161, %v3194
  %v3237 = vsel %vm149, %v3162, %v3196
  %v3238 = vsel %vm149, %v3163, %v3198
  %v3239 = vsel %vm2583, %v3234, %v3205
  %v3240 = vsel %vm2583, %v3235, %v3207
  %v3241 = vsel %vm2583, %v3236, %v3209
  %v3242 = vsel %vm2583, %v3237, %v3211
  %v3243 = vsel %vm2583, %v3238, %v3213
  %v3244 = vsel %vm2589, %v3239, %v3220
  %v3245 = vsel %vm2589, %v3240, %v3222
  %v3246 = vsel %vm2589, %v3241, %v3224
  %v3247 = vsel %vm2589, %v3242, %v3226
  %v3248 = vsel %vm2589, %v3243, %v3228
  %v3249 = vlaneseq
  %v3250 = vshrl.u32 %v3249, 7
  %v3251 = vsub.s32 4, %v3250
  %v3252 = vrot.slane %v22, %v3251
  %v3253 = vmul.f32 %v3244, %v3252
  %v3254 = vmul.f32 %v3245, %v3252
  %v3255 = vmul.f32 %v3246, %v3252
  %v3256 = vmul.f32 %v3247, %v3252
  %v3257 = vmul.f32 %v3248, %v3252
  %3258 = vrot.lane.b32.xlu0 %v3118, 32
  %v3259 = vpop.permute.xlu0 %3258
  %3260 = vrot.lane.b32.xlu0 %v3121, 32
  %v3261 = vpop.permute.xlu0 %3260
  %3262 = vrot.lane.b32.xlu0 %v3126, 32
  %v3263 = vpop.permute.xlu0 %3262
  %3264 = vrot.lane.b32.xlu0 %v3129, 32
  %v3265 = vpop.permute.xlu0 %3264
  %3266 = vrot.lane.b32.xlu0 %v3134, 32
  %v3267 = vpop.permute.xlu0 %3266
  %3273 = vrot.lane.b32.xlu0 %v3118, 64
  %v3274 = vpop.permute.xlu0 %3273
  %3275 = vrot.lane.b32.xlu0 %v3121, 64
  %v3276 = vpop.permute.xlu0 %3275
  %3277 = vrot.lane.b32.xlu0 %v3126, 64
  %v3278 = vpop.permute.xlu0 %3277
  %3279 = vrot.lane.b32.xlu0 %v3129, 64
  %v3280 = vpop.permute.xlu0 %3279
  %3281 = vrot.lane.b32.xlu0 %v3134, 64
  %v3282 = vpop.permute.xlu0 %3281
  %3288 = vrot.lane.b32.xlu0 %v3118, 96
  %v3289 = vpop.permute.xlu0 %3288
  %3290 = vrot.lane.b32.xlu0 %v3121, 96
  %v3291 = vpop.permute.xlu0 %3290
  %3292 = vrot.lane.b32.xlu0 %v3126, 96
  %v3293 = vpop.permute.xlu0 %3292
  %3294 = vrot.lane.b32.xlu0 %v3129, 96
  %v3295 = vpop.permute.xlu0 %3294
  %3296 = vrot.lane.b32.xlu0 %v3134, 96
  %v3297 = vpop.permute.xlu0 %3296
  %v3303 = vsel %vm149, %v3118, %v3259
  %v3304 = vsel %vm149, %v3121, %v3261
  %v3305 = vsel %vm149, %v3126, %v3263
  %v3306 = vsel %vm149, %v3129, %v3265
  %v3307 = vsel %vm149, %v3134, %v3267
  %v3308 = vsel %vm2583, %v3303, %v3274
  %v3309 = vsel %vm2583, %v3304, %v3276
  %v3310 = vsel %vm2583, %v3305, %v3278
  %v3311 = vsel %vm2583, %v3306, %v3280
  %v3312 = vsel %vm2583, %v3307, %v3282
  %v3313 = vsel %vm2589, %v3308, %v3289
  %v3314 = vsel %vm2589, %v3309, %v3291
  %v3315 = vsel %vm2589, %v3310, %v3293
  %v3316 = vsel %vm2589, %v3311, %v3295
  %v3317 = vsel %vm2589, %v3312, %v3297
  %v3318 = vlaneseq
  %v3319 = vshrl.u32 %v3318, 7
  %v3320 = vsub.s32 5, %v3319
  %v3321 = vrot.slane %v22, %v3320
  %v3322 = vmul.f32 %v3313, %v3321
  %v3323 = vmul.f32 %v3314, %v3321
  %v3324 = vmul.f32 %v3315, %v3321
  %v3325 = vmul.f32 %v3316, %v3321
  %v3326 = vmul.f32 %v3317, %v3321
  %v3327 = vadd.f32 %v3253, %v3322
  %v3328 = vadd.f32 %v3254, %v3323
  %v3329 = vadd.f32 %v3255, %v3324
  %v3330 = vadd.f32 %v3256, %v3325
  %v3331 = vadd.f32 %v3257, %v3326
  %3337 = vrot.lane.b32.xlu0 %v3179, 32
  %v3338 = vpop.permute.xlu0 %3337
  %3339 = vrot.lane.b32.xlu0 %v3180, 32
  %v3340 = vpop.permute.xlu0 %3339
  %3341 = vrot.lane.b32.xlu0 %v3181, 32
  %v3342 = vpop.permute.xlu0 %3341
  %3343 = vrot.lane.b32.xlu0 %v3182, 32
  %v3344 = vpop.permute.xlu0 %3343
  %3345 = vrot.lane.b32.xlu0 %v3183, 32
  %v3346 = vpop.permute.xlu0 %3345
  %3352 = vrot.lane.b32.xlu0 %v3179, 64
  %v3353 = vpop.permute.xlu0 %3352
  %3354 = vrot.lane.b32.xlu0 %v3180, 64
  %v3355 = vpop.permute.xlu0 %3354
  %3356 = vrot.lane.b32.xlu0 %v3181, 64
  %v3357 = vpop.permute.xlu0 %3356
  %3358 = vrot.lane.b32.xlu0 %v3182, 64
  %v3359 = vpop.permute.xlu0 %3358
  %3360 = vrot.lane.b32.xlu0 %v3183, 64
  %v3361 = vpop.permute.xlu0 %3360
  %3367 = vrot.lane.b32.xlu0 %v3179, 96
  %v3368 = vpop.permute.xlu0 %3367
  %3369 = vrot.lane.b32.xlu0 %v3180, 96
  %v3370 = vpop.permute.xlu0 %3369
  %3371 = vrot.lane.b32.xlu0 %v3181, 96
  %v3372 = vpop.permute.xlu0 %3371
  %3373 = vrot.lane.b32.xlu0 %v3182, 96
  %v3374 = vpop.permute.xlu0 %3373
  %3375 = vrot.lane.b32.xlu0 %v3183, 96
  %v3376 = vpop.permute.xlu0 %3375
  %v3382 = vsel %vm149, %v3179, %v3338
  %v3383 = vsel %vm149, %v3180, %v3340
  %v3384 = vsel %vm149, %v3181, %v3342
  %v3385 = vsel %vm149, %v3182, %v3344
  %v3386 = vsel %vm149, %v3183, %v3346
  %v3387 = vsel %vm2583, %v3382, %v3353
  %v3388 = vsel %vm2583, %v3383, %v3355
  %v3389 = vsel %vm2583, %v3384, %v3357
  %v3390 = vsel %vm2583, %v3385, %v3359
  %v3391 = vsel %vm2583, %v3386, %v3361
  %v3392 = vsel %vm2589, %v3387, %v3368
  %v3393 = vsel %vm2589, %v3388, %v3370
  %v3394 = vsel %vm2589, %v3389, %v3372
  %v3395 = vsel %vm2589, %v3390, %v3374
  %v3396 = vsel %vm2589, %v3391, %v3376
  %v3397 = vlaneseq
  %v3398 = vshrl.u32 %v3397, 7
  %v3399 = vsub.s32 6, %v3398
  %v3400 = vrot.slane %v22, %v3399
  %v3401 = vmul.f32 %v3392, %v3400
  %v3402 = vmul.f32 %v3393, %v3400
  %v3403 = vmul.f32 %v3394, %v3400
  %v3404 = vmul.f32 %v3395, %v3400
  %v3405 = vmul.f32 %v3396, %v3400
  %v3406 = vadd.f32 %v3327, %v3401
  %v3407 = vadd.f32 %v3328, %v3402
  %v3408 = vadd.f32 %v3329, %v3403
  %v3409 = vadd.f32 %v3330, %v3404
  %v3410 = vadd.f32 %v3331, %v3405
  %v3411 = vlaneseq
  %v3412 = vshrl.u32 %v3411, 7
  %v3413 = vsub.s32 7, %v3412
  %v3414 = vrot.slane %v22, %v3413
  %v3415 = vadd.f32 %v3406, %v3414
  %v3416 = vadd.f32 %v3407, %v3414
  %v3417 = vadd.f32 %v3408, %v3414
  %v3418 = vadd.f32 %v3409, %v3414
  %v3419 = vadd.f32 %v3410, %v3414
  %v3420 = vmul.f32 %v3415, 0.5
  %v3421 = vmul.f32 %v3416, 0.5
  %v3422 = vmul.f32 %v3417, 0.5
  %v3423 = vmul.f32 %v3418, 0.5
  %v3424 = vmul.f32 %v3419, 0.5
  %v3425 = vmul.f32 %v3415, 0.044715
  %v3426 = vmul.f32 %v3416, 0.044715
  %v3427 = vmul.f32 %v3417, 0.044715
  %v3428 = vmul.f32 %v3418, 0.044715
  %v3429 = vmul.f32 %v3419, 0.044715
  %v3430 = vmul.f32 %v3425, %v3415
  %v3431 = vmul.f32 %v3426, %v3416
  %v3432 = vmul.f32 %v3427, %v3417
  %v3433 = vmul.f32 %v3428, %v3418
  %v3434 = vmul.f32 %v3429, %v3419
  %v3435 = vmul.f32 %v3430, %v3415
  %v3436 = vmul.f32 %v3431, %v3416
  %v3437 = vmul.f32 %v3432, %v3417
  %v3438 = vmul.f32 %v3433, %v3418
  %v3439 = vmul.f32 %v3434, %v3419
  %v3440 = vadd.f32 %v3415, %v3435
  %v3441 = vadd.f32 %v3416, %v3436
  %v3442 = vadd.f32 %v3417, %v3437
  %v3443 = vadd.f32 %v3418, %v3438
  %v3444 = vadd.f32 %v3419, %v3439
  %v3445 = vmul.f32 %v3440, 0.7978846
  %v3446 = vmul.f32 %v3441, 0.7978846
  %v3447 = vmul.f32 %v3442, 0.7978846
  %v3448 = vmul.f32 %v3443, 0.7978846
  %v3449 = vmul.f32 %v3444, 0.7978846
  %v3450 = vtanh.pop %v3445
  %v3451 = vtanh.pop %v3446
  %v3452 = vtanh.pop %v3447
  %v3453 = vtanh.pop %v3448
  %v3454 = vtanh.pop %v3449
  %v3455 = vadd.f32 %v3450, 1.0
  %v3456 = vadd.f32 %v3451, 1.0
  %v3457 = vadd.f32 %v3452, 1.0
  %v3458 = vadd.f32 %v3453, 1.0
  %v3459 = vadd.f32 %v3454, 1.0
  %v3460 = vmul.f32 %v3420, %v3455
  %v3461 = vmul.f32 %v3421, %v3456
  %v3462 = vmul.f32 %v3422, %v3457
  %v3463 = vmul.f32 %v3423, %v3458
  %v3464 = vmul.f32 %v3424, %v3459
  %v3465 = vpack.c.bf16 %v3461, %v3460
  %v3466 = vpack.c.bf16 %v3463, %v3462
  %v3467 = vpack.c.bf16 %v3464, %v3464
  %v3468 = vld [vmem:[%s3 + $0xb0] sm:$0xf]
  %v3469 = vld [vmem:[%s3 + $0xb4] sm:$0xf]
  %v3470 = vld [vmem:[%s3 + $0xb8] sm:$0xf]
  %v3471 = vld [vmem:[%s3 + $0xbc] sm:$0xf]
  %v3472 = vld [vmem:[%s3 + $0xc0] sm:$0xf]
  %v3473 = vld [vmem:[%s3 + $0xc4] sm:$0xf]
  %v3474 = vld [vmem:[%s3 + $0xc8] sm:$0xf]
  %v3475 = vld [vmem:[%s3 + $0xcc] sm:$0xf]
  %v3476 = vld [vmem:[%s3 + $0xd0] sm:$0xf]
  %v3477 = vld [vmem:[%s3 + $0xd4] sm:$0xf]
  %v3478 = vld [vmem:[%s3 + $0xd8] sm:$0xf]
  %v3479 = vld [vmem:[%s3 + $0xdc] sm:$0xf]
  %v3480 = vld [vmem:[%s3 + $0xe0] sm:$0xf]
  %v3481 = vld [vmem:[%s3 + $0xe4] sm:$0xf]
  %v3482 = vld [vmem:[%s3 + $0xe8] sm:$0xf]
  %v3483 = vld [vmem:[%s3 + $0xec] sm:$0xf]
  %v3484 = vlaneseq
  %v3485 = vshrl.u32 %v3484, 7
  %v3486 = vsub.s32 4, %v3485
  %v3487 = vrot.slane %v21, %v3486
  %v3504 = vunpack.c.l.b16 %v3468
  %v3505 = vunpack.c.l.b16 %v3469
  %v3506 = vunpack.c.l.b16 %v3470
  %v3507 = vunpack.c.l.b16 %v3471
  %v3508 = vunpack.c.l.b16 %v3472
  %v3509 = vunpack.c.l.b16 %v3473
  %v3510 = vunpack.c.l.b16 %v3474
  %v3511 = vunpack.c.l.b16 %v3475
  %v3512 = vunpack.c.l.b16 %v3476
  %v3513 = vunpack.c.l.b16 %v3477
  %v3514 = vunpack.c.l.b16 %v3478
  %v3515 = vunpack.c.l.b16 %v3479
  %v3516 = vunpack.c.l.b16 %v3480
  %v3517 = vunpack.c.l.b16 %v3481
  %v3518 = vunpack.c.l.b16 %v3482
  %v3519 = vunpack.c.l.b16 %v3483
  %v3520 = vpack.c.b16 %v3505, %v3504
  %v3521 = vpack.c.b16 %v3507, %v3506
  %v3522 = vpack.c.b16 %v3509, %v3508
  %v3523 = vpack.c.b16 %v3511, %v3510
  %v3524 = vpack.c.b16 %v3513, %v3512
  %v3525 = vpack.c.b16 %v3515, %v3514
  %v3526 = vpack.c.b16 %v3517, %v3516
  %v3527 = vpack.c.b16 %v3519, %v3518
  %3536 = vmatprep.subr.bf16.mxu0 0
  %3537 = vmatpush1.bf16.msra.mxu0 %v3520
  %3538 = vmatprep.subr.bf16.mxu0 0
  %3539 = vmatpush1.bf16.msra.mxu0 %v3521
  %3540 = vmatprep.subr.bf16.mxu0 0
  %3541 = vmatpush1.bf16.msra.mxu0 %v3522
  %3542 = vmatprep.subr.bf16.mxu0 0
  %3543 = vmatpush1.bf16.msra.mxu0 %v3523
  %3544 = vmatprep.subr.bf16.mxu0 0
  %3545 = vmatpush1.bf16.msra.mxu0 %v3524
  %3546 = vmatprep.subr.bf16.mxu0 0
  %3547 = vmatpush1.bf16.msra.mxu0 %v3525
  %3548 = vmatprep.subr.bf16.mxu0 0
  %3549 = vmatpush1.bf16.msra.mxu0 %v3526
  %3550 = vmatprep.subr.bf16.mxu0 0
  %3551 = vmatpush1.bf16.msra.mxu0 %v3527
  %3552 = vmatprep.subr.bf16.mxu0 0
  %3553 = vmatpush1.bf16.msra.mxu0 0
  %3554 = vmatprep.subr.bf16.mxu0 0
  %3555 = vmatpush1.bf16.msra.mxu0 0
  %3556 = vmatprep.subr.bf16.mxu0 0
  %3557 = vmatpush1.bf16.msra.mxu0 0
  %3558 = vmatprep.subr.bf16.mxu0 0
  %3559 = vmatpush1.bf16.msra.mxu0 0
  %3560 = vmatprep.subr.bf16.mxu0 0
  %3561 = vmatpush1.bf16.msra.mxu0 0
  %3562 = vmatprep.subr.bf16.mxu0 0
  %3563 = vmatpush1.bf16.msra.mxu0 0
  %3564 = vmatprep.subr.bf16.mxu0 0
  %3565 = vmatpush1.bf16.msra.mxu0 0
  %3566 = vmatprep.subr.bf16.mxu0 0
  %3567 = vmatpush1.bf16.msra.mxu0 0
  %3568 = vmatprep.mubr.bf16.mxu0 0
  %3569 = vmatmul.mubr.bf16.gmra.mrb[0].mxu0 %v3465
  %v3570 = vpop.f32.mrb[0].mxu0
  %v3571 = vadd.f32 %v3487, %v3570
  %v3572 = vpop.f32.mrb[0].mxu0
  %v3573 = vpop.f32.mrb[0].mxu0
  %v3574 = vadd.f32 %v3487, %v3573
  %v3575 = vpop.f32.mrb[0].mxu0
  %3576 = vmatprep.mubr.bf16.mxu0 0
  %3577 = vmatmul.mubr.bf16.gmra.mrb[0].mxu0 %v3466
  %v3578 = vpop.f32.mrb[0].mxu0
  %v3579 = vadd.f32 %v3487, %v3578
  %v3580 = vpop.f32.mrb[0].mxu0
  %v3581 = vpop.f32.mrb[0].mxu0
  %v3582 = vadd.f32 %v3487, %v3581
  %v3583 = vpop.f32.mrb[0].mxu0
  %3584 = vmatprep.mubr.bf16.mxu0 0
  %3585 = vmatmul.mubr.bf16.gmra.mrb[0].mxu0 %v3467
  %v3586 = vpop.f32.mrb[0].mxu0
  %v3587 = vadd.f32 %v3487, %v3586
  %v3588 = vpop.f32.mrb[0].mxu0
  %v3589 = vpop.f32.mrb[0].mxu0
  %v3590 = vpop.f32.mrb[0].mxu0
  %3591 = vdwg.mxu0
  %v3592 = vsel %vm2943, %v3046, %v3571
  %v3593 = vsel %vm2944, %v3047, %v3574
  %v3594 = vsel %vm2945, %v3048, %v3579
  %v3595 = vsel %vm2946, %v3049, %v3582
  %v3596 = vsel %vm2947, %v3050, %v3587
  %v3597 = vadd.f32 %v3592, %v2953
  %v3598 = vadd.f32 %v3593, %v2954
  %v3599 = vadd.f32 %v3594, %v2955
  %v3600 = vadd.f32 %v3595, %v2956
  %v3601 = vadd.f32 %v3596, %v2957
  %v3602 = vlaneseq
  %v3603 = vshrl.u32 %v3602, 7
  %v3604 = vsub.s32 6, %v3603
  %v3605 = vrot.slane %v18, %v3604
  %v3606 = vmul.f32 %v3028, %v3605
  %v3607 = vmul.f32 %v3029, %v3605
  %v3608 = vmul.f32 %v3030, %v3605
  %v3609 = vmul.f32 %v3031, %v3605
  %v3610 = vmul.f32 %v3032, %v3605
  %v3611 = vlaneseq
  %v3612 = vshrl.u32 %v3611, 7
  %v3613 = vsub.s32 7, %v3612
  %v3614 = vrot.slane %v18, %v3613
  %v3615 = vadd.f32 %v3606, %v3614
  %v3616 = vadd.f32 %v3607, %v3614
  %v3617 = vadd.f32 %v3608, %v3614
  %v3618 = vadd.f32 %v3609, %v3614
  %v3619 = vadd.f32 %v3610, %v3614
  %v3620 = vld [vmem:[%s3 + $0xf0] sm:$0xf]
  %v3621 = vld [vmem:[%s3 + $0xf4] sm:$0xf]
  %v3622 = vld [vmem:[%s3 + $0xf8] sm:$0xf]
  %v3623 = vld [vmem:[%s3 + $0xfc] sm:$0xf]
  %v3624 = vpack.c.bf16 %v3616, %v3615
  %v3625 = vpack.c.bf16 %v3618, %v3617
  %v3626 = vpack.c.bf16 %v3619, %v3619
  %v3627 = vlaneseq
  %v3628 = vshrl.u32 %v3627, 7
  %v3629 = vsub.s32 5, %v3628
  %v3630 = vrot.slane %v21, %v3629
  %v3635 = vunpack.c.l.b16 %v3620
  %v3636 = vunpack.c.l.b16 %v3621
  %v3637 = vunpack.c.l.b16 %v3622
  %v3638 = vunpack.c.l.b16 %v3623
  %v3639 = vpack.c.b16 %v3636, %v3635
  %v3640 = vpack.c.b16 %v3638, %v3637
  %v3644 = vsel %vm149, %v3624, 0
  %v3647 = vsel %vm149, %v3625, 0
  %v3650 = vsel %vm149, %v3626, 0
  %3652 = vmatprep.subr.bf16.mxu0 0
  %3653 = vmatpush1.bf16.msra.mxu0 %v3639
  %3654 = vmatprep.subr.bf16.mxu0 0
  %3655 = vmatpush1.bf16.msra.mxu0 %v3640
  %3656 = vmatprep.subr.bf16.mxu0 0
  %3657 = vmatpush1.bf16.msra.mxu0 0
  %3658 = vmatprep.subr.bf16.mxu0 0
  %3659 = vmatpush1.bf16.msra.mxu0 0
  %3660 = vmatprep.subr.bf16.mxu0 0
  %3661 = vmatpush1.bf16.msra.mxu0 0
  %3662 = vmatprep.subr.bf16.mxu0 0
  %3663 = vmatpush1.bf16.msra.mxu0 0
  %3664 = vmatprep.subr.bf16.mxu0 0
  %3665 = vmatpush1.bf16.msra.mxu0 0
  %3666 = vmatprep.subr.bf16.mxu0 0
  %3667 = vmatpush1.bf16.msra.mxu0 0
  %3668 = vmatprep.subr.bf16.mxu0 0
  %3669 = vmatpush1.bf16.msra.mxu0 0
  %3670 = vmatprep.subr.bf16.mxu0 0
  %3671 = vmatpush1.bf16.msra.mxu0 0
  %3672 = vmatprep.subr.bf16.mxu0 0
  %3673 = vmatpush1.bf16.msra.mxu0 0
  %3674 = vmatprep.subr.bf16.mxu0 0
  %3675 = vmatpush1.bf16.msra.mxu0 0
  %3676 = vmatprep.subr.bf16.mxu0 0
  %3677 = vmatpush1.bf16.msra.mxu0 0
  %3678 = vmatprep.subr.bf16.mxu0 0
  %3679 = vmatpush1.bf16.msra.mxu0 0
  %3680 = vmatprep.subr.bf16.mxu0 0
  %3681 = vmatpush1.bf16.msra.mxu0 0
  %3682 = vmatprep.subr.bf16.mxu0 0
  %3683 = vmatpush1.bf16.msra.mxu0 0
  %3684 = vmatprep.mubr.bf16.mxu0 0
  %3685 = vmatmul.mubr.bf16.gmra.mrb[0].mxu0 %v3644
  %v3686 = vpop.f32.mrb[0].mxu0
  %v3687 = vadd.f32 %v3630, %v3686
  %v3688 = vpop.f32.mrb[0].mxu0
  %v3689 = vpop.f32.mrb[0].mxu0
  %v3690 = vadd.f32 %v3630, %v3689
  %v3691 = vpop.f32.mrb[0].mxu0
  %3692 = vmatprep.mubr.bf16.mxu0 0
  %3693 = vmatmul.mubr.bf16.gmra.mrb[0].mxu0 %v3647
  %v3694 = vpop.f32.mrb[0].mxu0
  %v3695 = vadd.f32 %v3630, %v3694
  %v3696 = vpop.f32.mrb[0].mxu0
  %v3697 = vpop.f32.mrb[0].mxu0
  %v3698 = vadd.f32 %v3630, %v3697
  %v3699 = vpop.f32.mrb[0].mxu0
  %3700 = vmatprep.mubr.bf16.mxu0 0
  %3701 = vmatmul.mubr.bf16.gmra.mrb[0].mxu0 %v3650
  %v3702 = vpop.f32.mrb[0].mxu0
  %v3703 = vadd.f32 %v3630, %v3702
  %v3704 = vpop.f32.mrb[0].mxu0
  %v3705 = vpop.f32.mrb[0].mxu0
  %v3706 = vpop.f32.mrb[0].mxu0
  %3707 = vdwg.mxu0
  %v3708 = vmul.f32 %v3687, 0.5
  %v3709 = vmul.f32 %v3690, 0.5
  %v3710 = vmul.f32 %v3695, 0.5
  %v3711 = vmul.f32 %v3698, 0.5
  %v3712 = vmul.f32 %v3703, 0.5
  %v3713 = vmul.f32 %v3687, 0.044715
  %v3714 = vmul.f32 %v3690, 0.044715
  %v3715 = vmul.f32 %v3695, 0.044715
  %v3716 = vmul.f32 %v3698, 0.044715
  %v3717 = vmul.f32 %v3703, 0.044715
  %v3718 = vmul.f32 %v3713, %v3687
  %v3719 = vmul.f32 %v3714, %v3690
  %v3720 = vmul.f32 %v3715, %v3695
  %v3721 = vmul.f32 %v3716, %v3698
  %v3722 = vmul.f32 %v3717, %v3703
  %v3723 = vmul.f32 %v3718, %v3687
  %v3724 = vmul.f32 %v3719, %v3690
  %v3725 = vmul.f32 %v3720, %v3695
  %v3726 = vmul.f32 %v3721, %v3698
  %v3727 = vmul.f32 %v3722, %v3703
  %v3728 = vadd.f32 %v3687, %v3723
  %v3729 = vadd.f32 %v3690, %v3724
  %v3730 = vadd.f32 %v3695, %v3725
  %v3731 = vadd.f32 %v3698, %v3726
  %v3732 = vadd.f32 %v3703, %v3727
  %v3733 = vmul.f32 %v3728, 0.7978846
  %v3734 = vmul.f32 %v3729, 0.7978846
  %v3735 = vmul.f32 %v3730, 0.7978846
  %v3736 = vmul.f32 %v3731, 0.7978846
  %v3737 = vmul.f32 %v3732, 0.7978846
  %v3738 = vtanh.pop %v3733
  %v3739 = vtanh.pop %v3734
  %v3740 = vtanh.pop %v3735
  %v3741 = vtanh.pop %v3736
  %v3742 = vtanh.pop %v3737
  %v3743 = vadd.f32 %v3738, 1.0
  %v3744 = vadd.f32 %v3739, 1.0
  %v3745 = vadd.f32 %v3740, 1.0
  %v3746 = vadd.f32 %v3741, 1.0
  %v3747 = vadd.f32 %v3742, 1.0
  %v3748 = vmul.f32 %v3708, %v3743
  %v3749 = vmul.f32 %v3709, %v3744
  %v3750 = vmul.f32 %v3710, %v3745
  %v3751 = vmul.f32 %v3711, %v3746
  %v3752 = vmul.f32 %v3712, %v3747
  %v3753 = vld [vmem:[%s3 + $0x100] sm:$0xf]
  %v3754 = vld [vmem:[%s3 + $0x104] sm:$0xf]
  %v3755 = vld [vmem:[%s3 + $0x108] sm:$0xf]
  %v3756 = vld [vmem:[%s3 + $0x10c] sm:$0xf]
  %v3757 = vpack.c.bf16 %v3749, %v3748
  %v3758 = vpack.c.bf16 %v3751, %v3750
  %v3759 = vpack.c.bf16 %v3752, %v3752
  %v3760 = vlaneseq
  %v3761 = vshrl.u32 %v3760, 7
  %v3762 = vsub.s32 6, %v3761
  %v3763 = vrot.slane %v21, %v3762
  %v3768 = vunpack.c.l.b16 %v3753
  %v3769 = vunpack.c.l.b16 %v3754
  %v3770 = vunpack.c.l.b16 %v3755
  %v3771 = vunpack.c.l.b16 %v3756
  %v3772 = vpack.c.b16 %v3769, %v3768
  %v3773 = vpack.c.b16 %v3771, %v3770
  %v3777 = vsel %vm149, %v3757, 0
  %v3780 = vsel %vm149, %v3758, 0
  %v3783 = vsel %vm149, %v3759, 0
  %3785 = vmatprep.subr.bf16.mxu0 0
  %3786 = vmatpush1.bf16.msra.mxu0 %v3772
  %3787 = vmatprep.subr.bf16.mxu0 0
  %3788 = vmatpush1.bf16.msra.mxu0 %v3773
  %3789 = vmatprep.subr.bf16.mxu0 0
  %3790 = vmatpush1.bf16.msra.mxu0 0
  %3791 = vmatprep.subr.bf16.mxu0 0
  %3792 = vmatpush1.bf16.msra.mxu0 0
  %3793 = vmatprep.subr.bf16.mxu0 0
  %3794 = vmatpush1.bf16.msra.mxu0 0
  %3795 = vmatprep.subr.bf16.mxu0 0
  %3796 = vmatpush1.bf16.msra.mxu0 0
  %3797 = vmatprep.subr.bf16.mxu0 0
  %3798 = vmatpush1.bf16.msra.mxu0 0
  %3799 = vmatprep.subr.bf16.mxu0 0
  %3800 = vmatpush1.bf16.msra.mxu0 0
  %3801 = vmatprep.subr.bf16.mxu0 0
  %3802 = vmatpush1.bf16.msra.mxu0 0
  %3803 = vmatprep.subr.bf16.mxu0 0
  %3804 = vmatpush1.bf16.msra.mxu0 0
  %3805 = vmatprep.subr.bf16.mxu0 0
  %3806 = vmatpush1.bf16.msra.mxu0 0
  %3807 = vmatprep.subr.bf16.mxu0 0
  %3808 = vmatpush1.bf16.msra.mxu0 0
  %3809 = vmatprep.subr.bf16.mxu0 0
  %3810 = vmatpush1.bf16.msra.mxu0 0
  %3811 = vmatprep.subr.bf16.mxu0 0
  %3812 = vmatpush1.bf16.msra.mxu0 0
  %3813 = vmatprep.subr.bf16.mxu0 0
  %3814 = vmatpush1.bf16.msra.mxu0 0
  %3815 = vmatprep.subr.bf16.mxu0 0
  %3816 = vmatpush1.bf16.msra.mxu0 0
  %3817 = vmatprep.mubr.bf16.mxu0 0
  %3818 = vmatmul.mubr.bf16.gmra.mrb[0].mxu0 %v3777
  %v3819 = vpop.f32.mrb[0].mxu0
  %v3820 = vadd.f32 %v3763, %v3819
  %v3821 = vpop.f32.mrb[0].mxu0
  %v3822 = vpop.f32.mrb[0].mxu0
  %v3823 = vadd.f32 %v3763, %v3822
  %v3824 = vpop.f32.mrb[0].mxu0
  %3825 = vmatprep.mubr.bf16.mxu0 0
  %3826 = vmatmul.mubr.bf16.gmra.mrb[0].mxu0 %v3780
  %v3827 = vpop.f32.mrb[0].mxu0
  %v3828 = vadd.f32 %v3763, %v3827
  %v3829 = vpop.f32.mrb[0].mxu0
  %v3830 = vpop.f32.mrb[0].mxu0
  %v3831 = vadd.f32 %v3763, %v3830
  %v3832 = vpop.f32.mrb[0].mxu0
  %3833 = vmatprep.mubr.bf16.mxu0 0
  %3834 = vmatmul.mubr.bf16.gmra.mrb[0].mxu0 %v3783
  %v3835 = vpop.f32.mrb[0].mxu0
  %v3836 = vadd.f32 %v3763, %v3835
  %v3837 = vpop.f32.mrb[0].mxu0
  %v3838 = vpop.f32.mrb[0].mxu0
  %v3839 = vpop.f32.mrb[0].mxu0
  %3840 = vdwg.mxu0
  %v3841 = vadd.f32 %v3820, %v3597
  %v3842 = vadd.f32 %v3823, %v3598
  %v3843 = vadd.f32 %v3828, %v3599
  %v3844 = vadd.f32 %v3831, %v3600
  %v3845 = vadd.f32 %v3836, %v3601
  %3846 = vst.msk [vmem:[%s4] sm:$0xff] %vm149, %v3841
  %3847 = vst.msk [vmem:[%s4 + $0x8] sm:$0xff] %vm149, %v3842
  %vm3848 = vcmask 253952
  %3849 = vst.msk [vmem:[%s4 + $0x10] sm:$0x1] %vm3848, %v3843
  %s3850 = scalar_lea.vmem %s4, 24
  %vm3851 = vcmask 261121
  %3852 = vst.msk [vmem:[%s3850 - $0x1] sm:$0xfe] %vm3851, %v3843
  %3853 = vst.msk [vmem:[%s3850 + $0x7] sm:$0xff] %vm149, %v3844
  %3854 = vst.msk [vmem:[%s3850 + $0xf] sm:$0x3] %vm162, %v3845
  // Predicated region
  $region18: #{tpu_custom_call.1} parent=0 // pred_check
    _
  $region19: #{tpu_custom_call.1} parent=0 // pred_check_branch
    %3856 = sbr.rel (0) target = $region21
  $region20: #{tpu_custom_call.1} parent=0 // pred_region
    _
  $region21: #{tpu_custom_call.1} parent=0 // pred_fallthru
    _
  // Predicated region
  $region22: #{tpu_custom_call.1} parent=0 // pred_check
    _
  $region23: #{tpu_custom_call.1} parent=0 // pred_check_branch
    %3858 = sbr.rel (0) target = $region25
  $region24: #{tpu_custom_call.1} parent=0 // pred_region
    _
  $region25: #{tpu_custom_call.1} parent=0 // pred_fallthru
    _

</llo_original>
